<compile_context>
chip_gen: v7x
topology: tpu7x:2x2x1
jax: 0.10.0
libtpu: 0.0.40
codegen_flags: <defaults>
</compile_context>

<pallas_src>
import functools

import jax
import jax.numpy as jnp
from jax import lax
from jax.experimental import pallas as pl
from jax.experimental.pallas import tpu as pltpu

_LANE = 128


def _ceil_out_dim(d, k, s):
    # PyTorch ceil_mode output-size rule (padding = 0).
    o = -(-(d - k) // s) + 1            # ceil((d - k) / s) + 1
    if (o - 1) * s >= d:                # last window must start inside the input
        o -= 1
    return o


def _cdiv(a, b):
    return -(-a // b)


def _maxpool_kernel(x_ref, o_ref, *, s, tile_oh, tile_ow, g_blk,
                    out_h, out_w, rem_h, rem_w, fill):
    # x_ref: (tile_oh*s, tile_ow*s, g_blk, 128)
    # o_ref: (tile_oh,   tile_ow,   g_blk, 128)
    lane = x_ref.shape[-1]
    i = pl.program_id(0)
    j = pl.program_id(1)

    # Ceil-mode raggedness along W: window offsets dw >= rem_w are out of bounds
    # only for the last valid output column (ow == out_w - 1); mask those.
    w_mask = None
    if rem_w < s:
        ow_ids = lax.broadcasted_iota(jnp.int32, (tile_ow, g_blk, lane), 0)
        w_mask = (j * tile_ow + ow_ids) < (out_w - 1)

    for oh_t in range(tile_oh):
        out_row = None
        for dh in range(s):
            row = x_ref[oh_t * s + dh]                    # (tile_ow*s, g_blk, 128)
            if rem_h < s and dh >= rem_h:
                # Row is out of bounds only for the last valid output row.
                h_ok = (i * tile_oh + oh_t) < (out_h - 1)
                row = jnp.where(h_ok, row, fill)
            # Free reshape: only the leading (untiled) W axis is split.
            rr = row.reshape(tile_ow, s, g_blk, lane)
            for dw in range(s):
                slab = rr[:, dw]
                if w_mask is not None and dw >= rem_w:
                    slab = jnp.where(w_mask, slab, fill)
                out_row = slab if out_row is None else jnp.maximum(out_row, slab)
        o_ref[oh_t] = out_row                             # 128-lane dense store


def _choose_tiles(out_h, out_w, G, Hp, Wp, s, itemsize,
                  *, budget=6 << 20, max_unroll=16):
    """Pick (tile_oh, tile_ow, g_blk) under a per-block VMEM budget."""
    sub = max(8, 32 // itemsize)          # native sublanes: 8 f32 / 16 bf16 / 32 i8

    # Channel-group candidates (largest first): full G = contiguous DMA, then
    # multiples of the native sublane count, then multiples of 8.
    cands = {G}
    cands.update(range(sub, G + 1, sub))
    cands.update(range(8, G + 1, 8))
    g_cands = sorted(cands, reverse=True)

    max_ow = max(1, min(out_w, Wp // s))
    max_oh = max(1, min(out_h, Hp // s, max_unroll))

    def blk_bytes(toh, tow, g):
        return (toh * s) * (tow * s) * g * _LANE * itemsize

    # 1) Full width if possible; otherwise shrink the W tile (large-W fallback).
    tile_ow = max_ow
    g_blk = None
    while True:
        for g in g_cands:
            if blk_bytes(1, tile_ow, g) <= budget:
                g_blk = g
                break
        if g_blk is not None or tile_ow == 1:
            break
        tile_ow = (tile_ow + 1) // 2
    if g_blk is None:
        g_blk = g_cands[-1]

    # 2) Grow the H tile while the input block stays under budget.
    tile_oh = 1
    while tile_oh < max_oh and blk_bytes(tile_oh + 1, tile_ow, g_blk) <= budget:
        tile_oh += 1

    # 3) Make sure there are >= 2 grid steps so both v7x TensorCores get work.
    def nsteps(toh, tow, g):
        return _cdiv(out_h, toh) * _cdiv(out_w, tow) * _cdiv(G, g)

    if nsteps(tile_oh, tile_ow, g_blk) < 2:
        if out_h >= 2:
            tile_oh = min(max_oh, (out_h + 1) // 2)
        elif out_w >= 2:
            tile_ow = min(max_ow, (out_w + 1) // 2)

    return tile_oh, tile_ow, g_blk


def maxpool2d_ceil(x, kernel_size=3, stride=None):
    """MaxPool2d(kernel, stride=kernel, padding=0, ceil_mode=True) on NCHW."""
    k = kernel_size
    s = kernel_size if stride is None else stride
    assert k == s, "kernel assumes stride == kernel_size (MaxPool2d(3))"

    N, C, H, W = x.shape
    dtype = x.dtype
    itemsize = jnp.dtype(dtype).itemsize

    if jnp.issubdtype(dtype, jnp.floating):
        # float8 kinds have no -inf; finfo.min is the usable identity there.
        fill = float("-inf") if itemsize > 1 else float(jnp.finfo(dtype).min)
    elif jnp.issubdtype(dtype, jnp.integer):
        fill = int(jnp.iinfo(dtype).min)
    else:
        raise TypeError(f"unsupported dtype {dtype}")

    out_h = _ceil_out_dim(H, k, s)
    out_w = _ceil_out_dim(W, k, s)

    NC = N * C
    G = _cdiv(NC, _LANE)
    NC_pad = G * _LANE

    # Glue: NCHW -> (H, W, NC) channel-minor (one copy pass).  Channel padding
    # only when NC is not lane-aligned; padded channels never mix with real
    # ones (pooling is per-channel) and are sliced off afterwards.
    x3 = x.reshape(NC, H, W)
    if NC_pad != NC:
        x3 = jnp.pad(x3, ((0, NC_pad - NC), (0, 0), (0, 0)))
    xt = jnp.transpose(x3, (1, 2, 0))

    # Tiny-spatial guard: the input block must hold at least one full k*k window.
    if H < k or W < k:
        xt = jnp.pad(xt, ((0, max(0, k - H)), (0, max(0, k - W)), (0, 0)),
                     constant_values=fill)
    Hp, Wp = xt.shape[0], xt.shape[1]
    xt = xt.reshape(Hp, Wp, G, _LANE)     # free metadata reshape

    tile_oh, tile_ow, g_blk = _choose_tiles(out_h, out_w, G, Hp, Wp, s, itemsize)
    rem_h = Hp - (out_h - 1) * s          # valid rows of the last (ceil) window
    rem_w = Wp - (out_w - 1) * s          # valid cols of the last (ceil) window

    grid = (_cdiv(out_h, tile_oh), _cdiv(out_w, tile_ow), _cdiv(G, g_blk))

    kern = functools.partial(_maxpool_kernel, s=s, tile_oh=tile_oh,
                             tile_ow=tile_ow, g_blk=g_blk, out_h=out_h,
                             out_w=out_w, rem_h=rem_h, rem_w=rem_w, fill=fill)

    in_bytes = Hp * Wp * NC_pad * itemsize
    out_bytes = out_h * out_w * NC_pad * itemsize

    out4 = pl.pallas_call(
        kern,
        out_shape=jax.ShapeDtypeStruct((out_h, out_w, G, _LANE), dtype),
        grid_spec=pltpu.PrefetchScalarGridSpec(
            num_scalar_prefetch=0,
            grid=grid,
            in_specs=[pl.BlockSpec((tile_oh * s, tile_ow * s, g_blk, _LANE),
                                   lambda i, j, g: (i, j, g, 0))],
            out_specs=pl.BlockSpec((tile_oh, tile_ow, g_blk, _LANE),
                                   lambda i, j, g: (i, j, g, 0)),
        ),
        compiler_params=pltpu.CompilerParams(
            dimension_semantics=("parallel", "parallel", "parallel"),
            vmem_limit_bytes=32 * 1024 * 1024),
        cost_estimate=pl.CostEstimate(
            flops=out_h * out_w * NC_pad * (k * k - 1),
            transcendentals=0,
            bytes_accessed=in_bytes + out_bytes),
    )(xt)

    # Glue: (out_h, out_w, G, 128) -> NCHW (output is ~1/9 the input size).
    out = out4.reshape(out_h, out_w, NC_pad)[:, :, :NC]
    return jnp.transpose(out, (2, 0, 1)).reshape(N, C, out_h, out_w)


if __name__ == "__main__":
    key = jax.random.PRNGKey(0)
    x = jax.random.normal(key, (2, 4, 16, 16), dtype=jnp.float32)

    pool = jax.jit(lambda a: maxpool2d_ceil(a, kernel_size=3))
    y = jax.block_until_ready(pool(x))

    def torch_ref(a, k=3, s=3):
        # Pure-JAX reference with identical ceil_mode semantics.
        Hh, Ww = a.shape[-2:]
        oh = _ceil_out_dim(Hh, k, s)
        ow = _ceil_out_dim(Ww, k, s)
        ph = (oh - 1) * s + k - Hh
        pw = (ow - 1) * s + k - Ww
        return lax.reduce_window(
            a, -jnp.inf, lax.max,
            window_dimensions=(1, 1, k, k),
            window_strides=(1, 1, s, s),
            padding=((0, 0), (0, 0), (0, ph), (0, pw)))

    ref = torch_ref(x)
    assert y.shape == ref.shape, (y.shape, ref.shape)
    assert jnp.array_equal(y, ref), "mismatch vs reference max-pool (16x16)"

    # Ragged ceil-mode case: H, W not multiples of 3 and NC not lane-aligned.
    x2 = jax.random.normal(jax.random.PRNGKey(0), (1, 3, 10, 7),
                           dtype=jnp.float32)
    y2 = jax.block_until_ready(jax.jit(maxpool2d_ceil)(x2))
    assert jnp.array_equal(y2, torch_ref(x2)), "mismatch vs reference (ragged)"

    print("KERNEL_OK")
</pallas_src>

<mosaic_0001>
module attributes {stable_mosaic.version = 11 : i64} {
  func.func @_maxpool_kernel(%arg0: i32, %arg1: i32, %arg2: i32, %arg3: memref<15x15x1x128xf32, #tpu.memory_space<vmem>>, %arg4: memref<5x5x1x128xf32, #tpu.memory_space<vmem>>) attributes {dimension_semantics = [#tpu.dimension_semantics<parallel>, #tpu.dimension_semantics<parallel>, #tpu.dimension_semantics<parallel>], iteration_bounds = array<i64: 2, 2, 1>, scalar_prefetch = 0 : i64, scratch_operands = 0 : i64, tpu.core_type = #tpu.core_type<tc>, window_params = [{transform_indices = @transform_0, window_bounds = array<i64: 15, 15, 1, 128>}, {transform_indices = @transform_1, window_bounds = array<i64: 5, 5, 1, 128>}]} {
    %0 = tpu.iota {dimensions = array<i32: 0>} : vector<5x1x128xi32>
    %c5_i32 = arith.constant 5 : i32
    %1 = arith.muli %arg1, %c5_i32 : i32
    %2 = vector.broadcast %1 : i32 to vector<5x1x128xi32>
    %3 = arith.addi %2, %0 : vector<5x1x128xi32>
    %c5_i32_0 = arith.constant 5 : i32
    %4 = vector.broadcast %c5_i32_0 : i32 to vector<5x1x128xi32>
    %5 = arith.cmpi slt, %3, %4 : vector<5x1x128xi32>
    %c0 = arith.constant 0 : index
    %c0_1 = arith.constant 0 : index
    %c0_2 = arith.constant 0 : index
    %c0_3 = arith.constant 0 : index
    %6 = vector.load %arg3[%c0, %c0_1, %c0_2, %c0_3] : memref<15x15x1x128xf32, #tpu.memory_space<vmem>>, vector<1x15x1x128xf32>
    %7 = vector.shape_cast %6 : vector<1x15x1x128xf32> to vector<15x1x128xf32>
    %8 = vector.shape_cast %7 : vector<15x1x128xf32> to vector<5x3x1x128xf32>
    %9 = vector.extract_strided_slice %8 {offsets = [0, 0, 0, 0], sizes = [5, 1, 1, 128], strides = [1, 1, 1, 1]} : vector<5x3x1x128xf32> to vector<5x1x1x128xf32>
    %10 = vector.shape_cast %9 : vector<5x1x1x128xf32> to vector<5x1x128xf32>
    %11 = vector.extract_strided_slice %8 {offsets = [0, 1, 0, 0], sizes = [5, 1, 1, 128], strides = [1, 1, 1, 1]} : vector<5x3x1x128xf32> to vector<5x1x1x128xf32>
    %12 = vector.shape_cast %11 : vector<5x1x1x128xf32> to vector<5x1x128xf32>
    %cst = arith.constant 0xFF800000 : f32
    %13 = vector.broadcast %cst : f32 to vector<5x1x128xf32>
    %14 = arith.select %5, %12, %13 : vector<5x1x128xi1>, vector<5x1x128xf32>
    %15 = arith.maximumf %10, %14 : vector<5x1x128xf32>
    %16 = vector.extract_strided_slice %8 {offsets = [0, 2, 0, 0], sizes = [5, 1, 1, 128], strides = [1, 1, 1, 1]} : vector<5x3x1x128xf32> to vector<5x1x1x128xf32>
    %17 = vector.shape_cast %16 : vector<5x1x1x128xf32> to vector<5x1x128xf32>
    %cst_4 = arith.constant 0xFF800000 : f32
    %18 = vector.broadcast %cst_4 : f32 to vector<5x1x128xf32>
    %19 = arith.select %5, %17, %18 : vector<5x1x128xi1>, vector<5x1x128xf32>
    %20 = arith.maximumf %15, %19 : vector<5x1x128xf32>
    %c1 = arith.constant 1 : index
    %c0_5 = arith.constant 0 : index
    %c0_6 = arith.constant 0 : index
    %c0_7 = arith.constant 0 : index
    %21 = vector.load %arg3[%c1, %c0_5, %c0_6, %c0_7] : memref<15x15x1x128xf32, #tpu.memory_space<vmem>>, vector<1x15x1x128xf32>
    %22 = vector.shape_cast %21 : vector<1x15x1x128xf32> to vector<15x1x128xf32>
    %c5_i32_8 = arith.constant 5 : i32
    %23 = arith.muli %arg0, %c5_i32_8 : i32
    %c0_i32 = arith.constant 0 : i32
    %24 = arith.addi %23, %c0_i32 : i32
    %c5_i32_9 = arith.constant 5 : i32
    %25 = arith.cmpi slt, %24, %c5_i32_9 : i32
    %cst_10 = arith.constant 0xFF800000 : f32
    %26 = vector.broadcast %cst_10 : f32 to vector<15x1x128xf32>
    %27 = arith.select %25, %22, %26 : vector<15x1x128xf32>
    %28 = vector.shape_cast %27 : vector<15x1x128xf32> to vector<5x3x1x128xf32>
    %29 = vector.extract_strided_slice %28 {offsets = [0, 0, 0, 0], sizes = [5, 1, 1, 128], strides = [1, 1, 1, 1]} : vector<5x3x1x128xf32> to vector<5x1x1x128xf32>
    %30 = vector.shape_cast %29 : vector<5x1x1x128xf32> to vector<5x1x128xf32>
    %31 = arith.maximumf %20, %30 : vector<5x1x128xf32>
    %32 = vector.extract_strided_slice %28 {offsets = [0, 1, 0, 0], sizes = [5, 1, 1, 128], strides = [1, 1, 1, 1]} : vector<5x3x1x128xf32> to vector<5x1x1x128xf32>
    %33 = vector.shape_cast %32 : vector<5x1x1x128xf32> to vector<5x1x128xf32>
    %cst_11 = arith.constant 0xFF800000 : f32
    %34 = vector.broadcast %cst_11 : f32 to vector<5x1x128xf32>
    %35 = arith.select %5, %33, %34 : vector<5x1x128xi1>, vector<5x1x128xf32>
    %36 = arith.maximumf %31, %35 : vector<5x1x128xf32>
    %37 = vector.extract_strided_slice %28 {offsets = [0, 2, 0, 0], sizes = [5, 1, 1, 128], strides = [1, 1, 1, 1]} : vector<5x3x1x128xf32> to vector<5x1x1x128xf32>
    %38 = vector.shape_cast %37 : vector<5x1x1x128xf32> to vector<5x1x128xf32>
    %cst_12 = arith.constant 0xFF800000 : f32
    %39 = vector.broadcast %cst_12 : f32 to vector<5x1x128xf32>
    %40 = arith.select %5, %38, %39 : vector<5x1x128xi1>, vector<5x1x128xf32>
    %41 = arith.maximumf %36, %40 : vector<5x1x128xf32>
    %c2 = arith.constant 2 : index
    %c0_13 = arith.constant 0 : index
    %c0_14 = arith.constant 0 : index
    %c0_15 = arith.constant 0 : index
    %42 = vector.load %arg3[%c2, %c0_13, %c0_14, %c0_15] : memref<15x15x1x128xf32, #tpu.memory_space<vmem>>, vector<1x15x1x128xf32>
    %43 = vector.shape_cast %42 : vector<1x15x1x128xf32> to vector<15x1x128xf32>
    %c5_i32_16 = arith.constant 5 : i32
    %44 = arith.muli %arg0, %c5_i32_16 : i32
    %c0_i32_17 = arith.constant 0 : i32
    %45 = arith.addi %44, %c0_i32_17 : i32
    %c5_i32_18 = arith.constant 5 : i32
    %46 = arith.cmpi slt, %45, %c5_i32_18 : i32
    %cst_19 = arith.constant 0xFF800000 : f32
    %47 = vector.broadcast %cst_19 : f32 to vector<15x1x128xf32>
    %48 = arith.select %46, %43, %47 : vector<15x1x128xf32>
    %49 = vector.shape_cast %48 : vector<15x1x128xf32> to vector<5x3x1x128xf32>
    %50 = vector.extract_strided_slice %49 {offsets = [0, 0, 0, 0], sizes = [5, 1, 1, 128], strides = [1, 1, 1, 1]} : vector<5x3x1x128xf32> to vector<5x1x1x128xf32>
    %51 = vector.shape_cast %50 : vector<5x1x1x128xf32> to vector<5x1x128xf32>
    %52 = arith.maximumf %41, %51 : vector<5x1x128xf32>
    %53 = vector.extract_strided_slice %49 {offsets = [0, 1, 0, 0], sizes = [5, 1, 1, 128], strides = [1, 1, 1, 1]} : vector<5x3x1x128xf32> to vector<5x1x1x128xf32>
    %54 = vector.shape_cast %53 : vector<5x1x1x128xf32> to vector<5x1x128xf32>
    %cst_20 = arith.constant 0xFF800000 : f32
    %55 = vector.broadcast %cst_20 : f32 to vector<5x1x128xf32>
    %56 = arith.select %5, %54, %55 : vector<5x1x128xi1>, vector<5x1x128xf32>
    %57 = arith.maximumf %52, %56 : vector<5x1x128xf32>
    %58 = vector.extract_strided_slice %49 {offsets = [0, 2, 0, 0], sizes = [5, 1, 1, 128], strides = [1, 1, 1, 1]} : vector<5x3x1x128xf32> to vector<5x1x1x128xf32>
    %59 = vector.shape_cast %58 : vector<5x1x1x128xf32> to vector<5x1x128xf32>
    %cst_21 = arith.constant 0xFF800000 : f32
    %60 = vector.broadcast %cst_21 : f32 to vector<5x1x128xf32>
    %61 = arith.select %5, %59, %60 : vector<5x1x128xi1>, vector<5x1x128xf32>
    %62 = arith.maximumf %57, %61 : vector<5x1x128xf32>
    %c0_22 = arith.constant 0 : index
    %c0_23 = arith.constant 0 : index
    %c0_24 = arith.constant 0 : index
    %c0_25 = arith.constant 0 : index
    %63 = vector.load %arg4[%c0_22, %c0_23, %c0_24, %c0_25] : memref<5x5x1x128xf32, #tpu.memory_space<vmem>>, vector<1x5x1x128xf32>
    %64 = vector.shape_cast %63 : vector<1x5x1x128xf32> to vector<5x1x128xf32>
    %65 = vector.shape_cast %62 : vector<5x1x128xf32> to vector<1x5x1x128xf32>
    tpu.vector_store %arg4[%c0_22, %c0_23, %c0_24, %c0_25], %65 {strides = array<i32>} : memref<5x5x1x128xf32, #tpu.memory_space<vmem>>, vector<1x5x1x128xf32>,
    %c3 = arith.constant 3 : index
    %c0_26 = arith.constant 0 : index
    %c0_27 = arith.constant 0 : index
    %c0_28 = arith.constant 0 : index
    %66 = vector.load %arg3[%c3, %c0_26, %c0_27, %c0_28] : memref<15x15x1x128xf32, #tpu.memory_space<vmem>>, vector<1x15x1x128xf32>
    %67 = vector.shape_cast %66 : vector<1x15x1x128xf32> to vector<15x1x128xf32>
    %68 = vector.shape_cast %67 : vector<15x1x128xf32> to vector<5x3x1x128xf32>
    %69 = vector.extract_strided_slice %68 {offsets = [0, 0, 0, 0], sizes = [5, 1, 1, 128], strides = [1, 1, 1, 1]} : vector<5x3x1x128xf32> to vector<5x1x1x128xf32>
    %70 = vector.shape_cast %69 : vector<5x1x1x128xf32> to vector<5x1x128xf32>
    %71 = vector.extract_strided_slice %68 {offsets = [0, 1, 0, 0], sizes = [5, 1, 1, 128], strides = [1, 1, 1, 1]} : vector<5x3x1x128xf32> to vector<5x1x1x128xf32>
    %72 = vector.shape_cast %71 : vector<5x1x1x128xf32> to vector<5x1x128xf32>
    %cst_29 = arith.constant 0xFF800000 : f32
    %73 = vector.broadcast %cst_29 : f32 to vector<5x1x128xf32>
    %74 = arith.select %5, %72, %73 : vector<5x1x128xi1>, vector<5x1x128xf32>
    %75 = arith.maximumf %70, %74 : vector<5x1x128xf32>
    %76 = vector.extract_strided_slice %68 {offsets = [0, 2, 0, 0], sizes = [5, 1, 1, 128], strides = [1, 1, 1, 1]} : vector<5x3x1x128xf32> to vector<5x1x1x128xf32>
    %77 = vector.shape_cast %76 : vector<5x1x1x128xf32> to vector<5x1x128xf32>
    %cst_30 = arith.constant 0xFF800000 : f32
    %78 = vector.broadcast %cst_30 : f32 to vector<5x1x128xf32>
    %79 = arith.select %5, %77, %78 : vector<5x1x128xi1>, vector<5x1x128xf32>
    %80 = arith.maximumf %75, %79 : vector<5x1x128xf32>
    %c4 = arith.constant 4 : index
    %c0_31 = arith.constant 0 : index
    %c0_32 = arith.constant 0 : index
    %c0_33 = arith.constant 0 : index
    %81 = vector.load %arg3[%c4, %c0_31, %c0_32, %c0_33] : memref<15x15x1x128xf32, #tpu.memory_space<vmem>>, vector<1x15x1x128xf32>
    %82 = vector.shape_cast %81 : vector<1x15x1x128xf32> to vector<15x1x128xf32>
    %c5_i32_34 = arith.constant 5 : i32
    %83 = arith.muli %arg0, %c5_i32_34 : i32
    %c1_i32 = arith.constant 1 : i32
    %84 = arith.addi %83, %c1_i32 : i32
    %c5_i32_35 = arith.constant 5 : i32
    %85 = arith.cmpi slt, %84, %c5_i32_35 : i32
    %cst_36 = arith.constant 0xFF800000 : f32
    %86 = vector.broadcast %cst_36 : f32 to vector<15x1x128xf32>
    %87 = arith.select %85, %82, %86 : vector<15x1x128xf32>
    %88 = vector.shape_cast %87 : vector<15x1x128xf32> to vector<5x3x1x128xf32>
    %89 = vector.extract_strided_slice %88 {offsets = [0, 0, 0, 0], sizes = [5, 1, 1, 128], strides = [1, 1, 1, 1]} : vector<5x3x1x128xf32> to vector<5x1x1x128xf32>
    %90 = vector.shape_cast %89 : vector<5x1x1x128xf32> to vector<5x1x128xf32>
    %91 = arith.maximumf %80, %90 : vector<5x1x128xf32>
    %92 = vector.extract_strided_slice %88 {offsets = [0, 1, 0, 0], sizes = [5, 1, 1, 128], strides = [1, 1, 1, 1]} : vector<5x3x1x128xf32> to vector<5x1x1x128xf32>
    %93 = vector.shape_cast %92 : vector<5x1x1x128xf32> to vector<5x1x128xf32>
    %cst_37 = arith.constant 0xFF800000 : f32
    %94 = vector.broadcast %cst_37 : f32 to vector<5x1x128xf32>
    %95 = arith.select %5, %93, %94 : vector<5x1x128xi1>, vector<5x1x128xf32>
    %96 = arith.maximumf %91, %95 : vector<5x1x128xf32>
    %97 = vector.extract_strided_slice %88 {offsets = [0, 2, 0, 0], sizes = [5, 1, 1, 128], strides = [1, 1, 1, 1]} : vector<5x3x1x128xf32> to vector<5x1x1x128xf32>
    %98 = vector.shape_cast %97 : vector<5x1x1x128xf32> to vector<5x1x128xf32>
    %cst_38 = arith.constant 0xFF800000 : f32
    %99 = vector.broadcast %cst_38 : f32 to vector<5x1x128xf32>
    %100 = arith.select %5, %98, %99 : vector<5x1x128xi1>, vector<5x1x128xf32>
    %101 = arith.maximumf %96, %100 : vector<5x1x128xf32>
    %c5 = arith.constant 5 : index
    %c0_39 = arith.constant 0 : index
    %c0_40 = arith.constant 0 : index
    %c0_41 = arith.constant 0 : index
    %102 = vector.load %arg3[%c5, %c0_39, %c0_40, %c0_41] : memref<15x15x1x128xf32, #tpu.memory_space<vmem>>, vector<1x15x1x128xf32>
    %103 = vector.shape_cast %102 : vector<1x15x1x128xf32> to vector<15x1x128xf32>
    %c5_i32_42 = arith.constant 5 : i32
    %104 = arith.muli %arg0, %c5_i32_42 : i32
    %c1_i32_43 = arith.constant 1 : i32
    %105 = arith.addi %104, %c1_i32_43 : i32
    %c5_i32_44 = arith.constant 5 : i32
    %106 = arith.cmpi slt, %105, %c5_i32_44 : i32
    %cst_45 = arith.constant 0xFF800000 : f32
    %107 = vector.broadcast %cst_45 : f32 to vector<15x1x128xf32>
    %108 = arith.select %106, %103, %107 : vector<15x1x128xf32>
    %109 = vector.shape_cast %108 : vector<15x1x128xf32> to vector<5x3x1x128xf32>
    %110 = vector.extract_strided_slice %109 {offsets = [0, 0, 0, 0], sizes = [5, 1, 1, 128], strides = [1, 1, 1, 1]} : vector<5x3x1x128xf32> to vector<5x1x1x128xf32>
    %111 = vector.shape_cast %110 : vector<5x1x1x128xf32> to vector<5x1x128xf32>
    %112 = arith.maximumf %101, %111 : vector<5x1x128xf32>
    %113 = vector.extract_strided_slice %109 {offsets = [0, 1, 0, 0], sizes = [5, 1, 1, 128], strides = [1, 1, 1, 1]} : vector<5x3x1x128xf32> to vector<5x1x1x128xf32>
    %114 = vector.shape_cast %113 : vector<5x1x1x128xf32> to vector<5x1x128xf32>
    %cst_46 = arith.constant 0xFF800000 : f32
    %115 = vector.broadcast %cst_46 : f32 to vector<5x1x128xf32>
    %116 = arith.select %5, %114, %115 : vector<5x1x128xi1>, vector<5x1x128xf32>
    %117 = arith.maximumf %112, %116 : vector<5x1x128xf32>
    %118 = vector.extract_strided_slice %109 {offsets = [0, 2, 0, 0], sizes = [5, 1, 1, 128], strides = [1, 1, 1, 1]} : vector<5x3x1x128xf32> to vector<5x1x1x128xf32>
    %119 = vector.shape_cast %118 : vector<5x1x1x128xf32> to vector<5x1x128xf32>
    %cst_47 = arith.constant 0xFF800000 : f32
    %120 = vector.broadcast %cst_47 : f32 to vector<5x1x128xf32>
    %121 = arith.select %5, %119, %120 : vector<5x1x128xi1>, vector<5x1x128xf32>
    %122 = arith.maximumf %117, %121 : vector<5x1x128xf32>
    %c1_48 = arith.constant 1 : index
    %c0_49 = arith.constant 0 : index
    %c0_50 = arith.constant 0 : index
    %c0_51 = arith.constant 0 : index
    %123 = vector.load %arg4[%c1_48, %c0_49, %c0_50, %c0_51] : memref<5x5x1x128xf32, #tpu.memory_space<vmem>>, vector<1x5x1x128xf32>
    %124 = vector.shape_cast %123 : vector<1x5x1x128xf32> to vector<5x1x128xf32>
    %125 = vector.shape_cast %122 : vector<5x1x128xf32> to vector<1x5x1x128xf32>
    tpu.vector_store %arg4[%c1_48, %c0_49, %c0_50, %c0_51], %125 {strides = array<i32>} : memref<5x5x1x128xf32, #tpu.memory_space<vmem>>, vector<1x5x1x128xf32>,
    %c6 = arith.constant 6 : index
    %c0_52 = arith.constant 0 : index
    %c0_53 = arith.constant 0 : index
    %c0_54 = arith.constant 0 : index
    %126 = vector.load %arg3[%c6, %c0_52, %c0_53, %c0_54] : memref<15x15x1x128xf32, #tpu.memory_space<vmem>>, vector<1x15x1x128xf32>
    %127 = vector.shape_cast %126 : vector<1x15x1x128xf32> to vector<15x1x128xf32>
    %128 = vector.shape_cast %127 : vector<15x1x128xf32> to vector<5x3x1x128xf32>
    %129 = vector.extract_strided_slice %128 {offsets = [0, 0, 0, 0], sizes = [5, 1, 1, 128], strides = [1, 1, 1, 1]} : vector<5x3x1x128xf32> to vector<5x1x1x128xf32>
    %130 = vector.shape_cast %129 : vector<5x1x1x128xf32> to vector<5x1x128xf32>
    %131 = vector.extract_strided_slice %128 {offsets = [0, 1, 0, 0], sizes = [5, 1, 1, 128], strides = [1, 1, 1, 1]} : vector<5x3x1x128xf32> to vector<5x1x1x128xf32>
    %132 = vector.shape_cast %131 : vector<5x1x1x128xf32> to vector<5x1x128xf32>
    %cst_55 = arith.constant 0xFF800000 : f32
    %133 = vector.broadcast %cst_55 : f32 to vector<5x1x128xf32>
    %134 = arith.select %5, %132, %133 : vector<5x1x128xi1>, vector<5x1x128xf32>
    %135 = arith.maximumf %130, %134 : vector<5x1x128xf32>
    %136 = vector.extract_strided_slice %128 {offsets = [0, 2, 0, 0], sizes = [5, 1, 1, 128], strides = [1, 1, 1, 1]} : vector<5x3x1x128xf32> to vector<5x1x1x128xf32>
    %137 = vector.shape_cast %136 : vector<5x1x1x128xf32> to vector<5x1x128xf32>
    %cst_56 = arith.constant 0xFF800000 : f32
    %138 = vector.broadcast %cst_56 : f32 to vector<5x1x128xf32>
    %139 = arith.select %5, %137, %138 : vector<5x1x128xi1>, vector<5x1x128xf32>
    %140 = arith.maximumf %135, %139 : vector<5x1x128xf32>
    %c7 = arith.constant 7 : index
    %c0_57 = arith.constant 0 : index
    %c0_58 = arith.constant 0 : index
    %c0_59 = arith.constant 0 : index
    %141 = vector.load %arg3[%c7, %c0_57, %c0_58, %c0_59] : memref<15x15x1x128xf32, #tpu.memory_space<vmem>>, vector<1x15x1x128xf32>
    %142 = vector.shape_cast %141 : vector<1x15x1x128xf32> to vector<15x1x128xf32>
    %c5_i32_60 = arith.constant 5 : i32
    %143 = arith.muli %arg0, %c5_i32_60 : i32
    %c2_i32 = arith.constant 2 : i32
    %144 = arith.addi %143, %c2_i32 : i32
    %c5_i32_61 = arith.constant 5 : i32
    %145 = arith.cmpi slt, %144, %c5_i32_61 : i32
    %cst_62 = arith.constant 0xFF800000 : f32
    %146 = vector.broadcast %cst_62 : f32 to vector<15x1x128xf32>
    %147 = arith.select %145, %142, %146 : vector<15x1x128xf32>
    %148 = vector.shape_cast %147 : vector<15x1x128xf32> to vector<5x3x1x128xf32>
    %149 = vector.extract_strided_slice %148 {offsets = [0, 0, 0, 0], sizes = [5, 1, 1, 128], strides = [1, 1, 1, 1]} : vector<5x3x1x128xf32> to vector<5x1x1x128xf32>
    %150 = vector.shape_cast %149 : vector<5x1x1x128xf32> to vector<5x1x128xf32>
    %151 = arith.maximumf %140, %150 : vector<5x1x128xf32>
    %152 = vector.extract_strided_slice %148 {offsets = [0, 1, 0, 0], sizes = [5, 1, 1, 128], strides = [1, 1, 1, 1]} : vector<5x3x1x128xf32> to vector<5x1x1x128xf32>
    %153 = vector.shape_cast %152 : vector<5x1x1x128xf32> to vector<5x1x128xf32>
    %cst_63 = arith.constant 0xFF800000 : f32
    %154 = vector.broadcast %cst_63 : f32 to vector<5x1x128xf32>
    %155 = arith.select %5, %153, %154 : vector<5x1x128xi1>, vector<5x1x128xf32>
    %156 = arith.maximumf %151, %155 : vector<5x1x128xf32>
    %157 = vector.extract_strided_slice %148 {offsets = [0, 2, 0, 0], sizes = [5, 1, 1, 128], strides = [1, 1, 1, 1]} : vector<5x3x1x128xf32> to vector<5x1x1x128xf32>
    %158 = vector.shape_cast %157 : vector<5x1x1x128xf32> to vector<5x1x128xf32>
    %cst_64 = arith.constant 0xFF800000 : f32
    %159 = vector.broadcast %cst_64 : f32 to vector<5x1x128xf32>
    %160 = arith.select %5, %158, %159 : vector<5x1x128xi1>, vector<5x1x128xf32>
    %161 = arith.maximumf %156, %160 : vector<5x1x128xf32>
    %c8 = arith.constant 8 : index
    %c0_65 = arith.constant 0 : index
    %c0_66 = arith.constant 0 : index
    %c0_67 = arith.constant 0 : index
    %162 = vector.load %arg3[%c8, %c0_65, %c0_66, %c0_67] : memref<15x15x1x128xf32, #tpu.memory_space<vmem>>, vector<1x15x1x128xf32>
    %163 = vector.shape_cast %162 : vector<1x15x1x128xf32> to vector<15x1x128xf32>
    %c5_i32_68 = arith.constant 5 : i32
    %164 = arith.muli %arg0, %c5_i32_68 : i32
    %c2_i32_69 = arith.constant 2 : i32
    %165 = arith.addi %164, %c2_i32_69 : i32
    %c5_i32_70 = arith.constant 5 : i32
    %166 = arith.cmpi slt, %165, %c5_i32_70 : i32
    %cst_71 = arith.constant 0xFF800000 : f32
    %167 = vector.broadcast %cst_71 : f32 to vector<15x1x128xf32>
    %168 = arith.select %166, %163, %167 : vector<15x1x128xf32>
    %169 = vector.shape_cast %168 : vector<15x1x128xf32> to vector<5x3x1x128xf32>
    %170 = vector.extract_strided_slice %169 {offsets = [0, 0, 0, 0], sizes = [5, 1, 1, 128], strides = [1, 1, 1, 1]} : vector<5x3x1x128xf32> to vector<5x1x1x128xf32>
    %171 = vector.shape_cast %170 : vector<5x1x1x128xf32> to vector<5x1x128xf32>
    %172 = arith.maximumf %161, %171 : vector<5x1x128xf32>
    %173 = vector.extract_strided_slice %169 {offsets = [0, 1, 0, 0], sizes = [5, 1, 1, 128], strides = [1, 1, 1, 1]} : vector<5x3x1x128xf32> to vector<5x1x1x128xf32>
    %174 = vector.shape_cast %173 : vector<5x1x1x128xf32> to vector<5x1x128xf32>
    %cst_72 = arith.constant 0xFF800000 : f32
    %175 = vector.broadcast %cst_72 : f32 to vector<5x1x128xf32>
    %176 = arith.select %5, %174, %175 : vector<5x1x128xi1>, vector<5x1x128xf32>
    %177 = arith.maximumf %172, %176 : vector<5x1x128xf32>
    %178 = vector.extract_strided_slice %169 {offsets = [0, 2, 0, 0], sizes = [5, 1, 1, 128], strides = [1, 1, 1, 1]} : vector<5x3x1x128xf32> to vector<5x1x1x128xf32>
    %179 = vector.shape_cast %178 : vector<5x1x1x128xf32> to vector<5x1x128xf32>
    %cst_73 = arith.constant 0xFF800000 : f32
    %180 = vector.broadcast %cst_73 : f32 to vector<5x1x128xf32>
    %181 = arith.select %5, %179, %180 : vector<5x1x128xi1>, vector<5x1x128xf32>
    %182 = arith.maximumf %177, %181 : vector<5x1x128xf32>
    %c2_74 = arith.constant 2 : index
    %c0_75 = arith.constant 0 : index
    %c0_76 = arith.constant 0 : index
    %c0_77 = arith.constant 0 : index
    %183 = vector.load %arg4[%c2_74, %c0_75, %c0_76, %c0_77] : memref<5x5x1x128xf32, #tpu.memory_space<vmem>>, vector<1x5x1x128xf32>
    %184 = vector.shape_cast %183 : vector<1x5x1x128xf32> to vector<5x1x128xf32>
    %185 = vector.shape_cast %182 : vector<5x1x128xf32> to vector<1x5x1x128xf32>
    tpu.vector_store %arg4[%c2_74, %c0_75, %c0_76, %c0_77], %185 {strides = array<i32>} : memref<5x5x1x128xf32, #tpu.memory_space<vmem>>, vector<1x5x1x128xf32>,
    %c9 = arith.constant 9 : index
    %c0_78 = arith.constant 0 : index
    %c0_79 = arith.constant 0 : index
    %c0_80 = arith.constant 0 : index
    %186 = vector.load %arg3[%c9, %c0_78, %c0_79, %c0_80] : memref<15x15x1x128xf32, #tpu.memory_space<vmem>>, vector<1x15x1x128xf32>
    %187 = vector.shape_cast %186 : vector<1x15x1x128xf32> to vector<15x1x128xf32>
    %188 = vector.shape_cast %187 : vector<15x1x128xf32> to vector<5x3x1x128xf32>
    %189 = vector.extract_strided_slice %188 {offsets = [0, 0, 0, 0], sizes = [5, 1, 1, 128], strides = [1, 1, 1, 1]} : vector<5x3x1x128xf32> to vector<5x1x1x128xf32>
    %190 = vector.shape_cast %189 : vector<5x1x1x128xf32> to vector<5x1x128xf32>
    %191 = vector.extract_strided_slice %188 {offsets = [0, 1, 0, 0], sizes = [5, 1, 1, 128], strides = [1, 1, 1, 1]} : vector<5x3x1x128xf32> to vector<5x1x1x128xf32>
    %192 = vector.shape_cast %191 : vector<5x1x1x128xf32> to vector<5x1x128xf32>
    %cst_81 = arith.constant 0xFF800000 : f32
    %193 = vector.broadcast %cst_81 : f32 to vector<5x1x128xf32>
    %194 = arith.select %5, %192, %193 : vector<5x1x128xi1>, vector<5x1x128xf32>
    %195 = arith.maximumf %190, %194 : vector<5x1x128xf32>
    %196 = vector.extract_strided_slice %188 {offsets = [0, 2, 0, 0], sizes = [5, 1, 1, 128], strides = [1, 1, 1, 1]} : vector<5x3x1x128xf32> to vector<5x1x1x128xf32>
    %197 = vector.shape_cast %196 : vector<5x1x1x128xf32> to vector<5x1x128xf32>
    %cst_82 = arith.constant 0xFF800000 : f32
    %198 = vector.broadcast %cst_82 : f32 to vector<5x1x128xf32>
    %199 = arith.select %5, %197, %198 : vector<5x1x128xi1>, vector<5x1x128xf32>
    %200 = arith.maximumf %195, %199 : vector<5x1x128xf32>
    %c10 = arith.constant 10 : index
    %c0_83 = arith.constant 0 : index
    %c0_84 = arith.constant 0 : index
    %c0_85 = arith.constant 0 : index
    %201 = vector.load %arg3[%c10, %c0_83, %c0_84, %c0_85] : memref<15x15x1x128xf32, #tpu.memory_space<vmem>>, vector<1x15x1x128xf32>
    %202 = vector.shape_cast %201 : vector<1x15x1x128xf32> to vector<15x1x128xf32>
    %c5_i32_86 = arith.constant 5 : i32
    %203 = arith.muli %arg0, %c5_i32_86 : i32
    %c3_i32 = arith.constant 3 : i32
    %204 = arith.addi %203, %c3_i32 : i32
    %c5_i32_87 = arith.constant 5 : i32
    %205 = arith.cmpi slt, %204, %c5_i32_87 : i32
    %cst_88 = arith.constant 0xFF800000 : f32
    %206 = vector.broadcast %cst_88 : f32 to vector<15x1x128xf32>
    %207 = arith.select %205, %202, %206 : vector<15x1x128xf32>
    %208 = vector.shape_cast %207 : vector<15x1x128xf32> to vector<5x3x1x128xf32>
    %209 = vector.extract_strided_slice %208 {offsets = [0, 0, 0, 0], sizes = [5, 1, 1, 128], strides = [1, 1, 1, 1]} : vector<5x3x1x128xf32> to vector<5x1x1x128xf32>
    %210 = vector.shape_cast %209 : vector<5x1x1x128xf32> to vector<5x1x128xf32>
    %211 = arith.maximumf %200, %210 : vector<5x1x128xf32>
    %212 = vector.extract_strided_slice %208 {offsets = [0, 1, 0, 0], sizes = [5, 1, 1, 128], strides = [1, 1, 1, 1]} : vector<5x3x1x128xf32> to vector<5x1x1x128xf32>
    %213 = vector.shape_cast %212 : vector<5x1x1x128xf32> to vector<5x1x128xf32>
    %cst_89 = arith.constant 0xFF800000 : f32
    %214 = vector.broadcast %cst_89 : f32 to vector<5x1x128xf32>
    %215 = arith.select %5, %213, %214 : vector<5x1x128xi1>, vector<5x1x128xf32>
    %216 = arith.maximumf %211, %215 : vector<5x1x128xf32>
    %217 = vector.extract_strided_slice %208 {offsets = [0, 2, 0, 0], sizes = [5, 1, 1, 128], strides = [1, 1, 1, 1]} : vector<5x3x1x128xf32> to vector<5x1x1x128xf32>
    %218 = vector.shape_cast %217 : vector<5x1x1x128xf32> to vector<5x1x128xf32>
    %cst_90 = arith.constant 0xFF800000 : f32
    %219 = vector.broadcast %cst_90 : f32 to vector<5x1x128xf32>
    %220 = arith.select %5, %218, %219 : vector<5x1x128xi1>, vector<5x1x128xf32>
    %221 = arith.maximumf %216, %220 : vector<5x1x128xf32>
    %c11 = arith.constant 11 : index
    %c0_91 = arith.constant 0 : index
    %c0_92 = arith.constant 0 : index
    %c0_93 = arith.constant 0 : index
    %222 = vector.load %arg3[%c11, %c0_91, %c0_92, %c0_93] : memref<15x15x1x128xf32, #tpu.memory_space<vmem>>, vector<1x15x1x128xf32>
    %223 = vector.shape_cast %222 : vector<1x15x1x128xf32> to vector<15x1x128xf32>
    %c5_i32_94 = arith.constant 5 : i32
    %224 = arith.muli %arg0, %c5_i32_94 : i32
    %c3_i32_95 = arith.constant 3 : i32
    %225 = arith.addi %224, %c3_i32_95 : i32
    %c5_i32_96 = arith.constant 5 : i32
    %226 = arith.cmpi slt, %225, %c5_i32_96 : i32
    %cst_97 = arith.constant 0xFF800000 : f32
    %227 = vector.broadcast %cst_97 : f32 to vector<15x1x128xf32>
    %228 = arith.select %226, %223, %227 : vector<15x1x128xf32>
    %229 = vector.shape_cast %228 : vector<15x1x128xf32> to vector<5x3x1x128xf32>
    %230 = vector.extract_strided_slice %229 {offsets = [0, 0, 0, 0], sizes = [5, 1, 1, 128], strides = [1, 1, 1, 1]} : vector<5x3x1x128xf32> to vector<5x1x1x128xf32>
    %231 = vector.shape_cast %230 : vector<5x1x1x128xf32> to vector<5x1x128xf32>
    %232 = arith.maximumf %221, %231 : vector<5x1x128xf32>
    %233 = vector.extract_strided_slice %229 {offsets = [0, 1, 0, 0], sizes = [5, 1, 1, 128], strides = [1, 1, 1, 1]} : vector<5x3x1x128xf32> to vector<5x1x1x128xf32>
    %234 = vector.shape_cast %233 : vector<5x1x1x128xf32> to vector<5x1x128xf32>
    %cst_98 = arith.constant 0xFF800000 : f32
    %235 = vector.broadcast %cst_98 : f32 to vector<5x1x128xf32>
    %236 = arith.select %5, %234, %235 : vector<5x1x128xi1>, vector<5x1x128xf32>
    %237 = arith.maximumf %232, %236 : vector<5x1x128xf32>
    %238 = vector.extract_strided_slice %229 {offsets = [0, 2, 0, 0], sizes = [5, 1, 1, 128], strides = [1, 1, 1, 1]} : vector<5x3x1x128xf32> to vector<5x1x1x128xf32>
    %239 = vector.shape_cast %238 : vector<5x1x1x128xf32> to vector<5x1x128xf32>
    %cst_99 = arith.constant 0xFF800000 : f32
    %240 = vector.broadcast %cst_99 : f32 to vector<5x1x128xf32>
    %241 = arith.select %5, %239, %240 : vector<5x1x128xi1>, vector<5x1x128xf32>
    %242 = arith.maximumf %237, %241 : vector<5x1x128xf32>
    %c3_100 = arith.constant 3 : index
    %c0_101 = arith.constant 0 : index
    %c0_102 = arith.constant 0 : index
    %c0_103 = arith.constant 0 : index
    %243 = vector.load %arg4[%c3_100, %c0_101, %c0_102, %c0_103] : memref<5x5x1x128xf32, #tpu.memory_space<vmem>>, vector<1x5x1x128xf32>
    %244 = vector.shape_cast %243 : vector<1x5x1x128xf32> to vector<5x1x128xf32>
    %245 = vector.shape_cast %242 : vector<5x1x128xf32> to vector<1x5x1x128xf32>
    tpu.vector_store %arg4[%c3_100, %c0_101, %c0_102, %c0_103], %245 {strides = array<i32>} : memref<5x5x1x128xf32, #tpu.memory_space<vmem>>, vector<1x5x1x128xf32>,
    %c12 = arith.constant 12 : index
    %c0_104 = arith.constant 0 : index
    %c0_105 = arith.constant 0 : index
    %c0_106 = arith.constant 0 : index
    %246 = vector.load %arg3[%c12, %c0_104, %c0_105, %c0_106] : memref<15x15x1x128xf32, #tpu.memory_space<vmem>>, vector<1x15x1x128xf32>
    %247 = vector.shape_cast %246 : vector<1x15x1x128xf32> to vector<15x1x128xf32>
    %248 = vector.shape_cast %247 : vector<15x1x128xf32> to vector<5x3x1x128xf32>
    %249 = vector.extract_strided_slice %248 {offsets = [0, 0, 0, 0], sizes = [5, 1, 1, 128], strides = [1, 1, 1, 1]} : vector<5x3x1x128xf32> to vector<5x1x1x128xf32>
    %250 = vector.shape_cast %249 : vector<5x1x1x128xf32> to vector<5x1x128xf32>
    %251 = vector.extract_strided_slice %248 {offsets = [0, 1, 0, 0], sizes = [5, 1, 1, 128], strides = [1, 1, 1, 1]} : vector<5x3x1x128xf32> to vector<5x1x1x128xf32>
    %252 = vector.shape_cast %251 : vector<5x1x1x128xf32> to vector<5x1x128xf32>
    %cst_107 = arith.constant 0xFF800000 : f32
    %253 = vector.broadcast %cst_107 : f32 to vector<5x1x128xf32>
    %254 = arith.select %5, %252, %253 : vector<5x1x128xi1>, vector<5x1x128xf32>
    %255 = arith.maximumf %250, %254 : vector<5x1x128xf32>
    %256 = vector.extract_strided_slice %248 {offsets = [0, 2, 0, 0], sizes = [5, 1, 1, 128], strides = [1, 1, 1, 1]} : vector<5x3x1x128xf32> to vector<5x1x1x128xf32>
    %257 = vector.shape_cast %256 : vector<5x1x1x128xf32> to vector<5x1x128xf32>
    %cst_108 = arith.constant 0xFF800000 : f32
    %258 = vector.broadcast %cst_108 : f32 to vector<5x1x128xf32>
    %259 = arith.select %5, %257, %258 : vector<5x1x128xi1>, vector<5x1x128xf32>
    %260 = arith.maximumf %255, %259 : vector<5x1x128xf32>
    %c13 = arith.constant 13 : index
    %c0_109 = arith.constant 0 : index
    %c0_110 = arith.constant 0 : index
    %c0_111 = arith.constant 0 : index
    %261 = vector.load %arg3[%c13, %c0_109, %c0_110, %c0_111] : memref<15x15x1x128xf32, #tpu.memory_space<vmem>>, vector<1x15x1x128xf32>
    %262 = vector.shape_cast %261 : vector<1x15x1x128xf32> to vector<15x1x128xf32>
    %c5_i32_112 = arith.constant 5 : i32
    %263 = arith.muli %arg0, %c5_i32_112 : i32
    %c4_i32 = arith.constant 4 : i32
    %264 = arith.addi %263, %c4_i32 : i32
    %c5_i32_113 = arith.constant 5 : i32
    %265 = arith.cmpi slt, %264, %c5_i32_113 : i32
    %cst_114 = arith.constant 0xFF800000 : f32
    %266 = vector.broadcast %cst_114 : f32 to vector<15x1x128xf32>
    %267 = arith.select %265, %262, %266 : vector<15x1x128xf32>
    %268 = vector.shape_cast %267 : vector<15x1x128xf32> to vector<5x3x1x128xf32>
    %269 = vector.extract_strided_slice %268 {offsets = [0, 0, 0, 0], sizes = [5, 1, 1, 128], strides = [1, 1, 1, 1]} : vector<5x3x1x128xf32> to vector<5x1x1x128xf32>
    %270 = vector.shape_cast %269 : vector<5x1x1x128xf32> to vector<5x1x128xf32>
    %271 = arith.maximumf %260, %270 : vector<5x1x128xf32>
    %272 = vector.extract_strided_slice %268 {offsets = [0, 1, 0, 0], sizes = [5, 1, 1, 128], strides = [1, 1, 1, 1]} : vector<5x3x1x128xf32> to vector<5x1x1x128xf32>
    %273 = vector.shape_cast %272 : vector<5x1x1x128xf32> to vector<5x1x128xf32>
    %cst_115 = arith.constant 0xFF800000 : f32
    %274 = vector.broadcast %cst_115 : f32 to vector<5x1x128xf32>
    %275 = arith.select %5, %273, %274 : vector<5x1x128xi1>, vector<5x1x128xf32>
    %276 = arith.maximumf %271, %275 : vector<5x1x128xf32>
    %277 = vector.extract_strided_slice %268 {offsets = [0, 2, 0, 0], sizes = [5, 1, 1, 128], strides = [1, 1, 1, 1]} : vector<5x3x1x128xf32> to vector<5x1x1x128xf32>
    %278 = vector.shape_cast %277 : vector<5x1x1x128xf32> to vector<5x1x128xf32>
    %cst_116 = arith.constant 0xFF800000 : f32
    %279 = vector.broadcast %cst_116 : f32 to vector<5x1x128xf32>
    %280 = arith.select %5, %278, %279 : vector<5x1x128xi1>, vector<5x1x128xf32>
    %281 = arith.maximumf %276, %280 : vector<5x1x128xf32>
    %c14 = arith.constant 14 : index
    %c0_117 = arith.constant 0 : index
    %c0_118 = arith.constant 0 : index
    %c0_119 = arith.constant 0 : index
    %282 = vector.load %arg3[%c14, %c0_117, %c0_118, %c0_119] : memref<15x15x1x128xf32, #tpu.memory_space<vmem>>, vector<1x15x1x128xf32>
    %283 = vector.shape_cast %282 : vector<1x15x1x128xf32> to vector<15x1x128xf32>
    %c5_i32_120 = arith.constant 5 : i32
    %284 = arith.muli %arg0, %c5_i32_120 : i32
    %c4_i32_121 = arith.constant 4 : i32
    %285 = arith.addi %284, %c4_i32_121 : i32
    %c5_i32_122 = arith.constant 5 : i32
    %286 = arith.cmpi slt, %285, %c5_i32_122 : i32
    %cst_123 = arith.constant 0xFF800000 : f32
    %287 = vector.broadcast %cst_123 : f32 to vector<15x1x128xf32>
    %288 = arith.select %286, %283, %287 : vector<15x1x128xf32>
    %289 = vector.shape_cast %288 : vector<15x1x128xf32> to vector<5x3x1x128xf32>
    %290 = vector.extract_strided_slice %289 {offsets = [0, 0, 0, 0], sizes = [5, 1, 1, 128], strides = [1, 1, 1, 1]} : vector<5x3x1x128xf32> to vector<5x1x1x128xf32>
    %291 = vector.shape_cast %290 : vector<5x1x1x128xf32> to vector<5x1x128xf32>
    %292 = arith.maximumf %281, %291 : vector<5x1x128xf32>
    %293 = vector.extract_strided_slice %289 {offsets = [0, 1, 0, 0], sizes = [5, 1, 1, 128], strides = [1, 1, 1, 1]} : vector<5x3x1x128xf32> to vector<5x1x1x128xf32>
    %294 = vector.shape_cast %293 : vector<5x1x1x128xf32> to vector<5x1x128xf32>
    %cst_124 = arith.constant 0xFF800000 : f32
    %295 = vector.broadcast %cst_124 : f32 to vector<5x1x128xf32>
    %296 = arith.select %5, %294, %295 : vector<5x1x128xi1>, vector<5x1x128xf32>
    %297 = arith.maximumf %292, %296 : vector<5x1x128xf32>
    %298 = vector.extract_strided_slice %289 {offsets = [0, 2, 0, 0], sizes = [5, 1, 1, 128], strides = [1, 1, 1, 1]} : vector<5x3x1x128xf32> to vector<5x1x1x128xf32>
    %299 = vector.shape_cast %298 : vector<5x1x1x128xf32> to vector<5x1x128xf32>
    %cst_125 = arith.constant 0xFF800000 : f32
    %300 = vector.broadcast %cst_125 : f32 to vector<5x1x128xf32>
    %301 = arith.select %5, %299, %300 : vector<5x1x128xi1>, vector<5x1x128xf32>
    %302 = arith.maximumf %297, %301 : vector<5x1x128xf32>
    %c4_126 = arith.constant 4 : index
    %c0_127 = arith.constant 0 : index
    %c0_128 = arith.constant 0 : index
    %c0_129 = arith.constant 0 : index
    %303 = vector.load %arg4[%c4_126, %c0_127, %c0_128, %c0_129] : memref<5x5x1x128xf32, #tpu.memory_space<vmem>>, vector<1x5x1x128xf32>
    %304 = vector.shape_cast %303 : vector<1x5x1x128xf32> to vector<5x1x128xf32>
    %305 = vector.shape_cast %302 : vector<5x1x128xf32> to vector<1x5x1x128xf32>
    tpu.vector_store %arg4[%c4_126, %c0_127, %c0_128, %c0_129], %305 {strides = array<i32>} : memref<5x5x1x128xf32, #tpu.memory_space<vmem>>, vector<1x5x1x128xf32>,
    return
  }
  func.func @transform_0(%arg0: i32, %arg1: i32, %arg2: i32) -> (i32, i32, i32, i32) {
    %c0_i32 = arith.constant 0 : i32
    %c0_i32_0 = arith.constant 0 : i32
    return %arg0, %arg1, %arg2, %c0_i32 : i32, i32, i32, i32
  }
  func.func @transform_1(%arg0: i32, %arg1: i32, %arg2: i32) -> (i32, i32, i32, i32) {
    %c0_i32 = arith.constant 0 : i32
    %c0_i32_0 = arith.constant 0 : i32
    return %arg0, %arg1, %arg2, %c0_i32 : i32, i32, i32, i32
  }
}

</mosaic_0001>

<llo_original>
// kernel: _lambda_.1
$region0: #{_lambda_.1}
  #allocation0 [shape = 'u32[]', space=smem, size = 0x4, offset = 0x4, fixed_abs, tag = 'smem constant byte address 0x4 - core index']
  #allocation1 [shape = 'u32[144,128]{1,0:T(1,128)}', space=vmem, size = 0x12000, scoped, tag = 'internal scratch']
  %s0 = inlined_call_operand.vmem [shape: f32[16,16,1,128], index: 0, kind: input, shape index: {}]
  %s1 = inlined_call_operand.vmem [shape: f32[6,6,1,128], index: 1, kind: output, shape index: {}]
  %s2 = sld [smem:[#allocation0]]
  $region221: #{_lambda_.1} parent=0
    _
  %s4 = ssub.s32 1, %s2
  %s5 = scalar_select 0, %s4, %s2
  $region1: #{_lambda_.1} parent=0
    #allocation2 [shape = 'u8[230400]{0}', space=vmem, size = 0x38400, scoped, tag = 'input window, operand 0']
    #allocation3 [shape = 'u8[25600]{0}', space=vmem, size = 0x6400, scoped, tag = 'output window, operand 0']
    loop: start=0, step=1, limit=6
    $region2: #{_lambda_.1} parent=1 // loop_pre_header
      _
    $region3: #{_lambda_.1} parent=1 // loop_header
      %s7 = sphi 0, %s11
      %p8 = scmp.ge.s32.totalorder %s7, 6
      %s14 = sphi 0, %s33
      %s15 = sphi 0, %s29
      %s16 = sphi 0, %s25
      %s17 = sphi 0, %s14
      %s18 = sphi 0, %s15
      %s19 = sphi 0, %s16
      %s20 = sphi 0, %s17
      %s21 = sphi 0, %s18
      %s22 = sphi 0, %s19
      %s40 = sphi 0, %s42
      %s43 = sphi 0, %s40
      %s44 = sphi 0, %s43
      %s60 = sphi 0, %s44
      %s70 = sphi 0, %s72
      %s73 = sphi 0, %s70
      %s74 = sphi 0, %s73
      %s90 = sphi 0, %s74
    $region4: #{_lambda_.1} parent=1 // loop_header_branch
      %10 = sbr.rel (%p8) target = $region8
    $region5: #{_lambda_.1} parent=1 // loop_body
      %s12 = ssub.s32 %s7, 1
      %s13 = ssub.s32 %s7, 2
      %s23 = sadd.s32 1, %s16
      %p24 = scmp.ge.s32.totalorder %s23, 1
      %s25 = scalar_select %p24, 0, %s23
      %s26 = sadd.s32 1, %s15
      %s27 = scalar_select %p24, %s26, %s15
      %p28 = scmp.ge.s32.totalorder %s27, 2
      %s29 = scalar_select %p28, 0, %s27
      %s30 = sadd.s32 1, %s14
      %s31 = scalar_select %p28, %s30, %s14
      %p32 = scmp.ge.s32.totalorder %s31, 2
      %s33 = scalar_select %p32, 0, %s31
      %s34 = ssub.s32 %s14, %s33
      %s35 = ssub.s32 %s15, %s29
      %s36 = sor.u32 %s34, %s35
      %s37 = ssub.s32 %s16, %s25
      %s38 = sor.u32 %s36, %s37
      %p39 = scmp.eq.s32.totalorder %s38, 0
      %s41 = sadd.s32 %s40, 1
      %s42 = scalar_select %p39, %s40, %s41
      %p45 = pneg %p39
      %p46 = scmp.eq.s32.totalorder %s7, 3
      %p47 = por %p45, %p46
      %p48 = scmp.ne.s32.totalorder %s40, %s43
      %p49 = scmp.eq.s32.totalorder %s7, 0
      %p50 = por %p48, %p49
      %p51 = scmp.ne.s32.totalorder %s40, %s43
      %p52 = scmp.eq.s32.totalorder %s12, 3
      %p53 = por %p51, %p52
      %p54 = scmp.ne.s32.totalorder %s43, %s44
      %p55 = scmp.eq.s32.totalorder %s12, 0
      %p56 = por %p54, %p55
      %p57 = scmp.ne.s32.totalorder %s43, %s44
      %p58 = scmp.eq.s32.totalorder %s13, 3
      %p59 = por %p57, %p58
      %p61 = scmp.ne.s32.totalorder %s44, %s60
      %p62 = scmp.eq.s32.totalorder %s13, 0
      %p63 = por %p61, %p62
      %s64 = ssub.s32 %s14, %s33
      %s65 = ssub.s32 %s15, %s29
      %s66 = sor.u32 %s64, %s65
      %s67 = ssub.s32 %s16, %s25
      %s68 = sor.u32 %s66, %s67
      %p69 = scmp.eq.s32.totalorder %s68, 0
      %s71 = sadd.s32 %s70, 1
      %s72 = scalar_select %p69, %s70, %s71
      %p75 = pneg %p69
      %p76 = scmp.eq.s32.totalorder %s7, 3
      %p77 = por %p75, %p76
      %p78 = scmp.ne.s32.totalorder %s70, %s73
      %p79 = scmp.eq.s32.totalorder %s7, 0
      %p80 = por %p78, %p79
      %p81 = scmp.ne.s32.totalorder %s70, %s73
      %p82 = scmp.eq.s32.totalorder %s12, 3
      %p83 = por %p81, %p82
      %p84 = scmp.ne.s32.totalorder %s73, %s74
      %p85 = scmp.eq.s32.totalorder %s12, 0
      %p86 = por %p84, %p85
      %p87 = scmp.ne.s32.totalorder %s73, %s74
      %p88 = scmp.eq.s32.totalorder %s13, 3
      %p89 = por %p87, %p88
      %p91 = scmp.ne.s32.totalorder %s74, %s90
      %p92 = scmp.eq.s32.totalorder %s13, 0
      %p93 = por %p91, %p92
      %p94 = scmp.le.s32.totalorder 1, %s7
      %p95 = scmp.lt.s32.totalorder %s7, 5
      %p96 = pnand %p94, %p95
      %p97 = pneg %p96
      // Predicated region
      $region9: #{_lambda_.1} parent=5 // pred_check
        _
      $region10: #{_lambda_.1} parent=5 // pred_check_branch
        %99 = sbr.rel (%p96) target = $region12
      $region11: #{_lambda_.1} parent=5 // pred_region
        %s100 = ssub.s32 %s7, 1
      $region12: #{_lambda_.1} parent=5 // pred_fallthru
        _
      %p101 = scmp.lt.s32.totalorder %s7, 4
      // Predicated region
      $region13: #{_lambda_.1} parent=5 // pred_check
        %p102 = pneg %p101
      $region14: #{_lambda_.1} parent=5 // pred_check_branch
        %104 = sbr.rel (%p102) target = $region16
      $region15: #{_lambda_.1} parent=5 // pred_region
        // Predicated region
        $region17: #{_lambda_.1} parent=15 // pred_check
          %p105 = pneg %p50
        $region18: #{_lambda_.1} parent=15 // pred_check_branch
          %107 = sbr.rel (%p105) target = $region20
        $region19: #{_lambda_.1} parent=15 // pred_region
          %s108 = sand.u32 %s40, 1
          %s109 = sand.u32 %s40, 1
          %s110 = smul.addr %s109, 225
          %s111 = scalar_lea.vmem [#allocation2], %s110
          %s112 = smul.u32 15, %s14
          %s113 = smul.u32 15, %s15
          %s114 = ssub.s32 16, %s112
          %p115 = scmp.lt.s32.totalorder %s114, 15
          %s116 = scalar_select %p115, %s114, 15
          %s117 = smul.u32 16, %s116
          %s118 = ssub.s32 16, %s113
          %p119 = scmp.lt.s32.totalorder %s118, 15
          %s120 = scalar_select %p119, %s118, 15
          %s121 = smul.u32 %s117, %s120
          %p122 = scmp.ne.s32.totalorder 0, %s121
          %s123 = sadd.s32 %s16, %s113
          %s124 = smul.addr %s112, 16
          %s125 = sadd.s32 %s123, %s124
          %s126 = scalar_lea.vmem %s0, %s125
          // Predicated region
          $region21: #{_lambda_.1} parent=19 // pred_check
            %p127 = pneg %p122
          $region22: #{_lambda_.1} parent=19 // pred_check_branch
            %129 = sbr.rel (%p127) target = $region24
          $region23: #{_lambda_.1} parent=19 // pred_region
            %p130 = scmp.lt.u32.totalorder %s120, 8
            %p131 = pneg %p130
            // Predicated region
            $region25: #{_lambda_.1} parent=23 // pred_check
              _
            $region26: #{_lambda_.1} parent=23 // pred_check_branch
              %133 = sbr.rel (%p130) target = $region28
            $region27: #{_lambda_.1} parent=23 // pred_region
              %s211 = sand.u32 %s120, 7
              %p212 = scmp.eq.s32.totalorder %s211, 0
              // Predicated region
              $region47: #{_lambda_.1} parent=27 // pred_check
                %p213 = pneg %p212
              $region48: #{_lambda_.1} parent=27 // pred_check_branch
                %215 = sbr.rel (%p213) target = $region50
              $region49: #{_lambda_.1} parent=27 // pred_region
                %s216 = sshrl.u32 %s120, 3
                %s217 = sdiv.u32.pop %s116, 15
                %s218 = srem.u32.pop %s116, 15
                %s219 = sshrl.u32 %s216, 3
                %s220 = smul.u32 %s217, %s219
                // While loop
                $region51: #{_lambda_.1} parent=49 // loop_pre_header
                  _
                $region52: #{_lambda_.1} parent=49 // loop_header
                  %s224 = sphi 0, %s226
                  %p225 = scmp.ge.s32.totalorder %s224, %s220
                  %s229 = sphi 0, %s479
                  %s230 = sphi 0, %s475
                  %s231 = sphi %s126, %s486
                  %s232 = sphi %s111, %s487
                $region53: #{_lambda_.1} parent=49 // loop_header_branch
                  %228 = sbr.rel (%p225) target = $region57
                $region54: #{_lambda_.1} parent=49 // loop_body
                  %v233 = vld [vmem:[%s231] sm:$0xff]
                  %234 = vst [vmem:[%s232] sm:$0xff] %v233
                  %v235 = vld [vmem:[%s231 + $0x8] sm:$0xff]
                  %236 = vst [vmem:[%s232 + $0x8] sm:$0xff] %v235
                  %v237 = vld [vmem:[%s231 + $0x10] sm:$0xff]
                  %238 = vst [vmem:[%s232 + $0x10] sm:$0xff] %v237
                  %v239 = vld [vmem:[%s231 + $0x18] sm:$0xff]
                  %240 = vst [vmem:[%s232 + $0x18] sm:$0xff] %v239
                  %v241 = vld [vmem:[%s231 + $0x20] sm:$0xff]
                  %242 = vst [vmem:[%s232 + $0x20] sm:$0xff] %v241
                  %v243 = vld [vmem:[%s231 + $0x28] sm:$0xff]
                  %244 = vst [vmem:[%s232 + $0x28] sm:$0xff] %v243
                  %v245 = vld [vmem:[%s231 + $0x30] sm:$0xff]
                  %246 = vst [vmem:[%s232 + $0x30] sm:$0xff] %v245
                  %v247 = vld [vmem:[%s231 + $0x38] sm:$0xff]
                  %248 = vst [vmem:[%s232 + $0x38] sm:$0xff] %v247
                  %v249 = vld [vmem:[%s231 + $0x10] sm:$0xff]
                  %250 = vst [vmem:[%s232 + $0xf] sm:$0xff] %v249
                  %v251 = vld [vmem:[%s231 + $0x18] sm:$0xff]
                  %252 = vst [vmem:[%s232 + $0x17] sm:$0xff] %v251
                  %v253 = vld [vmem:[%s231 + $0x20] sm:$0xff]
                  %254 = vst [vmem:[%s232 + $0x1f] sm:$0xff] %v253
                  %v255 = vld [vmem:[%s231 + $0x28] sm:$0xff]
                  %256 = vst [vmem:[%s232 + $0x27] sm:$0xff] %v255
                  %v257 = vld [vmem:[%s231 + $0x30] sm:$0xff]
                  %258 = vst [vmem:[%s232 + $0x2f] sm:$0xff] %v257
                  %v259 = vld [vmem:[%s231 + $0x38] sm:$0xff]
                  %260 = vst [vmem:[%s232 + $0x37] sm:$0xff] %v259
                  %v261 = vld [vmem:[%s231 + $0x40] sm:$0xff]
                  %262 = vst [vmem:[%s232 + $0x3f] sm:$0xff] %v261
                  %v263 = vld [vmem:[%s231 + $0x48] sm:$0xff]
                  %264 = vst [vmem:[%s232 + $0x47] sm:$0xff] %v263
                  %v265 = vld [vmem:[%s231 + $0x20] sm:$0xff]
                  %266 = vst [vmem:[%s232 + $0x1e] sm:$0xff] %v265
                  %v267 = vld [vmem:[%s231 + $0x28] sm:$0xff]
                  %268 = vst [vmem:[%s232 + $0x26] sm:$0xff] %v267
                  %v269 = vld [vmem:[%s231 + $0x30] sm:$0xff]
                  %270 = vst [vmem:[%s232 + $0x2e] sm:$0xff] %v269
                  %v271 = vld [vmem:[%s231 + $0x38] sm:$0xff]
                  %272 = vst [vmem:[%s232 + $0x36] sm:$0xff] %v271
                  %v273 = vld [vmem:[%s231 + $0x40] sm:$0xff]
                  %274 = vst [vmem:[%s232 + $0x3e] sm:$0xff] %v273
                  %v275 = vld [vmem:[%s231 + $0x48] sm:$0xff]
                  %276 = vst [vmem:[%s232 + $0x46] sm:$0xff] %v275
                  %v277 = vld [vmem:[%s231 + $0x50] sm:$0xff]
                  %278 = vst [vmem:[%s232 + $0x4e] sm:$0xff] %v277
                  %v279 = vld [vmem:[%s231 + $0x58] sm:$0xff]
                  %280 = vst [vmem:[%s232 + $0x56] sm:$0xff] %v279
                  %v281 = vld [vmem:[%s231 + $0x30] sm:$0xff]
                  %282 = vst [vmem:[%s232 + $0x2d] sm:$0xff] %v281
                  %v283 = vld [vmem:[%s231 + $0x38] sm:$0xff]
                  %284 = vst [vmem:[%s232 + $0x35] sm:$0xff] %v283
                  %v285 = vld [vmem:[%s231 + $0x40] sm:$0xff]
                  %286 = vst [vmem:[%s232 + $0x3d] sm:$0xff] %v285
                  %v287 = vld [vmem:[%s231 + $0x48] sm:$0xff]
                  %288 = vst [vmem:[%s232 + $0x45] sm:$0xff] %v287
                  %v289 = vld [vmem:[%s231 + $0x50] sm:$0xff]
                  %290 = vst [vmem:[%s232 + $0x4d] sm:$0xff] %v289
                  %v291 = vld [vmem:[%s231 + $0x58] sm:$0xff]
                  %292 = vst [vmem:[%s232 + $0x55] sm:$0xff] %v291
                  %v293 = vld [vmem:[%s231 + $0x60] sm:$0xff]
                  %294 = vst [vmem:[%s232 + $0x5d] sm:$0xff] %v293
                  %v295 = vld [vmem:[%s231 + $0x68] sm:$0xff]
                  %296 = vst [vmem:[%s232 + $0x65] sm:$0xff] %v295
                  %v297 = vld [vmem:[%s231 + $0x40] sm:$0xff]
                  %298 = vst [vmem:[%s232 + $0x3c] sm:$0xff] %v297
                  %v299 = vld [vmem:[%s231 + $0x48] sm:$0xff]
                  %300 = vst [vmem:[%s232 + $0x44] sm:$0xff] %v299
                  %v301 = vld [vmem:[%s231 + $0x50] sm:$0xff]
                  %302 = vst [vmem:[%s232 + $0x4c] sm:$0xff] %v301
                  %v303 = vld [vmem:[%s231 + $0x58] sm:$0xff]
                  %304 = vst [vmem:[%s232 + $0x54] sm:$0xff] %v303
                  %v305 = vld [vmem:[%s231 + $0x60] sm:$0xff]
                  %306 = vst [vmem:[%s232 + $0x5c] sm:$0xff] %v305
                  %v307 = vld [vmem:[%s231 + $0x68] sm:$0xff]
                  %308 = vst [vmem:[%s232 + $0x64] sm:$0xff] %v307
                  %v309 = vld [vmem:[%s231 + $0x70] sm:$0xff]
                  %310 = vst [vmem:[%s232 + $0x6c] sm:$0xff] %v309
                  %v311 = vld [vmem:[%s231 + $0x78] sm:$0xff]
                  %312 = vst [vmem:[%s232 + $0x74] sm:$0xff] %v311
                  %v313 = vld [vmem:[%s231 + $0x50] sm:$0xff]
                  %314 = vst [vmem:[%s232 + $0x4b] sm:$0xff] %v313
                  %v315 = vld [vmem:[%s231 + $0x58] sm:$0xff]
                  %316 = vst [vmem:[%s232 + $0x53] sm:$0xff] %v315
                  %v317 = vld [vmem:[%s231 + $0x60] sm:$0xff]
                  %318 = vst [vmem:[%s232 + $0x5b] sm:$0xff] %v317
                  %v319 = vld [vmem:[%s231 + $0x68] sm:$0xff]
                  %320 = vst [vmem:[%s232 + $0x63] sm:$0xff] %v319
                  %v321 = vld [vmem:[%s231 + $0x70] sm:$0xff]
                  %322 = vst [vmem:[%s232 + $0x6b] sm:$0xff] %v321
                  %v323 = vld [vmem:[%s231 + $0x78] sm:$0xff]
                  %324 = vst [vmem:[%s232 + $0x73] sm:$0xff] %v323
                  %v325 = vld [vmem:[%s231 + $0x80] sm:$0xff]
                  %326 = vst [vmem:[%s232 + $0x7b] sm:$0xff] %v325
                  %v327 = vld [vmem:[%s231 + $0x88] sm:$0xff]
                  %328 = vst [vmem:[%s232 + $0x83] sm:$0xff] %v327
                  %v329 = vld [vmem:[%s231 + $0x60] sm:$0xff]
                  %330 = vst [vmem:[%s232 + $0x5a] sm:$0xff] %v329
                  %v331 = vld [vmem:[%s231 + $0x68] sm:$0xff]
                  %332 = vst [vmem:[%s232 + $0x62] sm:$0xff] %v331
                  %v333 = vld [vmem:[%s231 + $0x70] sm:$0xff]
                  %334 = vst [vmem:[%s232 + $0x6a] sm:$0xff] %v333
                  %v335 = vld [vmem:[%s231 + $0x78] sm:$0xff]
                  %336 = vst [vmem:[%s232 + $0x72] sm:$0xff] %v335
                  %v337 = vld [vmem:[%s231 + $0x80] sm:$0xff]
                  %338 = vst [vmem:[%s232 + $0x7a] sm:$0xff] %v337
                  %v339 = vld [vmem:[%s231 + $0x88] sm:$0xff]
                  %340 = vst [vmem:[%s232 + $0x82] sm:$0xff] %v339
                  %v341 = vld [vmem:[%s231 + $0x90] sm:$0xff]
                  %342 = vst [vmem:[%s232 + $0x8a] sm:$0xff] %v341
                  %v343 = vld [vmem:[%s231 + $0x98] sm:$0xff]
                  %344 = vst [vmem:[%s232 + $0x92] sm:$0xff] %v343
                  %v345 = vld [vmem:[%s231 + $0x70] sm:$0xff]
                  %346 = vst [vmem:[%s232 + $0x69] sm:$0xff] %v345
                  %v347 = vld [vmem:[%s231 + $0x78] sm:$0xff]
                  %348 = vst [vmem:[%s232 + $0x71] sm:$0xff] %v347
                  %v349 = vld [vmem:[%s231 + $0x80] sm:$0xff]
                  %350 = vst [vmem:[%s232 + $0x79] sm:$0xff] %v349
                  %v351 = vld [vmem:[%s231 + $0x88] sm:$0xff]
                  %352 = vst [vmem:[%s232 + $0x81] sm:$0xff] %v351
                  %v353 = vld [vmem:[%s231 + $0x90] sm:$0xff]
                  %354 = vst [vmem:[%s232 + $0x89] sm:$0xff] %v353
                  %v355 = vld [vmem:[%s231 + $0x98] sm:$0xff]
                  %356 = vst [vmem:[%s232 + $0x91] sm:$0xff] %v355
                  %v357 = vld [vmem:[%s231 + $0xa0] sm:$0xff]
                  %358 = vst [vmem:[%s232 + $0x99] sm:$0xff] %v357
                  %v359 = vld [vmem:[%s231 + $0xa8] sm:$0xff]
                  %360 = vst [vmem:[%s232 + $0xa1] sm:$0xff] %v359
                  %v361 = vld [vmem:[%s231 + $0x80] sm:$0xff]
                  %362 = vst [vmem:[%s232 + $0x78] sm:$0xff] %v361
                  %v363 = vld [vmem:[%s231 + $0x88] sm:$0xff]
                  %364 = vst [vmem:[%s232 + $0x80] sm:$0xff] %v363
                  %v365 = vld [vmem:[%s231 + $0x90] sm:$0xff]
                  %366 = vst [vmem:[%s232 + $0x88] sm:$0xff] %v365
                  %v367 = vld [vmem:[%s231 + $0x98] sm:$0xff]
                  %368 = vst [vmem:[%s232 + $0x90] sm:$0xff] %v367
                  %v369 = vld [vmem:[%s231 + $0xa0] sm:$0xff]
                  %370 = vst [vmem:[%s232 + $0x98] sm:$0xff] %v369
                  %v371 = vld [vmem:[%s231 + $0xa8] sm:$0xff]
                  %372 = vst [vmem:[%s232 + $0xa0] sm:$0xff] %v371
                  %v373 = vld [vmem:[%s231 + $0xb0] sm:$0xff]
                  %374 = vst [vmem:[%s232 + $0xa8] sm:$0xff] %v373
                  %v375 = vld [vmem:[%s231 + $0xb8] sm:$0xff]
                  %376 = vst [vmem:[%s232 + $0xb0] sm:$0xff] %v375
                  %v377 = vld [vmem:[%s231 + $0x90] sm:$0xff]
                  %378 = vst [vmem:[%s232 + $0x87] sm:$0xff] %v377
                  %v379 = vld [vmem:[%s231 + $0x98] sm:$0xff]
                  %380 = vst [vmem:[%s232 + $0x8f] sm:$0xff] %v379
                  %v381 = vld [vmem:[%s231 + $0xa0] sm:$0xff]
                  %382 = vst [vmem:[%s232 + $0x97] sm:$0xff] %v381
                  %v383 = vld [vmem:[%s231 + $0xa8] sm:$0xff]
                  %384 = vst [vmem:[%s232 + $0x9f] sm:$0xff] %v383
                  %v385 = vld [vmem:[%s231 + $0xb0] sm:$0xff]
                  %386 = vst [vmem:[%s232 + $0xa7] sm:$0xff] %v385
                  %v387 = vld [vmem:[%s231 + $0xb8] sm:$0xff]
                  %388 = vst [vmem:[%s232 + $0xaf] sm:$0xff] %v387
                  %v389 = vld [vmem:[%s231 + $0xc0] sm:$0xff]
                  %390 = vst [vmem:[%s232 + $0xb7] sm:$0xff] %v389
                  %v391 = vld [vmem:[%s231 + $0xc8] sm:$0xff]
                  %392 = vst [vmem:[%s232 + $0xbf] sm:$0xff] %v391
                  %v393 = vld [vmem:[%s231 + $0xa0] sm:$0xff]
                  %394 = vst [vmem:[%s232 + $0x96] sm:$0xff] %v393
                  %v395 = vld [vmem:[%s231 + $0xa8] sm:$0xff]
                  %396 = vst [vmem:[%s232 + $0x9e] sm:$0xff] %v395
                  %v397 = vld [vmem:[%s231 + $0xb0] sm:$0xff]
                  %398 = vst [vmem:[%s232 + $0xa6] sm:$0xff] %v397
                  %v399 = vld [vmem:[%s231 + $0xb8] sm:$0xff]
                  %400 = vst [vmem:[%s232 + $0xae] sm:$0xff] %v399
                  %v401 = vld [vmem:[%s231 + $0xc0] sm:$0xff]
                  %402 = vst [vmem:[%s232 + $0xb6] sm:$0xff] %v401
                  %v403 = vld [vmem:[%s231 + $0xc8] sm:$0xff]
                  %404 = vst [vmem:[%s232 + $0xbe] sm:$0xff] %v403
                  %v405 = vld [vmem:[%s231 + $0xd0] sm:$0xff]
                  %406 = vst [vmem:[%s232 + $0xc6] sm:$0xff] %v405
                  %v407 = vld [vmem:[%s231 + $0xd8] sm:$0xff]
                  %408 = vst [vmem:[%s232 + $0xce] sm:$0xff] %v407
                  %v409 = vld [vmem:[%s231 + $0xb0] sm:$0xff]
                  %410 = vst [vmem:[%s232 + $0xa5] sm:$0xff] %v409
                  %v411 = vld [vmem:[%s231 + $0xb8] sm:$0xff]
                  %412 = vst [vmem:[%s232 + $0xad] sm:$0xff] %v411
                  %v413 = vld [vmem:[%s231 + $0xc0] sm:$0xff]
                  %414 = vst [vmem:[%s232 + $0xb5] sm:$0xff] %v413
                  %v415 = vld [vmem:[%s231 + $0xc8] sm:$0xff]
                  %416 = vst [vmem:[%s232 + $0xbd] sm:$0xff] %v415
                  %v417 = vld [vmem:[%s231 + $0xd0] sm:$0xff]
                  %418 = vst [vmem:[%s232 + $0xc5] sm:$0xff] %v417
                  %v419 = vld [vmem:[%s231 + $0xd8] sm:$0xff]
                  %420 = vst [vmem:[%s232 + $0xcd] sm:$0xff] %v419
                  %v421 = vld [vmem:[%s231 + $0xe0] sm:$0xff]
                  %422 = vst [vmem:[%s232 + $0xd5] sm:$0xff] %v421
                  %v423 = vld [vmem:[%s231 + $0xe8] sm:$0xff]
                  %424 = vst [vmem:[%s232 + $0xdd] sm:$0xff] %v423
                  %v425 = vld [vmem:[%s231 + $0xc0] sm:$0xff]
                  %426 = vst [vmem:[%s232 + $0xb4] sm:$0xff] %v425
                  %v427 = vld [vmem:[%s231 + $0xc8] sm:$0xff]
                  %428 = vst [vmem:[%s232 + $0xbc] sm:$0xff] %v427
                  %v429 = vld [vmem:[%s231 + $0xd0] sm:$0xff]
                  %430 = vst [vmem:[%s232 + $0xc4] sm:$0xff] %v429
                  %v431 = vld [vmem:[%s231 + $0xd8] sm:$0xff]
                  %432 = vst [vmem:[%s232 + $0xcc] sm:$0xff] %v431
                  %v433 = vld [vmem:[%s231 + $0xe0] sm:$0xff]
                  %434 = vst [vmem:[%s232 + $0xd4] sm:$0xff] %v433
                  %v435 = vld [vmem:[%s231 + $0xe8] sm:$0xff]
                  %436 = vst [vmem:[%s232 + $0xdc] sm:$0xff] %v435
                  %v437 = vld [vmem:[%s231 + $0xf0] sm:$0xff]
                  %438 = vst [vmem:[%s232 + $0xe4] sm:$0xff] %v437
                  %v439 = vld [vmem:[%s231 + $0xf8] sm:$0xff]
                  %440 = vst [vmem:[%s232 + $0xec] sm:$0xff] %v439
                  %v441 = vld [vmem:[%s231 + $0xd0] sm:$0xff]
                  %442 = vst [vmem:[%s232 + $0xc3] sm:$0xff] %v441
                  %v443 = vld [vmem:[%s231 + $0xd8] sm:$0xff]
                  %444 = vst [vmem:[%s232 + $0xcb] sm:$0xff] %v443
                  %v445 = vld [vmem:[%s231 + $0xe0] sm:$0xff]
                  %446 = vst [vmem:[%s232 + $0xd3] sm:$0xff] %v445
                  %v447 = vld [vmem:[%s231 + $0xe8] sm:$0xff]
                  %448 = vst [vmem:[%s232 + $0xdb] sm:$0xff] %v447
                  %v449 = vld [vmem:[%s231 + $0xf0] sm:$0xff]
                  %450 = vst [vmem:[%s232 + $0xe3] sm:$0xff] %v449
                  %v451 = vld [vmem:[%s231 + $0xf8] sm:$0xff]
                  %452 = vst [vmem:[%s232 + $0xeb] sm:$0xff] %v451
                  %v453 = vld [vmem:[%s231 + $0x100] sm:$0xff]
                  %454 = vst [vmem:[%s232 + $0xf3] sm:$0xff] %v453
                  %v455 = vld [vmem:[%s231 + $0x108] sm:$0xff]
                  %456 = vst [vmem:[%s232 + $0xfb] sm:$0xff] %v455
                  %v457 = vld [vmem:[%s231 + $0xe0] sm:$0xff]
                  %458 = vst [vmem:[%s232 + $0xd2] sm:$0xff] %v457
                  %v459 = vld [vmem:[%s231 + $0xe8] sm:$0xff]
                  %460 = vst [vmem:[%s232 + $0xda] sm:$0xff] %v459
                  %v461 = vld [vmem:[%s231 + $0xf0] sm:$0xff]
                  %462 = vst [vmem:[%s232 + $0xe2] sm:$0xff] %v461
                  %v463 = vld [vmem:[%s231 + $0xf8] sm:$0xff]
                  %464 = vst [vmem:[%s232 + $0xea] sm:$0xff] %v463
                  %v465 = vld [vmem:[%s231 + $0x100] sm:$0xff]
                  %466 = vst [vmem:[%s232 + $0xf2] sm:$0xff] %v465
                  %v467 = vld [vmem:[%s231 + $0x108] sm:$0xff]
                  %468 = vst [vmem:[%s232 + $0xfa] sm:$0xff] %v467
                  %v469 = vld [vmem:[%s231 + $0x110] sm:$0xff]
                  %470 = vst [vmem:[%s232 + $0x102] sm:$0xff] %v469
                  %v471 = vld [vmem:[%s231 + $0x118] sm:$0xff]
                  %472 = vst [vmem:[%s232 + $0x10a] sm:$0xff] %v471
                  %s473 = sadd.s32 1, %s230
                  %p474 = scmp.ge.s32.totalorder %s473, %s219
                  %s475 = scalar_select %p474, 0, %s473
                  %s476 = sadd.s32 1, %s229
                  %s477 = scalar_select %p474, %s476, %s229
                  %p478 = scmp.ge.s32.totalorder %s477, %s217
                  %s479 = scalar_select %p478, 0, %s477
                  %s480 = smul.u32 %s479, 240
                  %s481 = smul.u32 %s475, 64
                  %s482 = sadd.s32 %s480, %s481
                  %s483 = smul.u32 %s479, 225
                  %s484 = smul.u32 %s475, 64
                  %s485 = sadd.s32 %s483, %s484
                  %s486 = scalar_lea.vmem %s126, %s482
                  %s487 = scalar_lea.vmem %s111, %s485 [#allocation2]
                $region55: #{_lambda_.1} parent=49 // loop_footer
                  %s226 = sadd.s32 %s224, 1
                $region56: #{_lambda_.1} parent=49 // loop_footer_branch
                  %223 = sbr.rel target = $region52
                $region57: #{_lambda_.1} parent=49 // loop_exit
                  _
                %s488 = sshrl.u32 %s216, 3
                %s489 = sdiv.u32.pop %s116, 15
                %s490 = srem.u32.pop %s116, 15
                %s491 = smul.u32 %s489, 15
                %s492 = smul.u32 16, %s491
                %s493 = scalar_lea.vmem %s126, %s492
                %s494 = smul.u32 15, %s491
                %s495 = scalar_lea.vmem %s111, %s494 [#allocation2]
                %s496 = smul.u32 %s490, %s488
                // While loop
                $region58: #{_lambda_.1} parent=49 // loop_pre_header
                  _
                $region59: #{_lambda_.1} parent=49 // loop_header
                  %s500 = sphi 0, %s502
                  %p501 = scmp.ge.s32.totalorder %s500, %s496
                  %s505 = sphi 0, %s531
                  %s506 = sphi 0, %s527
                  %s507 = sphi %s493, %s538
                  %s508 = sphi %s495, %s539
                $region60: #{_lambda_.1} parent=49 // loop_header_branch
                  %504 = sbr.rel (%p501) target = $region64
                $region61: #{_lambda_.1} parent=49 // loop_body
                  %v509 = vld [vmem:[%s507] sm:$0xff]
                  %510 = vst [vmem:[%s508] sm:$0xff] %v509
                  %v511 = vld [vmem:[%s507 + $0x8] sm:$0xff]
                  %512 = vst [vmem:[%s508 + $0x8] sm:$0xff] %v511
                  %v513 = vld [vmem:[%s507 + $0x10] sm:$0xff]
                  %514 = vst [vmem:[%s508 + $0x10] sm:$0xff] %v513
                  %v515 = vld [vmem:[%s507 + $0x18] sm:$0xff]
                  %516 = vst [vmem:[%s508 + $0x18] sm:$0xff] %v515
                  %v517 = vld [vmem:[%s507 + $0x20] sm:$0xff]
                  %518 = vst [vmem:[%s508 + $0x20] sm:$0xff] %v517
                  %v519 = vld [vmem:[%s507 + $0x28] sm:$0xff]
                  %520 = vst [vmem:[%s508 + $0x28] sm:$0xff] %v519
                  %v521 = vld [vmem:[%s507 + $0x30] sm:$0xff]
                  %522 = vst [vmem:[%s508 + $0x30] sm:$0xff] %v521
                  %v523 = vld [vmem:[%s507 + $0x38] sm:$0xff]
                  %524 = vst [vmem:[%s508 + $0x38] sm:$0xff] %v523
                  %s525 = sadd.s32 1, %s506
                  %p526 = scmp.ge.s32.totalorder %s525, %s488
                  %s527 = scalar_select %p526, 0, %s525
                  %s528 = sadd.s32 1, %s505
                  %s529 = scalar_select %p526, %s528, %s505
                  %p530 = scmp.ge.s32.totalorder %s529, %s490
                  %s531 = scalar_select %p530, 0, %s529
                  %s532 = smul.u32 %s531, 16
                  %s533 = smul.u32 %s527, 64
                  %s534 = sadd.s32 %s532, %s533
                  %s535 = smul.u32 %s531, 15
                  %s536 = smul.u32 %s527, 64
                  %s537 = sadd.s32 %s535, %s536
                  %s538 = scalar_lea.vmem %s493, %s534
                  %s539 = scalar_lea.vmem %s495, %s537 [#allocation2]
                $region62: #{_lambda_.1} parent=49 // loop_footer
                  %s502 = sadd.s32 %s500, 1
                $region63: #{_lambda_.1} parent=49 // loop_footer_branch
                  %499 = sbr.rel target = $region59
                $region64: #{_lambda_.1} parent=49 // loop_exit
                  _
                %s540 = sshrl.u32 %s216, 3
                %s541 = sand.u32 %s216, 7
                %s542 = smul.u32 %s540, 8
                %s543 = smul.u32 128, %s542
                %s544 = sshra.s32 %s543, 4
                %s545 = scalar_lea.vmem %s126, %s544
                %s546 = smul.u32 128, %s542
                %s547 = sshra.s32 %s546, 4
                %s548 = scalar_lea.vmem %s111, %s547 [#allocation2]
                %s549 = smul.u32 %s116, %s541
                // While loop
                $region65: #{_lambda_.1} parent=49 // loop_pre_header
                  _
                $region66: #{_lambda_.1} parent=49 // loop_header
                  %s553 = sphi 0, %s555
                  %p554 = scmp.ge.s32.totalorder %s553, %s549
                  %s558 = sphi 0, %s570
                  %s559 = sphi 0, %s566
                  %s560 = sphi %s545, %s577
                  %s561 = sphi %s548, %s578
                $region67: #{_lambda_.1} parent=49 // loop_header_branch
                  %557 = sbr.rel (%p554) target = $region71
                $region68: #{_lambda_.1} parent=49 // loop_body
                  %v562 = vld [vmem:[%s560] sm:$0xff]
                  %563 = vst [vmem:[%s561] sm:$0xff] %v562
                  %s564 = sadd.s32 1, %s559
                  %p565 = scmp.ge.s32.totalorder %s564, %s541
                  %s566 = scalar_select %p565, 0, %s564
                  %s567 = sadd.s32 1, %s558
                  %s568 = scalar_select %p565, %s567, %s558
                  %p569 = scmp.ge.s32.totalorder %s568, %s116
                  %s570 = scalar_select %p569, 0, %s568
                  %s571 = smul.u32 %s570, 16
                  %s572 = smul.u32 %s566, 8
                  %s573 = sadd.s32 %s571, %s572
                  %s574 = smul.u32 %s570, 15
                  %s575 = smul.u32 %s566, 8
                  %s576 = sadd.s32 %s574, %s575
                  %s577 = scalar_lea.vmem %s545, %s573
                  %s578 = scalar_lea.vmem %s548, %s576 [#allocation2]
                $region69: #{_lambda_.1} parent=49 // loop_footer
                  %s555 = sadd.s32 %s553, 1
                $region70: #{_lambda_.1} parent=49 // loop_footer_branch
                  %552 = sbr.rel target = $region66
                $region71: #{_lambda_.1} parent=49 // loop_exit
                  _
              $region50: #{_lambda_.1} parent=27 // pred_fallthru
                _
              %p579 = pneg %p212
              // Predicated region
              $region72: #{_lambda_.1} parent=27 // pred_check
                _
              $region73: #{_lambda_.1} parent=27 // pred_check_branch
                %581 = sbr.rel (%p212) target = $region75
              $region74: #{_lambda_.1} parent=27 // pred_region
                %s582 = sand.u32 %s120, 7
                %s583 = ssub.s32 %s120, %s582
                %s584 = scalar_lea.vmem %s126, %s583
                %s585 = ssub.s32 %s120, %s582
                %s586 = scalar_lea.vmem %s111, %s585 [#allocation2]
                %s587 = sshrl.u32 %s120, 3
                %s588 = sdiv.u32.pop %s116, 15
                %s589 = srem.u32.pop %s116, 15
                %s590 = sshrl.u32 %s587, 3
                %s591 = smul.u32 %s588, %s590
                // While loop
                $region76: #{_lambda_.1} parent=74 // loop_pre_header
                  _
                $region77: #{_lambda_.1} parent=74 // loop_header
                  %s595 = sphi 0, %s597
                  %p596 = scmp.ge.s32.totalorder %s595, %s591
                  %s600 = sphi 0, %s850
                  %s601 = sphi 0, %s846
                  %s602 = sphi %s126, %s857
                  %s603 = sphi %s111, %s858
                $region78: #{_lambda_.1} parent=74 // loop_header_branch
                  %599 = sbr.rel (%p596) target = $region82
                $region79: #{_lambda_.1} parent=74 // loop_body
                  %v604 = vld [vmem:[%s602] sm:$0xff]
                  %605 = vst [vmem:[%s603] sm:$0xff] %v604
                  %v606 = vld [vmem:[%s602 + $0x8] sm:$0xff]
                  %607 = vst [vmem:[%s603 + $0x8] sm:$0xff] %v606
                  %v608 = vld [vmem:[%s602 + $0x10] sm:$0xff]
                  %609 = vst [vmem:[%s603 + $0x10] sm:$0xff] %v608
                  %v610 = vld [vmem:[%s602 + $0x18] sm:$0xff]
                  %611 = vst [vmem:[%s603 + $0x18] sm:$0xff] %v610
                  %v612 = vld [vmem:[%s602 + $0x20] sm:$0xff]
                  %613 = vst [vmem:[%s603 + $0x20] sm:$0xff] %v612
                  %v614 = vld [vmem:[%s602 + $0x28] sm:$0xff]
                  %615 = vst [vmem:[%s603 + $0x28] sm:$0xff] %v614
                  %v616 = vld [vmem:[%s602 + $0x30] sm:$0xff]
                  %617 = vst [vmem:[%s603 + $0x30] sm:$0xff] %v616
                  %v618 = vld [vmem:[%s602 + $0x38] sm:$0xff]
                  %619 = vst [vmem:[%s603 + $0x38] sm:$0xff] %v618
                  %v620 = vld [vmem:[%s602 + $0x10] sm:$0xff]
                  %621 = vst [vmem:[%s603 + $0xf] sm:$0xff] %v620
                  %v622 = vld [vmem:[%s602 + $0x18] sm:$0xff]
                  %623 = vst [vmem:[%s603 + $0x17] sm:$0xff] %v622
                  %v624 = vld [vmem:[%s602 + $0x20] sm:$0xff]
                  %625 = vst [vmem:[%s603 + $0x1f] sm:$0xff] %v624
                  %v626 = vld [vmem:[%s602 + $0x28] sm:$0xff]
                  %627 = vst [vmem:[%s603 + $0x27] sm:$0xff] %v626
                  %v628 = vld [vmem:[%s602 + $0x30] sm:$0xff]
                  %629 = vst [vmem:[%s603 + $0x2f] sm:$0xff] %v628
                  %v630 = vld [vmem:[%s602 + $0x38] sm:$0xff]
                  %631 = vst [vmem:[%s603 + $0x37] sm:$0xff] %v630
                  %v632 = vld [vmem:[%s602 + $0x40] sm:$0xff]
                  %633 = vst [vmem:[%s603 + $0x3f] sm:$0xff] %v632
                  %v634 = vld [vmem:[%s602 + $0x48] sm:$0xff]
                  %635 = vst [vmem:[%s603 + $0x47] sm:$0xff] %v634
                  %v636 = vld [vmem:[%s602 + $0x20] sm:$0xff]
                  %637 = vst [vmem:[%s603 + $0x1e] sm:$0xff] %v636
                  %v638 = vld [vmem:[%s602 + $0x28] sm:$0xff]
                  %639 = vst [vmem:[%s603 + $0x26] sm:$0xff] %v638
                  %v640 = vld [vmem:[%s602 + $0x30] sm:$0xff]
                  %641 = vst [vmem:[%s603 + $0x2e] sm:$0xff] %v640
                  %v642 = vld [vmem:[%s602 + $0x38] sm:$0xff]
                  %643 = vst [vmem:[%s603 + $0x36] sm:$0xff] %v642
                  %v644 = vld [vmem:[%s602 + $0x40] sm:$0xff]
                  %645 = vst [vmem:[%s603 + $0x3e] sm:$0xff] %v644
                  %v646 = vld [vmem:[%s602 + $0x48] sm:$0xff]
                  %647 = vst [vmem:[%s603 + $0x46] sm:$0xff] %v646
                  %v648 = vld [vmem:[%s602 + $0x50] sm:$0xff]
                  %649 = vst [vmem:[%s603 + $0x4e] sm:$0xff] %v648
                  %v650 = vld [vmem:[%s602 + $0x58] sm:$0xff]
                  %651 = vst [vmem:[%s603 + $0x56] sm:$0xff] %v650
                  %v652 = vld [vmem:[%s602 + $0x30] sm:$0xff]
                  %653 = vst [vmem:[%s603 + $0x2d] sm:$0xff] %v652
                  %v654 = vld [vmem:[%s602 + $0x38] sm:$0xff]
                  %655 = vst [vmem:[%s603 + $0x35] sm:$0xff] %v654
                  %v656 = vld [vmem:[%s602 + $0x40] sm:$0xff]
                  %657 = vst [vmem:[%s603 + $0x3d] sm:$0xff] %v656
                  %v658 = vld [vmem:[%s602 + $0x48] sm:$0xff]
                  %659 = vst [vmem:[%s603 + $0x45] sm:$0xff] %v658
                  %v660 = vld [vmem:[%s602 + $0x50] sm:$0xff]
                  %661 = vst [vmem:[%s603 + $0x4d] sm:$0xff] %v660
                  %v662 = vld [vmem:[%s602 + $0x58] sm:$0xff]
                  %663 = vst [vmem:[%s603 + $0x55] sm:$0xff] %v662
                  %v664 = vld [vmem:[%s602 + $0x60] sm:$0xff]
                  %665 = vst [vmem:[%s603 + $0x5d] sm:$0xff] %v664
                  %v666 = vld [vmem:[%s602 + $0x68] sm:$0xff]
                  %667 = vst [vmem:[%s603 + $0x65] sm:$0xff] %v666
                  %v668 = vld [vmem:[%s602 + $0x40] sm:$0xff]
                  %669 = vst [vmem:[%s603 + $0x3c] sm:$0xff] %v668
                  %v670 = vld [vmem:[%s602 + $0x48] sm:$0xff]
                  %671 = vst [vmem:[%s603 + $0x44] sm:$0xff] %v670
                  %v672 = vld [vmem:[%s602 + $0x50] sm:$0xff]
                  %673 = vst [vmem:[%s603 + $0x4c] sm:$0xff] %v672
                  %v674 = vld [vmem:[%s602 + $0x58] sm:$0xff]
                  %675 = vst [vmem:[%s603 + $0x54] sm:$0xff] %v674
                  %v676 = vld [vmem:[%s602 + $0x60] sm:$0xff]
                  %677 = vst [vmem:[%s603 + $0x5c] sm:$0xff] %v676
                  %v678 = vld [vmem:[%s602 + $0x68] sm:$0xff]
                  %679 = vst [vmem:[%s603 + $0x64] sm:$0xff] %v678
                  %v680 = vld [vmem:[%s602 + $0x70] sm:$0xff]
                  %681 = vst [vmem:[%s603 + $0x6c] sm:$0xff] %v680
                  %v682 = vld [vmem:[%s602 + $0x78] sm:$0xff]
                  %683 = vst [vmem:[%s603 + $0x74] sm:$0xff] %v682
                  %v684 = vld [vmem:[%s602 + $0x50] sm:$0xff]
                  %685 = vst [vmem:[%s603 + $0x4b] sm:$0xff] %v684
                  %v686 = vld [vmem:[%s602 + $0x58] sm:$0xff]
                  %687 = vst [vmem:[%s603 + $0x53] sm:$0xff] %v686
                  %v688 = vld [vmem:[%s602 + $0x60] sm:$0xff]
                  %689 = vst [vmem:[%s603 + $0x5b] sm:$0xff] %v688
                  %v690 = vld [vmem:[%s602 + $0x68] sm:$0xff]
                  %691 = vst [vmem:[%s603 + $0x63] sm:$0xff] %v690
                  %v692 = vld [vmem:[%s602 + $0x70] sm:$0xff]
                  %693 = vst [vmem:[%s603 + $0x6b] sm:$0xff] %v692
                  %v694 = vld [vmem:[%s602 + $0x78] sm:$0xff]
                  %695 = vst [vmem:[%s603 + $0x73] sm:$0xff] %v694
                  %v696 = vld [vmem:[%s602 + $0x80] sm:$0xff]
                  %697 = vst [vmem:[%s603 + $0x7b] sm:$0xff] %v696
                  %v698 = vld [vmem:[%s602 + $0x88] sm:$0xff]
                  %699 = vst [vmem:[%s603 + $0x83] sm:$0xff] %v698
                  %v700 = vld [vmem:[%s602 + $0x60] sm:$0xff]
                  %701 = vst [vmem:[%s603 + $0x5a] sm:$0xff] %v700
                  %v702 = vld [vmem:[%s602 + $0x68] sm:$0xff]
                  %703 = vst [vmem:[%s603 + $0x62] sm:$0xff] %v702
                  %v704 = vld [vmem:[%s602 + $0x70] sm:$0xff]
                  %705 = vst [vmem:[%s603 + $0x6a] sm:$0xff] %v704
                  %v706 = vld [vmem:[%s602 + $0x78] sm:$0xff]
                  %707 = vst [vmem:[%s603 + $0x72] sm:$0xff] %v706
                  %v708 = vld [vmem:[%s602 + $0x80] sm:$0xff]
                  %709 = vst [vmem:[%s603 + $0x7a] sm:$0xff] %v708
                  %v710 = vld [vmem:[%s602 + $0x88] sm:$0xff]
                  %711 = vst [vmem:[%s603 + $0x82] sm:$0xff] %v710
                  %v712 = vld [vmem:[%s602 + $0x90] sm:$0xff]
                  %713 = vst [vmem:[%s603 + $0x8a] sm:$0xff] %v712
                  %v714 = vld [vmem:[%s602 + $0x98] sm:$0xff]
                  %715 = vst [vmem:[%s603 + $0x92] sm:$0xff] %v714
                  %v716 = vld [vmem:[%s602 + $0x70] sm:$0xff]
                  %717 = vst [vmem:[%s603 + $0x69] sm:$0xff] %v716
                  %v718 = vld [vmem:[%s602 + $0x78] sm:$0xff]
                  %719 = vst [vmem:[%s603 + $0x71] sm:$0xff] %v718
                  %v720 = vld [vmem:[%s602 + $0x80] sm:$0xff]
                  %721 = vst [vmem:[%s603 + $0x79] sm:$0xff] %v720
                  %v722 = vld [vmem:[%s602 + $0x88] sm:$0xff]
                  %723 = vst [vmem:[%s603 + $0x81] sm:$0xff] %v722
                  %v724 = vld [vmem:[%s602 + $0x90] sm:$0xff]
                  %725 = vst [vmem:[%s603 + $0x89] sm:$0xff] %v724
                  %v726 = vld [vmem:[%s602 + $0x98] sm:$0xff]
                  %727 = vst [vmem:[%s603 + $0x91] sm:$0xff] %v726
                  %v728 = vld [vmem:[%s602 + $0xa0] sm:$0xff]
                  %729 = vst [vmem:[%s603 + $0x99] sm:$0xff] %v728
                  %v730 = vld [vmem:[%s602 + $0xa8] sm:$0xff]
                  %731 = vst [vmem:[%s603 + $0xa1] sm:$0xff] %v730
                  %v732 = vld [vmem:[%s602 + $0x80] sm:$0xff]
                  %733 = vst [vmem:[%s603 + $0x78] sm:$0xff] %v732
                  %v734 = vld [vmem:[%s602 + $0x88] sm:$0xff]
                  %735 = vst [vmem:[%s603 + $0x80] sm:$0xff] %v734
                  %v736 = vld [vmem:[%s602 + $0x90] sm:$0xff]
                  %737 = vst [vmem:[%s603 + $0x88] sm:$0xff] %v736
                  %v738 = vld [vmem:[%s602 + $0x98] sm:$0xff]
                  %739 = vst [vmem:[%s603 + $0x90] sm:$0xff] %v738
                  %v740 = vld [vmem:[%s602 + $0xa0] sm:$0xff]
                  %741 = vst [vmem:[%s603 + $0x98] sm:$0xff] %v740
                  %v742 = vld [vmem:[%s602 + $0xa8] sm:$0xff]
                  %743 = vst [vmem:[%s603 + $0xa0] sm:$0xff] %v742
                  %v744 = vld [vmem:[%s602 + $0xb0] sm:$0xff]
                  %745 = vst [vmem:[%s603 + $0xa8] sm:$0xff] %v744
                  %v746 = vld [vmem:[%s602 + $0xb8] sm:$0xff]
                  %747 = vst [vmem:[%s603 + $0xb0] sm:$0xff] %v746
                  %v748 = vld [vmem:[%s602 + $0x90] sm:$0xff]
                  %749 = vst [vmem:[%s603 + $0x87] sm:$0xff] %v748
                  %v750 = vld [vmem:[%s602 + $0x98] sm:$0xff]
                  %751 = vst [vmem:[%s603 + $0x8f] sm:$0xff] %v750
                  %v752 = vld [vmem:[%s602 + $0xa0] sm:$0xff]
                  %753 = vst [vmem:[%s603 + $0x97] sm:$0xff] %v752
                  %v754 = vld [vmem:[%s602 + $0xa8] sm:$0xff]
                  %755 = vst [vmem:[%s603 + $0x9f] sm:$0xff] %v754
                  %v756 = vld [vmem:[%s602 + $0xb0] sm:$0xff]
                  %757 = vst [vmem:[%s603 + $0xa7] sm:$0xff] %v756
                  %v758 = vld [vmem:[%s602 + $0xb8] sm:$0xff]
                  %759 = vst [vmem:[%s603 + $0xaf] sm:$0xff] %v758
                  %v760 = vld [vmem:[%s602 + $0xc0] sm:$0xff]
                  %761 = vst [vmem:[%s603 + $0xb7] sm:$0xff] %v760
                  %v762 = vld [vmem:[%s602 + $0xc8] sm:$0xff]
                  %763 = vst [vmem:[%s603 + $0xbf] sm:$0xff] %v762
                  %v764 = vld [vmem:[%s602 + $0xa0] sm:$0xff]
                  %765 = vst [vmem:[%s603 + $0x96] sm:$0xff] %v764
                  %v766 = vld [vmem:[%s602 + $0xa8] sm:$0xff]
                  %767 = vst [vmem:[%s603 + $0x9e] sm:$0xff] %v766
                  %v768 = vld [vmem:[%s602 + $0xb0] sm:$0xff]
                  %769 = vst [vmem:[%s603 + $0xa6] sm:$0xff] %v768
                  %v770 = vld [vmem:[%s602 + $0xb8] sm:$0xff]
                  %771 = vst [vmem:[%s603 + $0xae] sm:$0xff] %v770
                  %v772 = vld [vmem:[%s602 + $0xc0] sm:$0xff]
                  %773 = vst [vmem:[%s603 + $0xb6] sm:$0xff] %v772
                  %v774 = vld [vmem:[%s602 + $0xc8] sm:$0xff]
                  %775 = vst [vmem:[%s603 + $0xbe] sm:$0xff] %v774
                  %v776 = vld [vmem:[%s602 + $0xd0] sm:$0xff]
                  %777 = vst [vmem:[%s603 + $0xc6] sm:$0xff] %v776
                  %v778 = vld [vmem:[%s602 + $0xd8] sm:$0xff]
                  %779 = vst [vmem:[%s603 + $0xce] sm:$0xff] %v778
                  %v780 = vld [vmem:[%s602 + $0xb0] sm:$0xff]
                  %781 = vst [vmem:[%s603 + $0xa5] sm:$0xff] %v780
                  %v782 = vld [vmem:[%s602 + $0xb8] sm:$0xff]
                  %783 = vst [vmem:[%s603 + $0xad] sm:$0xff] %v782
                  %v784 = vld [vmem:[%s602 + $0xc0] sm:$0xff]
                  %785 = vst [vmem:[%s603 + $0xb5] sm:$0xff] %v784
                  %v786 = vld [vmem:[%s602 + $0xc8] sm:$0xff]
                  %787 = vst [vmem:[%s603 + $0xbd] sm:$0xff] %v786
                  %v788 = vld [vmem:[%s602 + $0xd0] sm:$0xff]
                  %789 = vst [vmem:[%s603 + $0xc5] sm:$0xff] %v788
                  %v790 = vld [vmem:[%s602 + $0xd8] sm:$0xff]
                  %791 = vst [vmem:[%s603 + $0xcd] sm:$0xff] %v790
                  %v792 = vld [vmem:[%s602 + $0xe0] sm:$0xff]
                  %793 = vst [vmem:[%s603 + $0xd5] sm:$0xff] %v792
                  %v794 = vld [vmem:[%s602 + $0xe8] sm:$0xff]
                  %795 = vst [vmem:[%s603 + $0xdd] sm:$0xff] %v794
                  %v796 = vld [vmem:[%s602 + $0xc0] sm:$0xff]
                  %797 = vst [vmem:[%s603 + $0xb4] sm:$0xff] %v796
                  %v798 = vld [vmem:[%s602 + $0xc8] sm:$0xff]
                  %799 = vst [vmem:[%s603 + $0xbc] sm:$0xff] %v798
                  %v800 = vld [vmem:[%s602 + $0xd0] sm:$0xff]
                  %801 = vst [vmem:[%s603 + $0xc4] sm:$0xff] %v800
                  %v802 = vld [vmem:[%s602 + $0xd8] sm:$0xff]
                  %803 = vst [vmem:[%s603 + $0xcc] sm:$0xff] %v802
                  %v804 = vld [vmem:[%s602 + $0xe0] sm:$0xff]
                  %805 = vst [vmem:[%s603 + $0xd4] sm:$0xff] %v804
                  %v806 = vld [vmem:[%s602 + $0xe8] sm:$0xff]
                  %807 = vst [vmem:[%s603 + $0xdc] sm:$0xff] %v806
                  %v808 = vld [vmem:[%s602 + $0xf0] sm:$0xff]
                  %809 = vst [vmem:[%s603 + $0xe4] sm:$0xff] %v808
                  %v810 = vld [vmem:[%s602 + $0xf8] sm:$0xff]
                  %811 = vst [vmem:[%s603 + $0xec] sm:$0xff] %v810
                  %v812 = vld [vmem:[%s602 + $0xd0] sm:$0xff]
                  %813 = vst [vmem:[%s603 + $0xc3] sm:$0xff] %v812
                  %v814 = vld [vmem:[%s602 + $0xd8] sm:$0xff]
                  %815 = vst [vmem:[%s603 + $0xcb] sm:$0xff] %v814
                  %v816 = vld [vmem:[%s602 + $0xe0] sm:$0xff]
                  %817 = vst [vmem:[%s603 + $0xd3] sm:$0xff] %v816
                  %v818 = vld [vmem:[%s602 + $0xe8] sm:$0xff]
                  %819 = vst [vmem:[%s603 + $0xdb] sm:$0xff] %v818
                  %v820 = vld [vmem:[%s602 + $0xf0] sm:$0xff]
                  %821 = vst [vmem:[%s603 + $0xe3] sm:$0xff] %v820
                  %v822 = vld [vmem:[%s602 + $0xf8] sm:$0xff]
                  %823 = vst [vmem:[%s603 + $0xeb] sm:$0xff] %v822
                  %v824 = vld [vmem:[%s602 + $0x100] sm:$0xff]
                  %825 = vst [vmem:[%s603 + $0xf3] sm:$0xff] %v824
                  %v826 = vld [vmem:[%s602 + $0x108] sm:$0xff]
                  %827 = vst [vmem:[%s603 + $0xfb] sm:$0xff] %v826
                  %v828 = vld [vmem:[%s602 + $0xe0] sm:$0xff]
                  %829 = vst [vmem:[%s603 + $0xd2] sm:$0xff] %v828
                  %v830 = vld [vmem:[%s602 + $0xe8] sm:$0xff]
                  %831 = vst [vmem:[%s603 + $0xda] sm:$0xff] %v830
                  %v832 = vld [vmem:[%s602 + $0xf0] sm:$0xff]
                  %833 = vst [vmem:[%s603 + $0xe2] sm:$0xff] %v832
                  %v834 = vld [vmem:[%s602 + $0xf8] sm:$0xff]
                  %835 = vst [vmem:[%s603 + $0xea] sm:$0xff] %v834
                  %v836 = vld [vmem:[%s602 + $0x100] sm:$0xff]
                  %837 = vst [vmem:[%s603 + $0xf2] sm:$0xff] %v836
                  %v838 = vld [vmem:[%s602 + $0x108] sm:$0xff]
                  %839 = vst [vmem:[%s603 + $0xfa] sm:$0xff] %v838
                  %v840 = vld [vmem:[%s602 + $0x110] sm:$0xff]
                  %841 = vst [vmem:[%s603 + $0x102] sm:$0xff] %v840
                  %v842 = vld [vmem:[%s602 + $0x118] sm:$0xff]
                  %843 = vst [vmem:[%s603 + $0x10a] sm:$0xff] %v842
                  %s844 = sadd.s32 1, %s601
                  %p845 = scmp.ge.s32.totalorder %s844, %s590
                  %s846 = scalar_select %p845, 0, %s844
                  %s847 = sadd.s32 1, %s600
                  %s848 = scalar_select %p845, %s847, %s600
                  %p849 = scmp.ge.s32.totalorder %s848, %s588
                  %s850 = scalar_select %p849, 0, %s848
                  %s851 = smul.u32 %s850, 240
                  %s852 = smul.u32 %s846, 64
                  %s853 = sadd.s32 %s851, %s852
                  %s854 = smul.u32 %s850, 225
                  %s855 = smul.u32 %s846, 64
                  %s856 = sadd.s32 %s854, %s855
                  %s857 = scalar_lea.vmem %s126, %s853
                  %s858 = scalar_lea.vmem %s111, %s856 [#allocation2]
                $region80: #{_lambda_.1} parent=74 // loop_footer
                  %s597 = sadd.s32 %s595, 1
                $region81: #{_lambda_.1} parent=74 // loop_footer_branch
                  %594 = sbr.rel target = $region77
                $region82: #{_lambda_.1} parent=74 // loop_exit
                  _
                %s859 = sshrl.u32 %s587, 3
                %s860 = sdiv.u32.pop %s116, 15
                %s861 = srem.u32.pop %s116, 15
                %s862 = smul.u32 %s860, 15
                %s863 = smul.u32 16, %s862
                %s864 = scalar_lea.vmem %s126, %s863
                %s865 = smul.u32 15, %s862
                %s866 = scalar_lea.vmem %s111, %s865 [#allocation2]
                %s867 = smul.u32 %s861, %s859
                // While loop
                $region83: #{_lambda_.1} parent=74 // loop_pre_header
                  _
                $region84: #{_lambda_.1} parent=74 // loop_header
                  %s871 = sphi 0, %s873
                  %p872 = scmp.ge.s32.totalorder %s871, %s867
                  %s876 = sphi 0, %s902
                  %s877 = sphi 0, %s898
                  %s878 = sphi %s864, %s909
                  %s879 = sphi %s866, %s910
                $region85: #{_lambda_.1} parent=74 // loop_header_branch
                  %875 = sbr.rel (%p872) target = $region89
                $region86: #{_lambda_.1} parent=74 // loop_body
                  %v880 = vld [vmem:[%s878] sm:$0xff]
                  %881 = vst [vmem:[%s879] sm:$0xff] %v880
                  %v882 = vld [vmem:[%s878 + $0x8] sm:$0xff]
                  %883 = vst [vmem:[%s879 + $0x8] sm:$0xff] %v882
                  %v884 = vld [vmem:[%s878 + $0x10] sm:$0xff]
                  %885 = vst [vmem:[%s879 + $0x10] sm:$0xff] %v884
                  %v886 = vld [vmem:[%s878 + $0x18] sm:$0xff]
                  %887 = vst [vmem:[%s879 + $0x18] sm:$0xff] %v886
                  %v888 = vld [vmem:[%s878 + $0x20] sm:$0xff]
                  %889 = vst [vmem:[%s879 + $0x20] sm:$0xff] %v888
                  %v890 = vld [vmem:[%s878 + $0x28] sm:$0xff]
                  %891 = vst [vmem:[%s879 + $0x28] sm:$0xff] %v890
                  %v892 = vld [vmem:[%s878 + $0x30] sm:$0xff]
                  %893 = vst [vmem:[%s879 + $0x30] sm:$0xff] %v892
                  %v894 = vld [vmem:[%s878 + $0x38] sm:$0xff]
                  %895 = vst [vmem:[%s879 + $0x38] sm:$0xff] %v894
                  %s896 = sadd.s32 1, %s877
                  %p897 = scmp.ge.s32.totalorder %s896, %s859
                  %s898 = scalar_select %p897, 0, %s896
                  %s899 = sadd.s32 1, %s876
                  %s900 = scalar_select %p897, %s899, %s876
                  %p901 = scmp.ge.s32.totalorder %s900, %s861
                  %s902 = scalar_select %p901, 0, %s900
                  %s903 = smul.u32 %s902, 16
                  %s904 = smul.u32 %s898, 64
                  %s905 = sadd.s32 %s903, %s904
                  %s906 = smul.u32 %s902, 15
                  %s907 = smul.u32 %s898, 64
                  %s908 = sadd.s32 %s906, %s907
                  %s909 = scalar_lea.vmem %s864, %s905
                  %s910 = scalar_lea.vmem %s866, %s908 [#allocation2]
                $region87: #{_lambda_.1} parent=74 // loop_footer
                  %s873 = sadd.s32 %s871, 1
                $region88: #{_lambda_.1} parent=74 // loop_footer_branch
                  %870 = sbr.rel target = $region84
                $region89: #{_lambda_.1} parent=74 // loop_exit
                  _
                %s911 = sshrl.u32 %s587, 3
                %s912 = sand.u32 %s587, 7
                %s913 = smul.u32 %s911, 8
                %s914 = smul.u32 128, %s913
                %s915 = sshra.s32 %s914, 4
                %s916 = scalar_lea.vmem %s126, %s915
                %s917 = smul.u32 128, %s913
                %s918 = sshra.s32 %s917, 4
                %s919 = scalar_lea.vmem %s111, %s918 [#allocation2]
                %s920 = smul.u32 %s116, %s912
                // While loop
                $region90: #{_lambda_.1} parent=74 // loop_pre_header
                  _
                $region91: #{_lambda_.1} parent=74 // loop_header
                  %s924 = sphi 0, %s926
                  %p925 = scmp.ge.s32.totalorder %s924, %s920
                  %s929 = sphi 0, %s941
                  %s930 = sphi 0, %s937
                  %s931 = sphi %s916, %s948
                  %s932 = sphi %s919, %s949
                $region92: #{_lambda_.1} parent=74 // loop_header_branch
                  %928 = sbr.rel (%p925) target = $region96
                $region93: #{_lambda_.1} parent=74 // loop_body
                  %v933 = vld [vmem:[%s931] sm:$0xff]
                  %934 = vst [vmem:[%s932] sm:$0xff] %v933
                  %s935 = sadd.s32 1, %s930
                  %p936 = scmp.ge.s32.totalorder %s935, %s912
                  %s937 = scalar_select %p936, 0, %s935
                  %s938 = sadd.s32 1, %s929
                  %s939 = scalar_select %p936, %s938, %s929
                  %p940 = scmp.ge.s32.totalorder %s939, %s116
                  %s941 = scalar_select %p940, 0, %s939
                  %s942 = smul.u32 %s941, 16
                  %s943 = smul.u32 %s937, 8
                  %s944 = sadd.s32 %s942, %s943
                  %s945 = smul.u32 %s941, 15
                  %s946 = smul.u32 %s937, 8
                  %s947 = sadd.s32 %s945, %s946
                  %s948 = scalar_lea.vmem %s916, %s944
                  %s949 = scalar_lea.vmem %s919, %s947 [#allocation2]
                $region94: #{_lambda_.1} parent=74 // loop_footer
                  %s926 = sadd.s32 %s924, 1
                $region95: #{_lambda_.1} parent=74 // loop_footer_branch
                  %923 = sbr.rel target = $region91
                $region96: #{_lambda_.1} parent=74 // loop_exit
                  _
                %s950 = sshllo.u32 0, %s582
                %s951 = sdiv.u32.pop %s116, 15
                %s952 = srem.u32.pop %s116, 15
                // While loop
                $region97: #{_lambda_.1} parent=74 // loop_pre_header
                  _
                $region98: #{_lambda_.1} parent=74 // loop_header
                  %s954 = sphi 0, %s956
                  %p955 = scmp.ge.s32.totalorder %s954, %s951
                  %s959 = sphi 0, %s994
                  %s960 = sphi %s584, %s997
                  %s961 = sphi %s586, %s998
                $region99: #{_lambda_.1} parent=74 // loop_header_branch
                  %958 = sbr.rel (%p955) target = $region103
                $region100: #{_lambda_.1} parent=74 // loop_body
                  %v962 = vld [vmem:[%s960] sm:%s950]
                  %963 = vst [vmem:[%s961] sm:%s950] %v962
                  %v964 = vld [vmem:[%s960 + $0x10] sm:%s950]
                  %965 = vst [vmem:[%s961 + $0xf] sm:%s950] %v964
                  %v966 = vld [vmem:[%s960 + $0x20] sm:%s950]
                  %967 = vst [vmem:[%s961 + $0x1e] sm:%s950] %v966
                  %v968 = vld [vmem:[%s960 + $0x30] sm:%s950]
                  %969 = vst [vmem:[%s961 + $0x2d] sm:%s950] %v968
                  %v970 = vld [vmem:[%s960 + $0x40] sm:%s950]
                  %971 = vst [vmem:[%s961 + $0x3c] sm:%s950] %v970
                  %v972 = vld [vmem:[%s960 + $0x50] sm:%s950]
                  %973 = vst [vmem:[%s961 + $0x4b] sm:%s950] %v972
                  %v974 = vld [vmem:[%s960 + $0x60] sm:%s950]
                  %975 = vst [vmem:[%s961 + $0x5a] sm:%s950] %v974
                  %v976 = vld [vmem:[%s960 + $0x70] sm:%s950]
                  %977 = vst [vmem:[%s961 + $0x69] sm:%s950] %v976
                  %v978 = vld [vmem:[%s960 + $0x80] sm:%s950]
                  %979 = vst [vmem:[%s961 + $0x78] sm:%s950] %v978
                  %v980 = vld [vmem:[%s960 + $0x90] sm:%s950]
                  %981 = vst [vmem:[%s961 + $0x87] sm:%s950] %v980
                  %v982 = vld [vmem:[%s960 + $0xa0] sm:%s950]
                  %983 = vst [vmem:[%s961 + $0x96] sm:%s950] %v982
                  %v984 = vld [vmem:[%s960 + $0xb0] sm:%s950]
                  %985 = vst [vmem:[%s961 + $0xa5] sm:%s950] %v984
                  %v986 = vld [vmem:[%s960 + $0xc0] sm:%s950]
                  %987 = vst [vmem:[%s961 + $0xb4] sm:%s950] %v986
                  %v988 = vld [vmem:[%s960 + $0xd0] sm:%s950]
                  %989 = vst [vmem:[%s961 + $0xc3] sm:%s950] %v988
                  %v990 = vld [vmem:[%s960 + $0xe0] sm:%s950]
                  %991 = vst [vmem:[%s961 + $0xd2] sm:%s950] %v990
                  %s992 = sadd.s32 1, %s959
                  %p993 = scmp.ge.s32.totalorder %s992, %s951
                  %s994 = scalar_select %p993, 0, %s992
                  %s995 = smul.u32 %s994, 240
                  %s996 = smul.u32 %s994, 225
                  %s997 = scalar_lea.vmem %s584, %s995
                  %s998 = scalar_lea.vmem %s586, %s996 [#allocation2]
                $region101: #{_lambda_.1} parent=74 // loop_footer
                  %s956 = sadd.s32 %s954, 1
                $region102: #{_lambda_.1} parent=74 // loop_footer_branch
                  %953 = sbr.rel target = $region98
                $region103: #{_lambda_.1} parent=74 // loop_exit
                  _
                %s999 = sdiv.u32.pop %s116, 15
                %s1000 = srem.u32.pop %s116, 15
                %s1001 = smul.u32 %s999, 15
                %s1002 = smul.u32 16, %s1001
                %s1003 = scalar_lea.vmem %s584, %s1002
                %s1004 = smul.u32 15, %s1001
                %s1005 = scalar_lea.vmem %s586, %s1004 [#allocation2]
                // While loop
                $region104: #{_lambda_.1} parent=74 // loop_pre_header
                  _
                $region105: #{_lambda_.1} parent=74 // loop_header
                  %s1007 = sphi 0, %s1009
                  %p1008 = scmp.ge.s32.totalorder %s1007, %s1000
                  %s1012 = sphi 0, %s1019
                  %s1013 = sphi %s1003, %s1022
                  %s1014 = sphi %s1005, %s1023
                $region106: #{_lambda_.1} parent=74 // loop_header_branch
                  %1011 = sbr.rel (%p1008) target = $region110
                $region107: #{_lambda_.1} parent=74 // loop_body
                  %v1015 = vld [vmem:[%s1013] sm:%s950]
                  %1016 = vst [vmem:[%s1014] sm:%s950] %v1015
                  %s1017 = sadd.s32 1, %s1012
                  %p1018 = scmp.ge.s32.totalorder %s1017, %s1000
                  %s1019 = scalar_select %p1018, 0, %s1017
                  %s1020 = smul.u32 %s1019, 16
                  %s1021 = smul.u32 %s1019, 15
                  %s1022 = scalar_lea.vmem %s1003, %s1020
                  %s1023 = scalar_lea.vmem %s1005, %s1021 [#allocation2]
                $region108: #{_lambda_.1} parent=74 // loop_footer
                  %s1009 = sadd.s32 %s1007, 1
                $region109: #{_lambda_.1} parent=74 // loop_footer_branch
                  %1006 = sbr.rel target = $region105
                $region110: #{_lambda_.1} parent=74 // loop_exit
                  _
              $region75: #{_lambda_.1} parent=27 // pred_fallthru
                _
            $region28: #{_lambda_.1} parent=23 // pred_fallthru
              _
            // Predicated region
            $region29: #{_lambda_.1} parent=23 // pred_check
              %p134 = pneg %p130
            $region30: #{_lambda_.1} parent=23 // pred_check_branch
              %136 = sbr.rel (%p134) target = $region32
            $region31: #{_lambda_.1} parent=23 // pred_region
              %s137 = sshllo.u32 0, %s120
              %s138 = sdiv.u32.pop %s116, 15
              %s139 = srem.u32.pop %s116, 15
              // While loop
              $region33: #{_lambda_.1} parent=31 // loop_pre_header
                _
              $region34: #{_lambda_.1} parent=31 // loop_header
                %s141 = sphi 0, %s143
                %p142 = scmp.ge.s32.totalorder %s141, %s138
                %s146 = sphi 0, %s181
                %s147 = sphi %s126, %s184
                %s148 = sphi %s111, %s185
              $region35: #{_lambda_.1} parent=31 // loop_header_branch
                %145 = sbr.rel (%p142) target = $region39
              $region36: #{_lambda_.1} parent=31 // loop_body
                %v149 = vld [vmem:[%s147] sm:%s137]
                %150 = vst [vmem:[%s148] sm:%s137] %v149
                %v151 = vld [vmem:[%s147 + $0x10] sm:%s137]
                %152 = vst [vmem:[%s148 + $0xf] sm:%s137] %v151
                %v153 = vld [vmem:[%s147 + $0x20] sm:%s137]
                %154 = vst [vmem:[%s148 + $0x1e] sm:%s137] %v153
                %v155 = vld [vmem:[%s147 + $0x30] sm:%s137]
                %156 = vst [vmem:[%s148 + $0x2d] sm:%s137] %v155
                %v157 = vld [vmem:[%s147 + $0x40] sm:%s137]
                %158 = vst [vmem:[%s148 + $0x3c] sm:%s137] %v157
                %v159 = vld [vmem:[%s147 + $0x50] sm:%s137]
                %160 = vst [vmem:[%s148 + $0x4b] sm:%s137] %v159
                %v161 = vld [vmem:[%s147 + $0x60] sm:%s137]
                %162 = vst [vmem:[%s148 + $0x5a] sm:%s137] %v161
                %v163 = vld [vmem:[%s147 + $0x70] sm:%s137]
                %164 = vst [vmem:[%s148 + $0x69] sm:%s137] %v163
                %v165 = vld [vmem:[%s147 + $0x80] sm:%s137]
                %166 = vst [vmem:[%s148 + $0x78] sm:%s137] %v165
                %v167 = vld [vmem:[%s147 + $0x90] sm:%s137]
                %168 = vst [vmem:[%s148 + $0x87] sm:%s137] %v167
                %v169 = vld [vmem:[%s147 + $0xa0] sm:%s137]
                %170 = vst [vmem:[%s148 + $0x96] sm:%s137] %v169
                %v171 = vld [vmem:[%s147 + $0xb0] sm:%s137]
                %172 = vst [vmem:[%s148 + $0xa5] sm:%s137] %v171
                %v173 = vld [vmem:[%s147 + $0xc0] sm:%s137]
                %174 = vst [vmem:[%s148 + $0xb4] sm:%s137] %v173
                %v175 = vld [vmem:[%s147 + $0xd0] sm:%s137]
                %176 = vst [vmem:[%s148 + $0xc3] sm:%s137] %v175
                %v177 = vld [vmem:[%s147 + $0xe0] sm:%s137]
                %178 = vst [vmem:[%s148 + $0xd2] sm:%s137] %v177
                %s179 = sadd.s32 1, %s146
                %p180 = scmp.ge.s32.totalorder %s179, %s138
                %s181 = scalar_select %p180, 0, %s179
                %s182 = smul.u32 %s181, 240
                %s183 = smul.u32 %s181, 225
                %s184 = scalar_lea.vmem %s126, %s182
                %s185 = scalar_lea.vmem %s111, %s183 [#allocation2]
              $region37: #{_lambda_.1} parent=31 // loop_footer
                %s143 = sadd.s32 %s141, 1
              $region38: #{_lambda_.1} parent=31 // loop_footer_branch
                %140 = sbr.rel target = $region34
              $region39: #{_lambda_.1} parent=31 // loop_exit
                _
              %s186 = sdiv.u32.pop %s116, 15
              %s187 = srem.u32.pop %s116, 15
              %s188 = smul.u32 %s186, 15
              %s189 = smul.u32 16, %s188
              %s190 = scalar_lea.vmem %s126, %s189
              %s191 = smul.u32 15, %s188
              %s192 = scalar_lea.vmem %s111, %s191 [#allocation2]
              // While loop
              $region40: #{_lambda_.1} parent=31 // loop_pre_header
                _
              $region41: #{_lambda_.1} parent=31 // loop_header
                %s194 = sphi 0, %s196
                %p195 = scmp.ge.s32.totalorder %s194, %s187
                %s199 = sphi 0, %s206
                %s200 = sphi %s190, %s209
                %s201 = sphi %s192, %s210
              $region42: #{_lambda_.1} parent=31 // loop_header_branch
                %198 = sbr.rel (%p195) target = $region46
              $region43: #{_lambda_.1} parent=31 // loop_body
                %v202 = vld [vmem:[%s200] sm:%s137]
                %203 = vst [vmem:[%s201] sm:%s137] %v202
                %s204 = sadd.s32 1, %s199
                %p205 = scmp.ge.s32.totalorder %s204, %s187
                %s206 = scalar_select %p205, 0, %s204
                %s207 = smul.u32 %s206, 16
                %s208 = smul.u32 %s206, 15
                %s209 = scalar_lea.vmem %s190, %s207
                %s210 = scalar_lea.vmem %s192, %s208 [#allocation2]
              $region44: #{_lambda_.1} parent=31 // loop_footer
                %s196 = sadd.s32 %s194, 1
              $region45: #{_lambda_.1} parent=31 // loop_footer_branch
                %193 = sbr.rel target = $region41
              $region46: #{_lambda_.1} parent=31 // loop_exit
                _
            $region32: #{_lambda_.1} parent=23 // pred_fallthru
              _
          $region24: #{_lambda_.1} parent=19 // pred_fallthru
            _
          %1024 = vnop
        $region20: #{_lambda_.1} parent=15 // pred_fallthru
          _
      $region16: #{_lambda_.1} parent=5 // pred_fallthru
        _
      %p1025 = scmp.le.s32.totalorder 1, %s7
      %p1026 = scmp.lt.s32.totalorder %s7, 5
      %p1027 = pnand %p1025, %p1026
      %p1028 = pneg %p1027
      // Predicated region
      $region111: #{_lambda_.1} parent=5 // pred_check
        _
      $region112: #{_lambda_.1} parent=5 // pred_check_branch
        %1030 = sbr.rel (%p1027) target = $region114
      $region113: #{_lambda_.1} parent=5 // pred_region
        %s1031 = ssub.s32 %s7, 1
        %s1032 = sand.u32 %s43, 1
        %s1033 = sand.u32 %s43, 1
        %s1034 = smul.addr %s1033, 225
        %s1035 = scalar_lea.vmem [#allocation2], %s1034
        // Predicated region
        $region115: #{_lambda_.1} parent=113 // pred_check
          %p1036 = pneg %p56
        $region116: #{_lambda_.1} parent=113 // pred_check_branch
          %1038 = sbr.rel (%p1036) target = $region118
        $region117: #{_lambda_.1} parent=113 // pred_region
          _
        $region118: #{_lambda_.1} parent=113 // pred_fallthru
          _
        %s1039 = sand.u32 %s43, 1
        %s1040 = sand.u32 %s43, 1
        %s1041 = smul.addr %s1040, 225
        %s1042 = scalar_lea.vmem [#allocation2], %s1041
        %p1043 = pneg %p56
        %p1044 = pneg %p53
        %p1045 = pneg %p86
        %p1046 = pneg %p83
        %s1047 = sand.u32 %s73, 1
        %s1048 = sand.u32 %s73, 1
        %s1049 = smul.addr %s1048, 25
        %s1050 = scalar_lea.vmem [#allocation3], %s1049
        %s1051 = smul.u32 15, %s17
        %s1052 = smul.u32 15, %s18
        %s1053 = ssub.s32 16, %s1051
        %p1054 = scmp.lt.s32.totalorder %s1053, 15
        %s1055 = scalar_select %p1054, %s1053, 15
        %s1056 = smul.u32 16, %s1055
        %s1057 = ssub.s32 16, %s1052
        %p1058 = scmp.lt.s32.totalorder %s1057, 15
        %s1059 = scalar_select %p1058, %s1057, 15
        %s1060 = smul.u32 %s1056, %s1059
        %s1061 = smul.u32 5, %s17
        %s1062 = smul.u32 5, %s18
        %s1063 = ssub.s32 6, %s1061
        %p1064 = scmp.lt.s32.totalorder %s1063, 5
        %s1065 = scalar_select %p1064, %s1063, 5
        %s1066 = smul.u32 16, %s1065
        %s1067 = ssub.s32 6, %s1062
        %p1068 = scmp.lt.s32.totalorder %s1067, 5
        %s1069 = scalar_select %p1068, %s1067, 5
        %s1070 = smul.u32 %s1066, %s1069
        %s1071 = smul.u32 %s18, 5
        %v1072 = vstv %s1071
        %v1073 = vadd.s32 %v1072, 1
        %v1074 = vadd.s32 %v1072, 2
        %v1075 = vadd.s32 %v1072, 3
        %v1076 = vadd.s32 %v1072, 4
        %vm1077 = vcmp.lt.s32.totalorder %v1072, 5
        %vm1078 = vcmp.lt.s32.totalorder %v1073, 5
        %vm1079 = vcmp.lt.s32.totalorder %v1074, 5
        %vm1080 = vcmp.lt.s32.totalorder %v1075, 5
        %vm1081 = vcmp.lt.s32.totalorder %v1076, 5
        %v1082 = vld [vmem:[%s1035] sm:$0x1]
        %v1083 = vld [vmem:[%s1035 + $0x1] sm:$0x1]
        %v1084 = vld [vmem:[%s1035 + $0x2] sm:$0x1]
        %v1085 = vld [vmem:[%s1035 + $0x3] sm:$0x1]
        %v1086 = vld [vmem:[%s1035 + $0x4] sm:$0x1]
        %v1087 = vld [vmem:[%s1035 + $0x5] sm:$0x1]
        %v1088 = vld [vmem:[%s1035 + $0x6] sm:$0x1]
        %v1089 = vld [vmem:[%s1035 + $0x7] sm:$0x1]
        %v1090 = vld [vmem:[%s1035 + $0x8] sm:$0x1]
        %v1091 = vld [vmem:[%s1035 + $0x9] sm:$0x1]
        %v1092 = vld [vmem:[%s1035 + $0xa] sm:$0x1]
        %v1093 = vld [vmem:[%s1035 + $0xb] sm:$0x1]
        %v1094 = vld [vmem:[%s1035 + $0xc] sm:$0x1]
        %v1095 = vld [vmem:[%s1035 + $0xd] sm:$0x1]
        %v1096 = vld [vmem:[%s1035 + $0xe] sm:$0x1]
        %v1097 = vsel %vm1077, %v1083, -inf
        %v1098 = vsel %vm1078, %v1086, -inf
        %v1099 = vsel %vm1079, %v1089, -inf
        %v1100 = vsel %vm1080, %v1092, -inf
        %v1101 = vsel %vm1081, %v1095, -inf
        %v1102 = vmax.f32 %v1082, %v1097
        %v1103 = vmax.f32 %v1085, %v1098
        %v1104 = vmax.f32 %v1088, %v1099
        %v1105 = vmax.f32 %v1091, %v1100
        %v1106 = vmax.f32 %v1094, %v1101
        %v1107 = vsel %vm1077, %v1084, -inf
        %v1108 = vsel %vm1078, %v1087, -inf
        %v1109 = vsel %vm1079, %v1090, -inf
        %v1110 = vsel %vm1080, %v1093, -inf
        %v1111 = vsel %vm1081, %v1096, -inf
        %v1112 = vmax.f32 %v1102, %v1107
        %v1113 = vmax.f32 %v1103, %v1108
        %v1114 = vmax.f32 %v1104, %v1109
        %v1115 = vmax.f32 %v1105, %v1110
        %v1116 = vmax.f32 %v1106, %v1111
        %s1117 = scalar_lea.vmem %s1035, 15 [#allocation2]
        %v1118 = vld [vmem:[%s1117] sm:$0x1]
        %v1119 = vld [vmem:[%s1117 + $0x1] sm:$0x1]
        %v1120 = vld [vmem:[%s1117 + $0x2] sm:$0x1]
        %v1121 = vld [vmem:[%s1117 + $0x3] sm:$0x1]
        %v1122 = vld [vmem:[%s1117 + $0x4] sm:$0x1]
        %v1123 = vld [vmem:[%s1117 + $0x5] sm:$0x1]
        %v1124 = vld [vmem:[%s1117 + $0x6] sm:$0x1]
        %v1125 = vld [vmem:[%s1117 + $0x7] sm:$0x1]
        %v1126 = vld [vmem:[%s1117 + $0x8] sm:$0x1]
        %v1127 = vld [vmem:[%s1117 + $0x9] sm:$0x1]
        %v1128 = vld [vmem:[%s1117 + $0xa] sm:$0x1]
        %v1129 = vld [vmem:[%s1117 + $0xb] sm:$0x1]
        %v1130 = vld [vmem:[%s1117 + $0xc] sm:$0x1]
        %v1131 = vld [vmem:[%s1117 + $0xd] sm:$0x1]
        %v1132 = vld [vmem:[%s1117 + $0xe] sm:$0x1]
        %s1133 = smul.u32 %s17, 5
        %p1134 = scmp.lt.s32.totalorder %s1133, 5
        %s1135 = scalar_select %p1134, 1, 0
        %v1136 = vstv %s1135
        %vm1137 = vcmp.eq.s32.totalorder %v1136, 1
        %v1138 = vsel %vm1137, %v1118, -inf
        %v1139 = vsel %vm1137, %v1119, -inf
        %v1140 = vsel %vm1137, %v1120, -inf
        %v1141 = vsel %vm1137, %v1121, -inf
        %v1142 = vsel %vm1137, %v1122, -inf
        %v1143 = vsel %vm1137, %v1123, -inf
        %v1144 = vsel %vm1137, %v1124, -inf
        %v1145 = vsel %vm1137, %v1125, -inf
        %v1146 = vsel %vm1137, %v1126, -inf
        %v1147 = vsel %vm1137, %v1127, -inf
        %v1148 = vsel %vm1137, %v1128, -inf
        %v1149 = vsel %vm1137, %v1129, -inf
        %v1150 = vsel %vm1137, %v1130, -inf
        %v1151 = vsel %vm1137, %v1131, -inf
        %v1152 = vsel %vm1137, %v1132, -inf
        %v1153 = vmax.f32 %v1112, %v1138
        %v1154 = vmax.f32 %v1113, %v1141
        %v1155 = vmax.f32 %v1114, %v1144
        %v1156 = vmax.f32 %v1115, %v1147
        %v1157 = vmax.f32 %v1116, %v1150
        %v1158 = vsel %vm1077, %v1139, -inf
        %v1159 = vsel %vm1078, %v1142, -inf
        %v1160 = vsel %vm1079, %v1145, -inf
        %v1161 = vsel %vm1080, %v1148, -inf
        %v1162 = vsel %vm1081, %v1151, -inf
        %v1163 = vmax.f32 %v1153, %v1158
        %v1164 = vmax.f32 %v1154, %v1159
        %v1165 = vmax.f32 %v1155, %v1160
        %v1166 = vmax.f32 %v1156, %v1161
        %v1167 = vmax.f32 %v1157, %v1162
        %v1168 = vsel %vm1077, %v1140, -inf
        %v1169 = vsel %vm1078, %v1143, -inf
        %v1170 = vsel %vm1079, %v1146, -inf
        %v1171 = vsel %vm1080, %v1149, -inf
        %v1172 = vsel %vm1081, %v1152, -inf
        %v1173 = vmax.f32 %v1163, %v1168
        %v1174 = vmax.f32 %v1164, %v1169
        %v1175 = vmax.f32 %v1165, %v1170
        %v1176 = vmax.f32 %v1166, %v1171
        %v1177 = vmax.f32 %v1167, %v1172
        %s1178 = scalar_lea.vmem %s1035, 30 [#allocation2]
        %v1179 = vld [vmem:[%s1178] sm:$0x1]
        %v1180 = vld [vmem:[%s1178 + $0x1] sm:$0x1]
        %v1181 = vld [vmem:[%s1178 + $0x2] sm:$0x1]
        %v1182 = vld [vmem:[%s1178 + $0x3] sm:$0x1]
        %v1183 = vld [vmem:[%s1178 + $0x4] sm:$0x1]
        %v1184 = vld [vmem:[%s1178 + $0x5] sm:$0x1]
        %v1185 = vld [vmem:[%s1178 + $0x6] sm:$0x1]
        %v1186 = vld [vmem:[%s1178 + $0x7] sm:$0x1]
        %v1187 = vld [vmem:[%s1178 + $0x8] sm:$0x1]
        %v1188 = vld [vmem:[%s1178 + $0x9] sm:$0x1]
        %v1189 = vld [vmem:[%s1178 + $0xa] sm:$0x1]
        %v1190 = vld [vmem:[%s1178 + $0xb] sm:$0x1]
        %v1191 = vld [vmem:[%s1178 + $0xc] sm:$0x1]
        %v1192 = vld [vmem:[%s1178 + $0xd] sm:$0x1]
        %v1193 = vld [vmem:[%s1178 + $0xe] sm:$0x1]
        %v1194 = vsel %vm1137, %v1179, -inf
        %v1195 = vsel %vm1137, %v1180, -inf
        %v1196 = vsel %vm1137, %v1181, -inf
        %v1197 = vsel %vm1137, %v1182, -inf
        %v1198 = vsel %vm1137, %v1183, -inf
        %v1199 = vsel %vm1137, %v1184, -inf
        %v1200 = vsel %vm1137, %v1185, -inf
        %v1201 = vsel %vm1137, %v1186, -inf
        %v1202 = vsel %vm1137, %v1187, -inf
        %v1203 = vsel %vm1137, %v1188, -inf
        %v1204 = vsel %vm1137, %v1189, -inf
        %v1205 = vsel %vm1137, %v1190, -inf
        %v1206 = vsel %vm1137, %v1191, -inf
        %v1207 = vsel %vm1137, %v1192, -inf
        %v1208 = vsel %vm1137, %v1193, -inf
        %v1209 = vmax.f32 %v1173, %v1194
        %v1210 = vmax.f32 %v1174, %v1197
        %v1211 = vmax.f32 %v1175, %v1200
        %v1212 = vmax.f32 %v1176, %v1203
        %v1213 = vmax.f32 %v1177, %v1206
        %v1214 = vsel %vm1077, %v1195, -inf
        %v1215 = vsel %vm1078, %v1198, -inf
        %v1216 = vsel %vm1079, %v1201, -inf
        %v1217 = vsel %vm1080, %v1204, -inf
        %v1218 = vsel %vm1081, %v1207, -inf
        %v1219 = vmax.f32 %v1209, %v1214
        %v1220 = vmax.f32 %v1210, %v1215
        %v1221 = vmax.f32 %v1211, %v1216
        %v1222 = vmax.f32 %v1212, %v1217
        %v1223 = vmax.f32 %v1213, %v1218
        %v1224 = vsel %vm1077, %v1196, -inf
        %v1225 = vsel %vm1078, %v1199, -inf
        %v1226 = vsel %vm1079, %v1202, -inf
        %v1227 = vsel %vm1080, %v1205, -inf
        %v1228 = vsel %vm1081, %v1208, -inf
        %v1229 = vmax.f32 %v1219, %v1224
        %v1230 = vmax.f32 %v1220, %v1225
        %v1231 = vmax.f32 %v1221, %v1226
        %v1232 = vmax.f32 %v1222, %v1227
        %v1233 = vmax.f32 %v1223, %v1228
        %1234 = vst [vmem:[%s1050] sm:$0x1] %v1229
        %1235 = vst [vmem:[%s1050 + $0x1] sm:$0x1] %v1230
        %1236 = vst [vmem:[%s1050 + $0x2] sm:$0x1] %v1231
        %1237 = vst [vmem:[%s1050 + $0x3] sm:$0x1] %v1232
        %1238 = vst [vmem:[%s1050 + $0x4] sm:$0x1] %v1233
        %s1239 = scalar_lea.vmem %s1035, 45 [#allocation2]
        %v1240 = vld [vmem:[%s1239] sm:$0x1]
        %v1241 = vld [vmem:[%s1239 + $0x1] sm:$0x1]
        %v1242 = vld [vmem:[%s1239 + $0x2] sm:$0x1]
        %v1243 = vld [vmem:[%s1239 + $0x3] sm:$0x1]
        %v1244 = vld [vmem:[%s1239 + $0x4] sm:$0x1]
        %v1245 = vld [vmem:[%s1239 + $0x5] sm:$0x1]
        %v1246 = vld [vmem:[%s1239 + $0x6] sm:$0x1]
        %v1247 = vld [vmem:[%s1239 + $0x7] sm:$0x1]
        %v1248 = vld [vmem:[%s1239 + $0x8] sm:$0x1]
        %v1249 = vld [vmem:[%s1239 + $0x9] sm:$0x1]
        %v1250 = vld [vmem:[%s1239 + $0xa] sm:$0x1]
        %v1251 = vld [vmem:[%s1239 + $0xb] sm:$0x1]
        %v1252 = vld [vmem:[%s1239 + $0xc] sm:$0x1]
        %v1253 = vld [vmem:[%s1239 + $0xd] sm:$0x1]
        %v1254 = vld [vmem:[%s1239 + $0xe] sm:$0x1]
        %v1255 = vsel %vm1077, %v1241, -inf
        %v1256 = vsel %vm1078, %v1244, -inf
        %v1257 = vsel %vm1079, %v1247, -inf
        %v1258 = vsel %vm1080, %v1250, -inf
        %v1259 = vsel %vm1081, %v1253, -inf
        %v1260 = vmax.f32 %v1240, %v1255
        %v1261 = vmax.f32 %v1243, %v1256
        %v1262 = vmax.f32 %v1246, %v1257
        %v1263 = vmax.f32 %v1249, %v1258
        %v1264 = vmax.f32 %v1252, %v1259
        %v1265 = vsel %vm1077, %v1242, -inf
        %v1266 = vsel %vm1078, %v1245, -inf
        %v1267 = vsel %vm1079, %v1248, -inf
        %v1268 = vsel %vm1080, %v1251, -inf
        %v1269 = vsel %vm1081, %v1254, -inf
        %v1270 = vmax.f32 %v1260, %v1265
        %v1271 = vmax.f32 %v1261, %v1266
        %v1272 = vmax.f32 %v1262, %v1267
        %v1273 = vmax.f32 %v1263, %v1268
        %v1274 = vmax.f32 %v1264, %v1269
        %s1275 = scalar_lea.vmem %s1035, 60 [#allocation2]
        %v1276 = vld [vmem:[%s1275] sm:$0x1]
        %v1277 = vld [vmem:[%s1275 + $0x1] sm:$0x1]
        %v1278 = vld [vmem:[%s1275 + $0x2] sm:$0x1]
        %v1279 = vld [vmem:[%s1275 + $0x3] sm:$0x1]
        %v1280 = vld [vmem:[%s1275 + $0x4] sm:$0x1]
        %v1281 = vld [vmem:[%s1275 + $0x5] sm:$0x1]
        %v1282 = vld [vmem:[%s1275 + $0x6] sm:$0x1]
        %v1283 = vld [vmem:[%s1275 + $0x7] sm:$0x1]
        %v1284 = vld [vmem:[%s1275 + $0x8] sm:$0x1]
        %v1285 = vld [vmem:[%s1275 + $0x9] sm:$0x1]
        %v1286 = vld [vmem:[%s1275 + $0xa] sm:$0x1]
        %v1287 = vld [vmem:[%s1275 + $0xb] sm:$0x1]
        %v1288 = vld [vmem:[%s1275 + $0xc] sm:$0x1]
        %v1289 = vld [vmem:[%s1275 + $0xd] sm:$0x1]
        %v1290 = vld [vmem:[%s1275 + $0xe] sm:$0x1]
        %s1291 = sadd.s32 %s1133, 1
        %p1292 = scmp.lt.s32.totalorder %s1291, 5
        %s1293 = scalar_select %p1292, 1, 0
        %v1294 = vstv %s1293
        %vm1295 = vcmp.eq.s32.totalorder %v1294, 1
        %v1296 = vsel %vm1295, %v1276, -inf
        %v1297 = vsel %vm1295, %v1277, -inf
        %v1298 = vsel %vm1295, %v1278, -inf
        %v1299 = vsel %vm1295, %v1279, -inf
        %v1300 = vsel %vm1295, %v1280, -inf
        %v1301 = vsel %vm1295, %v1281, -inf
        %v1302 = vsel %vm1295, %v1282, -inf
        %v1303 = vsel %vm1295, %v1283, -inf
        %v1304 = vsel %vm1295, %v1284, -inf
        %v1305 = vsel %vm1295, %v1285, -inf
        %v1306 = vsel %vm1295, %v1286, -inf
        %v1307 = vsel %vm1295, %v1287, -inf
        %v1308 = vsel %vm1295, %v1288, -inf
        %v1309 = vsel %vm1295, %v1289, -inf
        %v1310 = vsel %vm1295, %v1290, -inf
        %v1311 = vmax.f32 %v1270, %v1296
        %v1312 = vmax.f32 %v1271, %v1299
        %v1313 = vmax.f32 %v1272, %v1302
        %v1314 = vmax.f32 %v1273, %v1305
        %v1315 = vmax.f32 %v1274, %v1308
        %v1316 = vsel %vm1077, %v1297, -inf
        %v1317 = vsel %vm1078, %v1300, -inf
        %v1318 = vsel %vm1079, %v1303, -inf
        %v1319 = vsel %vm1080, %v1306, -inf
        %v1320 = vsel %vm1081, %v1309, -inf
        %v1321 = vmax.f32 %v1311, %v1316
        %v1322 = vmax.f32 %v1312, %v1317
        %v1323 = vmax.f32 %v1313, %v1318
        %v1324 = vmax.f32 %v1314, %v1319
        %v1325 = vmax.f32 %v1315, %v1320
        %v1326 = vsel %vm1077, %v1298, -inf
        %v1327 = vsel %vm1078, %v1301, -inf
        %v1328 = vsel %vm1079, %v1304, -inf
        %v1329 = vsel %vm1080, %v1307, -inf
        %v1330 = vsel %vm1081, %v1310, -inf
        %v1331 = vmax.f32 %v1321, %v1326
        %v1332 = vmax.f32 %v1322, %v1327
        %v1333 = vmax.f32 %v1323, %v1328
        %v1334 = vmax.f32 %v1324, %v1329
        %v1335 = vmax.f32 %v1325, %v1330
        %s1336 = scalar_lea.vmem %s1035, 75 [#allocation2]
        %v1337 = vld [vmem:[%s1336] sm:$0x1]
        %v1338 = vld [vmem:[%s1336 + $0x1] sm:$0x1]
        %v1339 = vld [vmem:[%s1336 + $0x2] sm:$0x1]
        %v1340 = vld [vmem:[%s1336 + $0x3] sm:$0x1]
        %v1341 = vld [vmem:[%s1336 + $0x4] sm:$0x1]
        %v1342 = vld [vmem:[%s1336 + $0x5] sm:$0x1]
        %v1343 = vld [vmem:[%s1336 + $0x6] sm:$0x1]
        %v1344 = vld [vmem:[%s1336 + $0x7] sm:$0x1]
        %v1345 = vld [vmem:[%s1336 + $0x8] sm:$0x1]
        %v1346 = vld [vmem:[%s1336 + $0x9] sm:$0x1]
        %v1347 = vld [vmem:[%s1336 + $0xa] sm:$0x1]
        %v1348 = vld [vmem:[%s1336 + $0xb] sm:$0x1]
        %v1349 = vld [vmem:[%s1336 + $0xc] sm:$0x1]
        %v1350 = vld [vmem:[%s1336 + $0xd] sm:$0x1]
        %v1351 = vld [vmem:[%s1336 + $0xe] sm:$0x1]
        %v1352 = vsel %vm1295, %v1337, -inf
        %v1353 = vsel %vm1295, %v1338, -inf
        %v1354 = vsel %vm1295, %v1339, -inf
        %v1355 = vsel %vm1295, %v1340, -inf
        %v1356 = vsel %vm1295, %v1341, -inf
        %v1357 = vsel %vm1295, %v1342, -inf
        %v1358 = vsel %vm1295, %v1343, -inf
        %v1359 = vsel %vm1295, %v1344, -inf
        %v1360 = vsel %vm1295, %v1345, -inf
        %v1361 = vsel %vm1295, %v1346, -inf
        %v1362 = vsel %vm1295, %v1347, -inf
        %v1363 = vsel %vm1295, %v1348, -inf
        %v1364 = vsel %vm1295, %v1349, -inf
        %v1365 = vsel %vm1295, %v1350, -inf
        %v1366 = vsel %vm1295, %v1351, -inf
        %v1367 = vmax.f32 %v1331, %v1352
        %v1368 = vmax.f32 %v1332, %v1355
        %v1369 = vmax.f32 %v1333, %v1358
        %v1370 = vmax.f32 %v1334, %v1361
        %v1371 = vmax.f32 %v1335, %v1364
        %v1372 = vsel %vm1077, %v1353, -inf
        %v1373 = vsel %vm1078, %v1356, -inf
        %v1374 = vsel %vm1079, %v1359, -inf
        %v1375 = vsel %vm1080, %v1362, -inf
        %v1376 = vsel %vm1081, %v1365, -inf
        %v1377 = vmax.f32 %v1367, %v1372
        %v1378 = vmax.f32 %v1368, %v1373
        %v1379 = vmax.f32 %v1369, %v1374
        %v1380 = vmax.f32 %v1370, %v1375
        %v1381 = vmax.f32 %v1371, %v1376
        %v1382 = vsel %vm1077, %v1354, -inf
        %v1383 = vsel %vm1078, %v1357, -inf
        %v1384 = vsel %vm1079, %v1360, -inf
        %v1385 = vsel %vm1080, %v1363, -inf
        %v1386 = vsel %vm1081, %v1366, -inf
        %v1387 = vmax.f32 %v1377, %v1382
        %v1388 = vmax.f32 %v1378, %v1383
        %v1389 = vmax.f32 %v1379, %v1384
        %v1390 = vmax.f32 %v1380, %v1385
        %v1391 = vmax.f32 %v1381, %v1386
        %s1392 = scalar_lea.vmem %s1050, 5 [#allocation3]
        %1393 = vst [vmem:[%s1392] sm:$0x1] %v1387
        %1394 = vst [vmem:[%s1392 + $0x1] sm:$0x1] %v1388
        %1395 = vst [vmem:[%s1392 + $0x2] sm:$0x1] %v1389
        %1396 = vst [vmem:[%s1392 + $0x3] sm:$0x1] %v1390
        %1397 = vst [vmem:[%s1392 + $0x4] sm:$0x1] %v1391
        %s1398 = scalar_lea.vmem %s1035, 90 [#allocation2]
        %v1399 = vld [vmem:[%s1398] sm:$0x1]
        %v1400 = vld [vmem:[%s1398 + $0x1] sm:$0x1]
        %v1401 = vld [vmem:[%s1398 + $0x2] sm:$0x1]
        %v1402 = vld [vmem:[%s1398 + $0x3] sm:$0x1]
        %v1403 = vld [vmem:[%s1398 + $0x4] sm:$0x1]
        %v1404 = vld [vmem:[%s1398 + $0x5] sm:$0x1]
        %v1405 = vld [vmem:[%s1398 + $0x6] sm:$0x1]
        %v1406 = vld [vmem:[%s1398 + $0x7] sm:$0x1]
        %v1407 = vld [vmem:[%s1398 + $0x8] sm:$0x1]
        %v1408 = vld [vmem:[%s1398 + $0x9] sm:$0x1]
        %v1409 = vld [vmem:[%s1398 + $0xa] sm:$0x1]
        %v1410 = vld [vmem:[%s1398 + $0xb] sm:$0x1]
        %v1411 = vld [vmem:[%s1398 + $0xc] sm:$0x1]
        %v1412 = vld [vmem:[%s1398 + $0xd] sm:$0x1]
        %v1413 = vld [vmem:[%s1398 + $0xe] sm:$0x1]
        %v1414 = vsel %vm1077, %v1400, -inf
        %v1415 = vsel %vm1078, %v1403, -inf
        %v1416 = vsel %vm1079, %v1406, -inf
        %v1417 = vsel %vm1080, %v1409, -inf
        %v1418 = vsel %vm1081, %v1412, -inf
        %v1419 = vmax.f32 %v1399, %v1414
        %v1420 = vmax.f32 %v1402, %v1415
        %v1421 = vmax.f32 %v1405, %v1416
        %v1422 = vmax.f32 %v1408, %v1417
        %v1423 = vmax.f32 %v1411, %v1418
        %v1424 = vsel %vm1077, %v1401, -inf
        %v1425 = vsel %vm1078, %v1404, -inf
        %v1426 = vsel %vm1079, %v1407, -inf
        %v1427 = vsel %vm1080, %v1410, -inf
        %v1428 = vsel %vm1081, %v1413, -inf
        %v1429 = vmax.f32 %v1419, %v1424
        %v1430 = vmax.f32 %v1420, %v1425
        %v1431 = vmax.f32 %v1421, %v1426
        %v1432 = vmax.f32 %v1422, %v1427
        %v1433 = vmax.f32 %v1423, %v1428
        %s1434 = scalar_lea.vmem %s1035, 105 [#allocation2]
        %v1435 = vld [vmem:[%s1434] sm:$0x1]
        %v1436 = vld [vmem:[%s1434 + $0x1] sm:$0x1]
        %v1437 = vld [vmem:[%s1434 + $0x2] sm:$0x1]
        %v1438 = vld [vmem:[%s1434 + $0x3] sm:$0x1]
        %v1439 = vld [vmem:[%s1434 + $0x4] sm:$0x1]
        %v1440 = vld [vmem:[%s1434 + $0x5] sm:$0x1]
        %v1441 = vld [vmem:[%s1434 + $0x6] sm:$0x1]
        %v1442 = vld [vmem:[%s1434 + $0x7] sm:$0x1]
        %v1443 = vld [vmem:[%s1434 + $0x8] sm:$0x1]
        %v1444 = vld [vmem:[%s1434 + $0x9] sm:$0x1]
        %v1445 = vld [vmem:[%s1434 + $0xa] sm:$0x1]
        %v1446 = vld [vmem:[%s1434 + $0xb] sm:$0x1]
        %v1447 = vld [vmem:[%s1434 + $0xc] sm:$0x1]
        %v1448 = vld [vmem:[%s1434 + $0xd] sm:$0x1]
        %v1449 = vld [vmem:[%s1434 + $0xe] sm:$0x1]
        %s1450 = sadd.s32 %s1133, 2
        %p1451 = scmp.lt.s32.totalorder %s1450, 5
        %s1452 = scalar_select %p1451, 1, 0
        %v1453 = vstv %s1452
        %vm1454 = vcmp.eq.s32.totalorder %v1453, 1
        %v1455 = vsel %vm1454, %v1435, -inf
        %v1456 = vsel %vm1454, %v1436, -inf
        %v1457 = vsel %vm1454, %v1437, -inf
        %v1458 = vsel %vm1454, %v1438, -inf
        %v1459 = vsel %vm1454, %v1439, -inf
        %v1460 = vsel %vm1454, %v1440, -inf
        %v1461 = vsel %vm1454, %v1441, -inf
        %v1462 = vsel %vm1454, %v1442, -inf
        %v1463 = vsel %vm1454, %v1443, -inf
        %v1464 = vsel %vm1454, %v1444, -inf
        %v1465 = vsel %vm1454, %v1445, -inf
        %v1466 = vsel %vm1454, %v1446, -inf
        %v1467 = vsel %vm1454, %v1447, -inf
        %v1468 = vsel %vm1454, %v1448, -inf
        %v1469 = vsel %vm1454, %v1449, -inf
        %v1470 = vmax.f32 %v1429, %v1455
        %v1471 = vmax.f32 %v1430, %v1458
        %v1472 = vmax.f32 %v1431, %v1461
        %v1473 = vmax.f32 %v1432, %v1464
        %v1474 = vmax.f32 %v1433, %v1467
        %v1475 = vsel %vm1077, %v1456, -inf
        %v1476 = vsel %vm1078, %v1459, -inf
        %v1477 = vsel %vm1079, %v1462, -inf
        %v1478 = vsel %vm1080, %v1465, -inf
        %v1479 = vsel %vm1081, %v1468, -inf
        %v1480 = vmax.f32 %v1470, %v1475
        %v1481 = vmax.f32 %v1471, %v1476
        %v1482 = vmax.f32 %v1472, %v1477
        %v1483 = vmax.f32 %v1473, %v1478
        %v1484 = vmax.f32 %v1474, %v1479
        %v1485 = vsel %vm1077, %v1457, -inf
        %v1486 = vsel %vm1078, %v1460, -inf
        %v1487 = vsel %vm1079, %v1463, -inf
        %v1488 = vsel %vm1080, %v1466, -inf
        %v1489 = vsel %vm1081, %v1469, -inf
        %v1490 = vmax.f32 %v1480, %v1485
        %v1491 = vmax.f32 %v1481, %v1486
        %v1492 = vmax.f32 %v1482, %v1487
        %v1493 = vmax.f32 %v1483, %v1488
        %v1494 = vmax.f32 %v1484, %v1489
        %s1495 = scalar_lea.vmem %s1035, 120 [#allocation2]
        %v1496 = vld [vmem:[%s1495] sm:$0x1]
        %v1497 = vld [vmem:[%s1495 + $0x1] sm:$0x1]
        %v1498 = vld [vmem:[%s1495 + $0x2] sm:$0x1]
        %v1499 = vld [vmem:[%s1495 + $0x3] sm:$0x1]
        %v1500 = vld [vmem:[%s1495 + $0x4] sm:$0x1]
        %v1501 = vld [vmem:[%s1495 + $0x5] sm:$0x1]
        %v1502 = vld [vmem:[%s1495 + $0x6] sm:$0x1]
        %v1503 = vld [vmem:[%s1495 + $0x7] sm:$0x1]
        %v1504 = vld [vmem:[%s1495 + $0x8] sm:$0x1]
        %v1505 = vld [vmem:[%s1495 + $0x9] sm:$0x1]
        %v1506 = vld [vmem:[%s1495 + $0xa] sm:$0x1]
        %v1507 = vld [vmem:[%s1495 + $0xb] sm:$0x1]
        %v1508 = vld [vmem:[%s1495 + $0xc] sm:$0x1]
        %v1509 = vld [vmem:[%s1495 + $0xd] sm:$0x1]
        %v1510 = vld [vmem:[%s1495 + $0xe] sm:$0x1]
        %v1511 = vsel %vm1454, %v1496, -inf
        %v1512 = vsel %vm1454, %v1497, -inf
        %v1513 = vsel %vm1454, %v1498, -inf
        %v1514 = vsel %vm1454, %v1499, -inf
        %v1515 = vsel %vm1454, %v1500, -inf
        %v1516 = vsel %vm1454, %v1501, -inf
        %v1517 = vsel %vm1454, %v1502, -inf
        %v1518 = vsel %vm1454, %v1503, -inf
        %v1519 = vsel %vm1454, %v1504, -inf
        %v1520 = vsel %vm1454, %v1505, -inf
        %v1521 = vsel %vm1454, %v1506, -inf
        %v1522 = vsel %vm1454, %v1507, -inf
        %v1523 = vsel %vm1454, %v1508, -inf
        %v1524 = vsel %vm1454, %v1509, -inf
        %v1525 = vsel %vm1454, %v1510, -inf
        %v1526 = vmax.f32 %v1490, %v1511
        %v1527 = vmax.f32 %v1491, %v1514
        %v1528 = vmax.f32 %v1492, %v1517
        %v1529 = vmax.f32 %v1493, %v1520
        %v1530 = vmax.f32 %v1494, %v1523
        %v1531 = vsel %vm1077, %v1512, -inf
        %v1532 = vsel %vm1078, %v1515, -inf
        %v1533 = vsel %vm1079, %v1518, -inf
        %v1534 = vsel %vm1080, %v1521, -inf
        %v1535 = vsel %vm1081, %v1524, -inf
        %v1536 = vmax.f32 %v1526, %v1531
        %v1537 = vmax.f32 %v1527, %v1532
        %v1538 = vmax.f32 %v1528, %v1533
        %v1539 = vmax.f32 %v1529, %v1534
        %v1540 = vmax.f32 %v1530, %v1535
        %v1541 = vsel %vm1077, %v1513, -inf
        %v1542 = vsel %vm1078, %v1516, -inf
        %v1543 = vsel %vm1079, %v1519, -inf
        %v1544 = vsel %vm1080, %v1522, -inf
        %v1545 = vsel %vm1081, %v1525, -inf
        %v1546 = vmax.f32 %v1536, %v1541
        %v1547 = vmax.f32 %v1537, %v1542
        %v1548 = vmax.f32 %v1538, %v1543
        %v1549 = vmax.f32 %v1539, %v1544
        %v1550 = vmax.f32 %v1540, %v1545
        %s1551 = scalar_lea.vmem %s1050, 10 [#allocation3]
        %1552 = vst [vmem:[%s1551] sm:$0x1] %v1546
        %1553 = vst [vmem:[%s1551 + $0x1] sm:$0x1] %v1547
        %1554 = vst [vmem:[%s1551 + $0x2] sm:$0x1] %v1548
        %1555 = vst [vmem:[%s1551 + $0x3] sm:$0x1] %v1549
        %1556 = vst [vmem:[%s1551 + $0x4] sm:$0x1] %v1550
        %s1557 = scalar_lea.vmem %s1035, 135 [#allocation2]
        %v1558 = vld [vmem:[%s1557] sm:$0x1]
        %v1559 = vld [vmem:[%s1557 + $0x1] sm:$0x1]
        %v1560 = vld [vmem:[%s1557 + $0x2] sm:$0x1]
        %v1561 = vld [vmem:[%s1557 + $0x3] sm:$0x1]
        %v1562 = vld [vmem:[%s1557 + $0x4] sm:$0x1]
        %v1563 = vld [vmem:[%s1557 + $0x5] sm:$0x1]
        %v1564 = vld [vmem:[%s1557 + $0x6] sm:$0x1]
        %v1565 = vld [vmem:[%s1557 + $0x7] sm:$0x1]
        %v1566 = vld [vmem:[%s1557 + $0x8] sm:$0x1]
        %v1567 = vld [vmem:[%s1557 + $0x9] sm:$0x1]
        %v1568 = vld [vmem:[%s1557 + $0xa] sm:$0x1]
        %v1569 = vld [vmem:[%s1557 + $0xb] sm:$0x1]
        %v1570 = vld [vmem:[%s1557 + $0xc] sm:$0x1]
        %v1571 = vld [vmem:[%s1557 + $0xd] sm:$0x1]
        %v1572 = vld [vmem:[%s1557 + $0xe] sm:$0x1]
        %v1573 = vsel %vm1077, %v1559, -inf
        %v1574 = vsel %vm1078, %v1562, -inf
        %v1575 = vsel %vm1079, %v1565, -inf
        %v1576 = vsel %vm1080, %v1568, -inf
        %v1577 = vsel %vm1081, %v1571, -inf
        %v1578 = vmax.f32 %v1558, %v1573
        %v1579 = vmax.f32 %v1561, %v1574
        %v1580 = vmax.f32 %v1564, %v1575
        %v1581 = vmax.f32 %v1567, %v1576
        %v1582 = vmax.f32 %v1570, %v1577
        %v1583 = vsel %vm1077, %v1560, -inf
        %v1584 = vsel %vm1078, %v1563, -inf
        %v1585 = vsel %vm1079, %v1566, -inf
        %v1586 = vsel %vm1080, %v1569, -inf
        %v1587 = vsel %vm1081, %v1572, -inf
        %v1588 = vmax.f32 %v1578, %v1583
        %v1589 = vmax.f32 %v1579, %v1584
        %v1590 = vmax.f32 %v1580, %v1585
        %v1591 = vmax.f32 %v1581, %v1586
        %v1592 = vmax.f32 %v1582, %v1587
        %s1593 = scalar_lea.vmem %s1035, 150 [#allocation2]
        %v1594 = vld [vmem:[%s1593] sm:$0x1]
        %v1595 = vld [vmem:[%s1593 + $0x1] sm:$0x1]
        %v1596 = vld [vmem:[%s1593 + $0x2] sm:$0x1]
        %v1597 = vld [vmem:[%s1593 + $0x3] sm:$0x1]
        %v1598 = vld [vmem:[%s1593 + $0x4] sm:$0x1]
        %v1599 = vld [vmem:[%s1593 + $0x5] sm:$0x1]
        %v1600 = vld [vmem:[%s1593 + $0x6] sm:$0x1]
        %v1601 = vld [vmem:[%s1593 + $0x7] sm:$0x1]
        %v1602 = vld [vmem:[%s1593 + $0x8] sm:$0x1]
        %v1603 = vld [vmem:[%s1593 + $0x9] sm:$0x1]
        %v1604 = vld [vmem:[%s1593 + $0xa] sm:$0x1]
        %v1605 = vld [vmem:[%s1593 + $0xb] sm:$0x1]
        %v1606 = vld [vmem:[%s1593 + $0xc] sm:$0x1]
        %v1607 = vld [vmem:[%s1593 + $0xd] sm:$0x1]
        %v1608 = vld [vmem:[%s1593 + $0xe] sm:$0x1]
        %s1609 = sadd.s32 %s1133, 3
        %p1610 = scmp.lt.s32.totalorder %s1609, 5
        %s1611 = scalar_select %p1610, 1, 0
        %v1612 = vstv %s1611
        %vm1613 = vcmp.eq.s32.totalorder %v1612, 1
        %v1614 = vsel %vm1613, %v1594, -inf
        %v1615 = vsel %vm1613, %v1595, -inf
        %v1616 = vsel %vm1613, %v1596, -inf
        %v1617 = vsel %vm1613, %v1597, -inf
        %v1618 = vsel %vm1613, %v1598, -inf
        %v1619 = vsel %vm1613, %v1599, -inf
        %v1620 = vsel %vm1613, %v1600, -inf
        %v1621 = vsel %vm1613, %v1601, -inf
        %v1622 = vsel %vm1613, %v1602, -inf
        %v1623 = vsel %vm1613, %v1603, -inf
        %v1624 = vsel %vm1613, %v1604, -inf
        %v1625 = vsel %vm1613, %v1605, -inf
        %v1626 = vsel %vm1613, %v1606, -inf
        %v1627 = vsel %vm1613, %v1607, -inf
        %v1628 = vsel %vm1613, %v1608, -inf
        %v1629 = vmax.f32 %v1588, %v1614
        %v1630 = vmax.f32 %v1589, %v1617
        %v1631 = vmax.f32 %v1590, %v1620
        %v1632 = vmax.f32 %v1591, %v1623
        %v1633 = vmax.f32 %v1592, %v1626
        %v1634 = vsel %vm1077, %v1615, -inf
        %v1635 = vsel %vm1078, %v1618, -inf
        %v1636 = vsel %vm1079, %v1621, -inf
        %v1637 = vsel %vm1080, %v1624, -inf
        %v1638 = vsel %vm1081, %v1627, -inf
        %v1639 = vmax.f32 %v1629, %v1634
        %v1640 = vmax.f32 %v1630, %v1635
        %v1641 = vmax.f32 %v1631, %v1636
        %v1642 = vmax.f32 %v1632, %v1637
        %v1643 = vmax.f32 %v1633, %v1638
        %v1644 = vsel %vm1077, %v1616, -inf
        %v1645 = vsel %vm1078, %v1619, -inf
        %v1646 = vsel %vm1079, %v1622, -inf
        %v1647 = vsel %vm1080, %v1625, -inf
        %v1648 = vsel %vm1081, %v1628, -inf
        %v1649 = vmax.f32 %v1639, %v1644
        %v1650 = vmax.f32 %v1640, %v1645
        %v1651 = vmax.f32 %v1641, %v1646
        %v1652 = vmax.f32 %v1642, %v1647
        %v1653 = vmax.f32 %v1643, %v1648
        %s1654 = scalar_lea.vmem %s1035, 165 [#allocation2]
        %v1655 = vld [vmem:[%s1654] sm:$0x1]
        %v1656 = vld [vmem:[%s1654 + $0x1] sm:$0x1]
        %v1657 = vld [vmem:[%s1654 + $0x2] sm:$0x1]
        %v1658 = vld [vmem:[%s1654 + $0x3] sm:$0x1]
        %v1659 = vld [vmem:[%s1654 + $0x4] sm:$0x1]
        %v1660 = vld [vmem:[%s1654 + $0x5] sm:$0x1]
        %v1661 = vld [vmem:[%s1654 + $0x6] sm:$0x1]
        %v1662 = vld [vmem:[%s1654 + $0x7] sm:$0x1]
        %v1663 = vld [vmem:[%s1654 + $0x8] sm:$0x1]
        %v1664 = vld [vmem:[%s1654 + $0x9] sm:$0x1]
        %v1665 = vld [vmem:[%s1654 + $0xa] sm:$0x1]
        %v1666 = vld [vmem:[%s1654 + $0xb] sm:$0x1]
        %v1667 = vld [vmem:[%s1654 + $0xc] sm:$0x1]
        %v1668 = vld [vmem:[%s1654 + $0xd] sm:$0x1]
        %v1669 = vld [vmem:[%s1654 + $0xe] sm:$0x1]
        %v1670 = vsel %vm1613, %v1655, -inf
        %v1671 = vsel %vm1613, %v1656, -inf
        %v1672 = vsel %vm1613, %v1657, -inf
        %v1673 = vsel %vm1613, %v1658, -inf
        %v1674 = vsel %vm1613, %v1659, -inf
        %v1675 = vsel %vm1613, %v1660, -inf
        %v1676 = vsel %vm1613, %v1661, -inf
        %v1677 = vsel %vm1613, %v1662, -inf
        %v1678 = vsel %vm1613, %v1663, -inf
        %v1679 = vsel %vm1613, %v1664, -inf
        %v1680 = vsel %vm1613, %v1665, -inf
        %v1681 = vsel %vm1613, %v1666, -inf
        %v1682 = vsel %vm1613, %v1667, -inf
        %v1683 = vsel %vm1613, %v1668, -inf
        %v1684 = vsel %vm1613, %v1669, -inf
        %v1685 = vmax.f32 %v1649, %v1670
        %v1686 = vmax.f32 %v1650, %v1673
        %v1687 = vmax.f32 %v1651, %v1676
        %v1688 = vmax.f32 %v1652, %v1679
        %v1689 = vmax.f32 %v1653, %v1682
        %v1690 = vsel %vm1077, %v1671, -inf
        %v1691 = vsel %vm1078, %v1674, -inf
        %v1692 = vsel %vm1079, %v1677, -inf
        %v1693 = vsel %vm1080, %v1680, -inf
        %v1694 = vsel %vm1081, %v1683, -inf
        %v1695 = vmax.f32 %v1685, %v1690
        %v1696 = vmax.f32 %v1686, %v1691
        %v1697 = vmax.f32 %v1687, %v1692
        %v1698 = vmax.f32 %v1688, %v1693
        %v1699 = vmax.f32 %v1689, %v1694
        %v1700 = vsel %vm1077, %v1672, -inf
        %v1701 = vsel %vm1078, %v1675, -inf
        %v1702 = vsel %vm1079, %v1678, -inf
        %v1703 = vsel %vm1080, %v1681, -inf
        %v1704 = vsel %vm1081, %v1684, -inf
        %v1705 = vmax.f32 %v1695, %v1700
        %v1706 = vmax.f32 %v1696, %v1701
        %v1707 = vmax.f32 %v1697, %v1702
        %v1708 = vmax.f32 %v1698, %v1703
        %v1709 = vmax.f32 %v1699, %v1704
        %s1710 = scalar_lea.vmem %s1050, 15 [#allocation3]
        %1711 = vst [vmem:[%s1710] sm:$0x1] %v1705
        %1712 = vst [vmem:[%s1710 + $0x1] sm:$0x1] %v1706
        %1713 = vst [vmem:[%s1710 + $0x2] sm:$0x1] %v1707
        %1714 = vst [vmem:[%s1710 + $0x3] sm:$0x1] %v1708
        %1715 = vst [vmem:[%s1710 + $0x4] sm:$0x1] %v1709
        %s1716 = scalar_lea.vmem %s1035, 180 [#allocation2]
        %v1717 = vld [vmem:[%s1716] sm:$0x1]
        %v1718 = vld [vmem:[%s1716 + $0x1] sm:$0x1]
        %v1719 = vld [vmem:[%s1716 + $0x2] sm:$0x1]
        %v1720 = vld [vmem:[%s1716 + $0x3] sm:$0x1]
        %v1721 = vld [vmem:[%s1716 + $0x4] sm:$0x1]
        %v1722 = vld [vmem:[%s1716 + $0x5] sm:$0x1]
        %v1723 = vld [vmem:[%s1716 + $0x6] sm:$0x1]
        %v1724 = vld [vmem:[%s1716 + $0x7] sm:$0x1]
        %v1725 = vld [vmem:[%s1716 + $0x8] sm:$0x1]
        %v1726 = vld [vmem:[%s1716 + $0x9] sm:$0x1]
        %v1727 = vld [vmem:[%s1716 + $0xa] sm:$0x1]
        %v1728 = vld [vmem:[%s1716 + $0xb] sm:$0x1]
        %v1729 = vld [vmem:[%s1716 + $0xc] sm:$0x1]
        %v1730 = vld [vmem:[%s1716 + $0xd] sm:$0x1]
        %v1731 = vld [vmem:[%s1716 + $0xe] sm:$0x1]
        %v1732 = vsel %vm1077, %v1718, -inf
        %v1733 = vsel %vm1078, %v1721, -inf
        %v1734 = vsel %vm1079, %v1724, -inf
        %v1735 = vsel %vm1080, %v1727, -inf
        %v1736 = vsel %vm1081, %v1730, -inf
        %v1737 = vmax.f32 %v1717, %v1732
        %v1738 = vmax.f32 %v1720, %v1733
        %v1739 = vmax.f32 %v1723, %v1734
        %v1740 = vmax.f32 %v1726, %v1735
        %v1741 = vmax.f32 %v1729, %v1736
        %v1742 = vsel %vm1077, %v1719, -inf
        %v1743 = vsel %vm1078, %v1722, -inf
        %v1744 = vsel %vm1079, %v1725, -inf
        %v1745 = vsel %vm1080, %v1728, -inf
        %v1746 = vsel %vm1081, %v1731, -inf
        %v1747 = vmax.f32 %v1737, %v1742
        %v1748 = vmax.f32 %v1738, %v1743
        %v1749 = vmax.f32 %v1739, %v1744
        %v1750 = vmax.f32 %v1740, %v1745
        %v1751 = vmax.f32 %v1741, %v1746
        %s1752 = scalar_lea.vmem %s1035, 195 [#allocation2]
        %v1753 = vld [vmem:[%s1752] sm:$0x1]
        %v1754 = vld [vmem:[%s1752 + $0x1] sm:$0x1]
        %v1755 = vld [vmem:[%s1752 + $0x2] sm:$0x1]
        %v1756 = vld [vmem:[%s1752 + $0x3] sm:$0x1]
        %v1757 = vld [vmem:[%s1752 + $0x4] sm:$0x1]
        %v1758 = vld [vmem:[%s1752 + $0x5] sm:$0x1]
        %v1759 = vld [vmem:[%s1752 + $0x6] sm:$0x1]
        %v1760 = vld [vmem:[%s1752 + $0x7] sm:$0x1]
        %v1761 = vld [vmem:[%s1752 + $0x8] sm:$0x1]
        %v1762 = vld [vmem:[%s1752 + $0x9] sm:$0x1]
        %v1763 = vld [vmem:[%s1752 + $0xa] sm:$0x1]
        %v1764 = vld [vmem:[%s1752 + $0xb] sm:$0x1]
        %v1765 = vld [vmem:[%s1752 + $0xc] sm:$0x1]
        %v1766 = vld [vmem:[%s1752 + $0xd] sm:$0x1]
        %v1767 = vld [vmem:[%s1752 + $0xe] sm:$0x1]
        %s1768 = sadd.s32 %s1133, 4
        %p1769 = scmp.lt.s32.totalorder %s1768, 5
        %s1770 = scalar_select %p1769, 1, 0
        %v1771 = vstv %s1770
        %vm1772 = vcmp.eq.s32.totalorder %v1771, 1
        %v1773 = vsel %vm1772, %v1753, -inf
        %v1774 = vsel %vm1772, %v1754, -inf
        %v1775 = vsel %vm1772, %v1755, -inf
        %v1776 = vsel %vm1772, %v1756, -inf
        %v1777 = vsel %vm1772, %v1757, -inf
        %v1778 = vsel %vm1772, %v1758, -inf
        %v1779 = vsel %vm1772, %v1759, -inf
        %v1780 = vsel %vm1772, %v1760, -inf
        %v1781 = vsel %vm1772, %v1761, -inf
        %v1782 = vsel %vm1772, %v1762, -inf
        %v1783 = vsel %vm1772, %v1763, -inf
        %v1784 = vsel %vm1772, %v1764, -inf
        %v1785 = vsel %vm1772, %v1765, -inf
        %v1786 = vsel %vm1772, %v1766, -inf
        %v1787 = vsel %vm1772, %v1767, -inf
        %v1788 = vmax.f32 %v1747, %v1773
        %v1789 = vmax.f32 %v1748, %v1776
        %v1790 = vmax.f32 %v1749, %v1779
        %v1791 = vmax.f32 %v1750, %v1782
        %v1792 = vmax.f32 %v1751, %v1785
        %v1793 = vsel %vm1077, %v1774, -inf
        %v1794 = vsel %vm1078, %v1777, -inf
        %v1795 = vsel %vm1079, %v1780, -inf
        %v1796 = vsel %vm1080, %v1783, -inf
        %v1797 = vsel %vm1081, %v1786, -inf
        %v1798 = vmax.f32 %v1788, %v1793
        %v1799 = vmax.f32 %v1789, %v1794
        %v1800 = vmax.f32 %v1790, %v1795
        %v1801 = vmax.f32 %v1791, %v1796
        %v1802 = vmax.f32 %v1792, %v1797
        %v1803 = vsel %vm1077, %v1775, -inf
        %v1804 = vsel %vm1078, %v1778, -inf
        %v1805 = vsel %vm1079, %v1781, -inf
        %v1806 = vsel %vm1080, %v1784, -inf
        %v1807 = vsel %vm1081, %v1787, -inf
        %v1808 = vmax.f32 %v1798, %v1803
        %v1809 = vmax.f32 %v1799, %v1804
        %v1810 = vmax.f32 %v1800, %v1805
        %v1811 = vmax.f32 %v1801, %v1806
        %v1812 = vmax.f32 %v1802, %v1807
        %s1813 = scalar_lea.vmem %s1035, 210 [#allocation2]
        %v1814 = vld [vmem:[%s1813] sm:$0x1]
        %v1815 = vld [vmem:[%s1813 + $0x1] sm:$0x1]
        %v1816 = vld [vmem:[%s1813 + $0x2] sm:$0x1]
        %v1817 = vld [vmem:[%s1813 + $0x3] sm:$0x1]
        %v1818 = vld [vmem:[%s1813 + $0x4] sm:$0x1]
        %v1819 = vld [vmem:[%s1813 + $0x5] sm:$0x1]
        %v1820 = vld [vmem:[%s1813 + $0x6] sm:$0x1]
        %v1821 = vld [vmem:[%s1813 + $0x7] sm:$0x1]
        %v1822 = vld [vmem:[%s1813 + $0x8] sm:$0x1]
        %v1823 = vld [vmem:[%s1813 + $0x9] sm:$0x1]
        %v1824 = vld [vmem:[%s1813 + $0xa] sm:$0x1]
        %v1825 = vld [vmem:[%s1813 + $0xb] sm:$0x1]
        %v1826 = vld [vmem:[%s1813 + $0xc] sm:$0x1]
        %v1827 = vld [vmem:[%s1813 + $0xd] sm:$0x1]
        %v1828 = vld [vmem:[%s1813 + $0xe] sm:$0x1]
        %v1829 = vsel %vm1772, %v1814, -inf
        %v1830 = vsel %vm1772, %v1815, -inf
        %v1831 = vsel %vm1772, %v1816, -inf
        %v1832 = vsel %vm1772, %v1817, -inf
        %v1833 = vsel %vm1772, %v1818, -inf
        %v1834 = vsel %vm1772, %v1819, -inf
        %v1835 = vsel %vm1772, %v1820, -inf
        %v1836 = vsel %vm1772, %v1821, -inf
        %v1837 = vsel %vm1772, %v1822, -inf
        %v1838 = vsel %vm1772, %v1823, -inf
        %v1839 = vsel %vm1772, %v1824, -inf
        %v1840 = vsel %vm1772, %v1825, -inf
        %v1841 = vsel %vm1772, %v1826, -inf
        %v1842 = vsel %vm1772, %v1827, -inf
        %v1843 = vsel %vm1772, %v1828, -inf
        %v1844 = vmax.f32 %v1808, %v1829
        %v1845 = vmax.f32 %v1809, %v1832
        %v1846 = vmax.f32 %v1810, %v1835
        %v1847 = vmax.f32 %v1811, %v1838
        %v1848 = vmax.f32 %v1812, %v1841
        %v1849 = vsel %vm1077, %v1830, -inf
        %v1850 = vsel %vm1078, %v1833, -inf
        %v1851 = vsel %vm1079, %v1836, -inf
        %v1852 = vsel %vm1080, %v1839, -inf
        %v1853 = vsel %vm1081, %v1842, -inf
        %v1854 = vmax.f32 %v1844, %v1849
        %v1855 = vmax.f32 %v1845, %v1850
        %v1856 = vmax.f32 %v1846, %v1851
        %v1857 = vmax.f32 %v1847, %v1852
        %v1858 = vmax.f32 %v1848, %v1853
        %v1859 = vsel %vm1077, %v1831, -inf
        %v1860 = vsel %vm1078, %v1834, -inf
        %v1861 = vsel %vm1079, %v1837, -inf
        %v1862 = vsel %vm1080, %v1840, -inf
        %v1863 = vsel %vm1081, %v1843, -inf
        %v1864 = vmax.f32 %v1854, %v1859
        %v1865 = vmax.f32 %v1855, %v1860
        %v1866 = vmax.f32 %v1856, %v1861
        %v1867 = vmax.f32 %v1857, %v1862
        %v1868 = vmax.f32 %v1858, %v1863
        %s1869 = scalar_lea.vmem %s1050, 20 [#allocation3]
        %1870 = vst [vmem:[%s1869] sm:$0x1] %v1864
        %1871 = vst [vmem:[%s1869 + $0x1] sm:$0x1] %v1865
        %1872 = vst [vmem:[%s1869 + $0x2] sm:$0x1] %v1866
        %1873 = vst [vmem:[%s1869 + $0x3] sm:$0x1] %v1867
        %1874 = vst [vmem:[%s1869 + $0x4] sm:$0x1] %v1868
        %s1875 = sand.u32 %s73, 1
        %s1876 = sand.u32 %s73, 1
        %s1877 = smul.addr %s1876, 25
        %s1878 = scalar_lea.vmem [#allocation3], %s1877
        // Predicated region
        $region119: #{_lambda_.1} parent=113 // pred_check
          %p1879 = pneg %p83
        $region120: #{_lambda_.1} parent=113 // pred_check_branch
          %1881 = sbr.rel (%p1879) target = $region122
        $region121: #{_lambda_.1} parent=113 // pred_region
          %s1882 = smul.u32 5, %s17
          %s1883 = smul.u32 5, %s18
          %s1884 = ssub.s32 6, %s1882
          %p1885 = scmp.lt.s32.totalorder %s1884, 5
          %s1886 = scalar_select %p1885, %s1884, 5
          %s1887 = smul.u32 16, %s1886
          %s1888 = ssub.s32 6, %s1883
          %p1889 = scmp.lt.s32.totalorder %s1888, 5
          %s1890 = scalar_select %p1889, %s1888, 5
          %s1891 = smul.u32 %s1887, %s1890
          %p1892 = scmp.ne.s32.totalorder 0, %s1891
          %s1893 = sadd.s32 %s19, %s1883
          %s1894 = smul.addr %s1882, 6
          %s1895 = sadd.s32 %s1893, %s1894
          %s1896 = scalar_lea.vmem %s1, %s1895
          // Predicated region
          $region123: #{_lambda_.1} parent=121 // pred_check
            %p1897 = pneg %p1892
          $region124: #{_lambda_.1} parent=121 // pred_check_branch
            %1899 = sbr.rel (%p1897) target = $region126
          $region125: #{_lambda_.1} parent=121 // pred_region
            %p1900 = scmp.lt.u32.totalorder %s1890, 8
            %p1901 = pneg %p1900
            // Predicated region
            $region127: #{_lambda_.1} parent=125 // pred_check
              _
            $region128: #{_lambda_.1} parent=125 // pred_check_branch
              %1903 = sbr.rel (%p1900) target = $region130
            $region129: #{_lambda_.1} parent=125 // pred_region
              %s1961 = sand.u32 %s1890, 7
              %p1962 = scmp.eq.s32.totalorder %s1961, 0
              // Predicated region
              $region149: #{_lambda_.1} parent=129 // pred_check
                %p1963 = pneg %p1962
              $region150: #{_lambda_.1} parent=129 // pred_check_branch
                %1965 = sbr.rel (%p1963) target = $region152
              $region151: #{_lambda_.1} parent=129 // pred_region
                %s1966 = sshrl.u32 %s1890, 3
                %s1967 = sdiv.u32.pop %s1886, 5
                %s1968 = srem.u32.pop %s1886, 5
                %s1969 = sshrl.u32 %s1966, 4
                %s1970 = smul.u32 %s1967, %s1969
                // While loop
                $region153: #{_lambda_.1} parent=151 // loop_pre_header
                  _
                $region154: #{_lambda_.1} parent=151 // loop_header
                  %s1974 = sphi 0, %s1976
                  %p1975 = scmp.ge.s32.totalorder %s1974, %s1970
                  %s1979 = sphi 0, %s2149
                  %s1980 = sphi 0, %s2145
                  %s1981 = sphi %s1878, %s2156
                  %s1982 = sphi %s1896, %s2157
                $region155: #{_lambda_.1} parent=151 // loop_header_branch
                  %1978 = sbr.rel (%p1975) target = $region159
                $region156: #{_lambda_.1} parent=151 // loop_body
                  %v1983 = vld [vmem:[%s1981] sm:$0xff]
                  %1984 = vst [vmem:[%s1982] sm:$0xff] %v1983
                  %v1985 = vld [vmem:[%s1981 + $0x8] sm:$0xff]
                  %1986 = vst [vmem:[%s1982 + $0x8] sm:$0xff] %v1985
                  %v1987 = vld [vmem:[%s1981 + $0x10] sm:$0xff]
                  %1988 = vst [vmem:[%s1982 + $0x10] sm:$0xff] %v1987
                  %v1989 = vld [vmem:[%s1981 + $0x18] sm:$0xff]
                  %1990 = vst [vmem:[%s1982 + $0x18] sm:$0xff] %v1989
                  %v1991 = vld [vmem:[%s1981 + $0x20] sm:$0xff]
                  %1992 = vst [vmem:[%s1982 + $0x20] sm:$0xff] %v1991
                  %v1993 = vld [vmem:[%s1981 + $0x28] sm:$0xff]
                  %1994 = vst [vmem:[%s1982 + $0x28] sm:$0xff] %v1993
                  %v1995 = vld [vmem:[%s1981 + $0x30] sm:$0xff]
                  %1996 = vst [vmem:[%s1982 + $0x30] sm:$0xff] %v1995
                  %v1997 = vld [vmem:[%s1981 + $0x38] sm:$0xff]
                  %1998 = vst [vmem:[%s1982 + $0x38] sm:$0xff] %v1997
                  %v1999 = vld [vmem:[%s1981 + $0x40] sm:$0xff]
                  %2000 = vst [vmem:[%s1982 + $0x40] sm:$0xff] %v1999
                  %v2001 = vld [vmem:[%s1981 + $0x48] sm:$0xff]
                  %2002 = vst [vmem:[%s1982 + $0x48] sm:$0xff] %v2001
                  %v2003 = vld [vmem:[%s1981 + $0x50] sm:$0xff]
                  %2004 = vst [vmem:[%s1982 + $0x50] sm:$0xff] %v2003
                  %v2005 = vld [vmem:[%s1981 + $0x58] sm:$0xff]
                  %2006 = vst [vmem:[%s1982 + $0x58] sm:$0xff] %v2005
                  %v2007 = vld [vmem:[%s1981 + $0x60] sm:$0xff]
                  %2008 = vst [vmem:[%s1982 + $0x60] sm:$0xff] %v2007
                  %v2009 = vld [vmem:[%s1981 + $0x68] sm:$0xff]
                  %2010 = vst [vmem:[%s1982 + $0x68] sm:$0xff] %v2009
                  %v2011 = vld [vmem:[%s1981 + $0x70] sm:$0xff]
                  %2012 = vst [vmem:[%s1982 + $0x70] sm:$0xff] %v2011
                  %v2013 = vld [vmem:[%s1981 + $0x78] sm:$0xff]
                  %2014 = vst [vmem:[%s1982 + $0x78] sm:$0xff] %v2013
                  %v2015 = vld [vmem:[%s1981 + $0x5] sm:$0xff]
                  %2016 = vst [vmem:[%s1982 + $0x6] sm:$0xff] %v2015
                  %v2017 = vld [vmem:[%s1981 + $0xd] sm:$0xff]
                  %2018 = vst [vmem:[%s1982 + $0xe] sm:$0xff] %v2017
                  %v2019 = vld [vmem:[%s1981 + $0x15] sm:$0xff]
                  %2020 = vst [vmem:[%s1982 + $0x16] sm:$0xff] %v2019
                  %v2021 = vld [vmem:[%s1981 + $0x1d] sm:$0xff]
                  %2022 = vst [vmem:[%s1982 + $0x1e] sm:$0xff] %v2021
                  %v2023 = vld [vmem:[%s1981 + $0x25] sm:$0xff]
                  %2024 = vst [vmem:[%s1982 + $0x26] sm:$0xff] %v2023
                  %v2025 = vld [vmem:[%s1981 + $0x2d] sm:$0xff]
                  %2026 = vst [vmem:[%s1982 + $0x2e] sm:$0xff] %v2025
                  %v2027 = vld [vmem:[%s1981 + $0x35] sm:$0xff]
                  %2028 = vst [vmem:[%s1982 + $0x36] sm:$0xff] %v2027
                  %v2029 = vld [vmem:[%s1981 + $0x3d] sm:$0xff]
                  %2030 = vst [vmem:[%s1982 + $0x3e] sm:$0xff] %v2029
                  %v2031 = vld [vmem:[%s1981 + $0x45] sm:$0xff]
                  %2032 = vst [vmem:[%s1982 + $0x46] sm:$0xff] %v2031
                  %v2033 = vld [vmem:[%s1981 + $0x4d] sm:$0xff]
                  %2034 = vst [vmem:[%s1982 + $0x4e] sm:$0xff] %v2033
                  %v2035 = vld [vmem:[%s1981 + $0x55] sm:$0xff]
                  %2036 = vst [vmem:[%s1982 + $0x56] sm:$0xff] %v2035
                  %v2037 = vld [vmem:[%s1981 + $0x5d] sm:$0xff]
                  %2038 = vst [vmem:[%s1982 + $0x5e] sm:$0xff] %v2037
                  %v2039 = vld [vmem:[%s1981 + $0x65] sm:$0xff]
                  %2040 = vst [vmem:[%s1982 + $0x66] sm:$0xff] %v2039
                  %v2041 = vld [vmem:[%s1981 + $0x6d] sm:$0xff]
                  %2042 = vst [vmem:[%s1982 + $0x6e] sm:$0xff] %v2041
                  %v2043 = vld [vmem:[%s1981 + $0x75] sm:$0xff]
                  %2044 = vst [vmem:[%s1982 + $0x76] sm:$0xff] %v2043
                  %v2045 = vld [vmem:[%s1981 + $0x7d] sm:$0xff]
                  %2046 = vst [vmem:[%s1982 + $0x7e] sm:$0xff] %v2045
                  %v2047 = vld [vmem:[%s1981 + $0xa] sm:$0xff]
                  %2048 = vst [vmem:[%s1982 + $0xc] sm:$0xff] %v2047
                  %v2049 = vld [vmem:[%s1981 + $0x12] sm:$0xff]
                  %2050 = vst [vmem:[%s1982 + $0x14] sm:$0xff] %v2049
                  %v2051 = vld [vmem:[%s1981 + $0x1a] sm:$0xff]
                  %2052 = vst [vmem:[%s1982 + $0x1c] sm:$0xff] %v2051
                  %v2053 = vld [vmem:[%s1981 + $0x22] sm:$0xff]
                  %2054 = vst [vmem:[%s1982 + $0x24] sm:$0xff] %v2053
                  %v2055 = vld [vmem:[%s1981 + $0x2a] sm:$0xff]
                  %2056 = vst [vmem:[%s1982 + $0x2c] sm:$0xff] %v2055
                  %v2057 = vld [vmem:[%s1981 + $0x32] sm:$0xff]
                  %2058 = vst [vmem:[%s1982 + $0x34] sm:$0xff] %v2057
                  %v2059 = vld [vmem:[%s1981 + $0x3a] sm:$0xff]
                  %2060 = vst [vmem:[%s1982 + $0x3c] sm:$0xff] %v2059
                  %v2061 = vld [vmem:[%s1981 + $0x42] sm:$0xff]
                  %2062 = vst [vmem:[%s1982 + $0x44] sm:$0xff] %v2061
                  %v2063 = vld [vmem:[%s1981 + $0x4a] sm:$0xff]
                  %2064 = vst [vmem:[%s1982 + $0x4c] sm:$0xff] %v2063
                  %v2065 = vld [vmem:[%s1981 + $0x52] sm:$0xff]
                  %2066 = vst [vmem:[%s1982 + $0x54] sm:$0xff] %v2065
                  %v2067 = vld [vmem:[%s1981 + $0x5a] sm:$0xff]
                  %2068 = vst [vmem:[%s1982 + $0x5c] sm:$0xff] %v2067
                  %v2069 = vld [vmem:[%s1981 + $0x62] sm:$0xff]
                  %2070 = vst [vmem:[%s1982 + $0x64] sm:$0xff] %v2069
                  %v2071 = vld [vmem:[%s1981 + $0x6a] sm:$0xff]
                  %2072 = vst [vmem:[%s1982 + $0x6c] sm:$0xff] %v2071
                  %v2073 = vld [vmem:[%s1981 + $0x72] sm:$0xff]
                  %2074 = vst [vmem:[%s1982 + $0x74] sm:$0xff] %v2073
                  %v2075 = vld [vmem:[%s1981 + $0x7a] sm:$0xff]
                  %2076 = vst [vmem:[%s1982 + $0x7c] sm:$0xff] %v2075
                  %v2077 = vld [vmem:[%s1981 + $0x82] sm:$0xff]
                  %2078 = vst [vmem:[%s1982 + $0x84] sm:$0xff] %v2077
                  %v2079 = vld [vmem:[%s1981 + $0xf] sm:$0xff]
                  %2080 = vst [vmem:[%s1982 + $0x12] sm:$0xff] %v2079
                  %v2081 = vld [vmem:[%s1981 + $0x17] sm:$0xff]
                  %2082 = vst [vmem:[%s1982 + $0x1a] sm:$0xff] %v2081
                  %v2083 = vld [vmem:[%s1981 + $0x1f] sm:$0xff]
                  %2084 = vst [vmem:[%s1982 + $0x22] sm:$0xff] %v2083
                  %v2085 = vld [vmem:[%s1981 + $0x27] sm:$0xff]
                  %2086 = vst [vmem:[%s1982 + $0x2a] sm:$0xff] %v2085
                  %v2087 = vld [vmem:[%s1981 + $0x2f] sm:$0xff]
                  %2088 = vst [vmem:[%s1982 + $0x32] sm:$0xff] %v2087
                  %v2089 = vld [vmem:[%s1981 + $0x37] sm:$0xff]
                  %2090 = vst [vmem:[%s1982 + $0x3a] sm:$0xff] %v2089
                  %v2091 = vld [vmem:[%s1981 + $0x3f] sm:$0xff]
                  %2092 = vst [vmem:[%s1982 + $0x42] sm:$0xff] %v2091
                  %v2093 = vld [vmem:[%s1981 + $0x47] sm:$0xff]
                  %2094 = vst [vmem:[%s1982 + $0x4a] sm:$0xff] %v2093
                  %v2095 = vld [vmem:[%s1981 + $0x4f] sm:$0xff]
                  %2096 = vst [vmem:[%s1982 + $0x52] sm:$0xff] %v2095
                  %v2097 = vld [vmem:[%s1981 + $0x57] sm:$0xff]
                  %2098 = vst [vmem:[%s1982 + $0x5a] sm:$0xff] %v2097
                  %v2099 = vld [vmem:[%s1981 + $0x5f] sm:$0xff]
                  %2100 = vst [vmem:[%s1982 + $0x62] sm:$0xff] %v2099
                  %v2101 = vld [vmem:[%s1981 + $0x67] sm:$0xff]
                  %2102 = vst [vmem:[%s1982 + $0x6a] sm:$0xff] %v2101
                  %v2103 = vld [vmem:[%s1981 + $0x6f] sm:$0xff]
                  %2104 = vst [vmem:[%s1982 + $0x72] sm:$0xff] %v2103
                  %v2105 = vld [vmem:[%s1981 + $0x77] sm:$0xff]
                  %2106 = vst [vmem:[%s1982 + $0x7a] sm:$0xff] %v2105
                  %v2107 = vld [vmem:[%s1981 + $0x7f] sm:$0xff]
                  %2108 = vst [vmem:[%s1982 + $0x82] sm:$0xff] %v2107
                  %v2109 = vld [vmem:[%s1981 + $0x87] sm:$0xff]
                  %2110 = vst [vmem:[%s1982 + $0x8a] sm:$0xff] %v2109
                  %v2111 = vld [vmem:[%s1981 + $0x14] sm:$0xff]
                  %2112 = vst [vmem:[%s1982 + $0x18] sm:$0xff] %v2111
                  %v2113 = vld [vmem:[%s1981 + $0x1c] sm:$0xff]
                  %2114 = vst [vmem:[%s1982 + $0x20] sm:$0xff] %v2113
                  %v2115 = vld [vmem:[%s1981 + $0x24] sm:$0xff]
                  %2116 = vst [vmem:[%s1982 + $0x28] sm:$0xff] %v2115
                  %v2117 = vld [vmem:[%s1981 + $0x2c] sm:$0xff]
                  %2118 = vst [vmem:[%s1982 + $0x30] sm:$0xff] %v2117
                  %v2119 = vld [vmem:[%s1981 + $0x34] sm:$0xff]
                  %2120 = vst [vmem:[%s1982 + $0x38] sm:$0xff] %v2119
                  %v2121 = vld [vmem:[%s1981 + $0x3c] sm:$0xff]
                  %2122 = vst [vmem:[%s1982 + $0x40] sm:$0xff] %v2121
                  %v2123 = vld [vmem:[%s1981 + $0x44] sm:$0xff]
                  %2124 = vst [vmem:[%s1982 + $0x48] sm:$0xff] %v2123
                  %v2125 = vld [vmem:[%s1981 + $0x4c] sm:$0xff]
                  %2126 = vst [vmem:[%s1982 + $0x50] sm:$0xff] %v2125
                  %v2127 = vld [vmem:[%s1981 + $0x54] sm:$0xff]
                  %2128 = vst [vmem:[%s1982 + $0x58] sm:$0xff] %v2127
                  %v2129 = vld [vmem:[%s1981 + $0x5c] sm:$0xff]
                  %2130 = vst [vmem:[%s1982 + $0x60] sm:$0xff] %v2129
                  %v2131 = vld [vmem:[%s1981 + $0x64] sm:$0xff]
                  %2132 = vst [vmem:[%s1982 + $0x68] sm:$0xff] %v2131
                  %v2133 = vld [vmem:[%s1981 + $0x6c] sm:$0xff]
                  %2134 = vst [vmem:[%s1982 + $0x70] sm:$0xff] %v2133
                  %v2135 = vld [vmem:[%s1981 + $0x74] sm:$0xff]
                  %2136 = vst [vmem:[%s1982 + $0x78] sm:$0xff] %v2135
                  %v2137 = vld [vmem:[%s1981 + $0x7c] sm:$0xff]
                  %2138 = vst [vmem:[%s1982 + $0x80] sm:$0xff] %v2137
                  %v2139 = vld [vmem:[%s1981 + $0x84] sm:$0xff]
                  %2140 = vst [vmem:[%s1982 + $0x88] sm:$0xff] %v2139
                  %v2141 = vld [vmem:[%s1981 + $0x8c] sm:$0xff]
                  %2142 = vst [vmem:[%s1982 + $0x90] sm:$0xff] %v2141
                  %s2143 = sadd.s32 1, %s1980
                  %p2144 = scmp.ge.s32.totalorder %s2143, %s1969
                  %s2145 = scalar_select %p2144, 0, %s2143
                  %s2146 = sadd.s32 1, %s1979
                  %s2147 = scalar_select %p2144, %s2146, %s1979
                  %p2148 = scmp.ge.s32.totalorder %s2147, %s1967
                  %s2149 = scalar_select %p2148, 0, %s2147
                  %s2150 = smul.u32 %s2149, 25
                  %s2151 = smul.u32 %s2145, 128
                  %s2152 = sadd.s32 %s2150, %s2151
                  %s2153 = smul.u32 %s2149, 30
                  %s2154 = smul.u32 %s2145, 128
                  %s2155 = sadd.s32 %s2153, %s2154
                  %s2156 = scalar_lea.vmem %s1878, %s2152 [#allocation3]
                  %s2157 = scalar_lea.vmem %s1896, %s2155
                $region157: #{_lambda_.1} parent=151 // loop_footer
                  %s1976 = sadd.s32 %s1974, 1
                $region158: #{_lambda_.1} parent=151 // loop_footer_branch
                  %1973 = sbr.rel target = $region154
                $region159: #{_lambda_.1} parent=151 // loop_exit
                  _
                %s2158 = sshrl.u32 %s1966, 4
                %s2159 = sdiv.u32.pop %s1886, 5
                %s2160 = srem.u32.pop %s1886, 5
                %s2161 = smul.u32 %s2159, 5
                %s2162 = smul.u32 5, %s2161
                %s2163 = scalar_lea.vmem %s1878, %s2162 [#allocation3]
                %s2164 = smul.u32 6, %s2161
                %s2165 = scalar_lea.vmem %s1896, %s2164
                %s2166 = smul.u32 %s2160, %s2158
                // While loop
                $region160: #{_lambda_.1} parent=151 // loop_pre_header
                  _
                $region161: #{_lambda_.1} parent=151 // loop_header
                  %s2170 = sphi 0, %s2172
                  %p2171 = scmp.ge.s32.totalorder %s2170, %s2166
                  %s2175 = sphi 0, %s2217
                  %s2176 = sphi 0, %s2213
                  %s2177 = sphi %s2163, %s2224
                  %s2178 = sphi %s2165, %s2225
                $region162: #{_lambda_.1} parent=151 // loop_header_branch
                  %2174 = sbr.rel (%p2171) target = $region166
                $region163: #{_lambda_.1} parent=151 // loop_body
                  %v2179 = vld [vmem:[%s2177] sm:$0xff]
                  %2180 = vst [vmem:[%s2178] sm:$0xff] %v2179
                  %v2181 = vld [vmem:[%s2177 + $0x8] sm:$0xff]
                  %2182 = vst [vmem:[%s2178 + $0x8] sm:$0xff] %v2181
                  %v2183 = vld [vmem:[%s2177 + $0x10] sm:$0xff]
                  %2184 = vst [vmem:[%s2178 + $0x10] sm:$0xff] %v2183
                  %v2185 = vld [vmem:[%s2177 + $0x18] sm:$0xff]
                  %2186 = vst [vmem:[%s2178 + $0x18] sm:$0xff] %v2185
                  %v2187 = vld [vmem:[%s2177 + $0x20] sm:$0xff]
                  %2188 = vst [vmem:[%s2178 + $0x20] sm:$0xff] %v2187
                  %v2189 = vld [vmem:[%s2177 + $0x28] sm:$0xff]
                  %2190 = vst [vmem:[%s2178 + $0x28] sm:$0xff] %v2189
                  %v2191 = vld [vmem:[%s2177 + $0x30] sm:$0xff]
                  %2192 = vst [vmem:[%s2178 + $0x30] sm:$0xff] %v2191
                  %v2193 = vld [vmem:[%s2177 + $0x38] sm:$0xff]
                  %2194 = vst [vmem:[%s2178 + $0x38] sm:$0xff] %v2193
                  %v2195 = vld [vmem:[%s2177 + $0x40] sm:$0xff]
                  %2196 = vst [vmem:[%s2178 + $0x40] sm:$0xff] %v2195
                  %v2197 = vld [vmem:[%s2177 + $0x48] sm:$0xff]
                  %2198 = vst [vmem:[%s2178 + $0x48] sm:$0xff] %v2197
                  %v2199 = vld [vmem:[%s2177 + $0x50] sm:$0xff]
                  %2200 = vst [vmem:[%s2178 + $0x50] sm:$0xff] %v2199
                  %v2201 = vld [vmem:[%s2177 + $0x58] sm:$0xff]
                  %2202 = vst [vmem:[%s2178 + $0x58] sm:$0xff] %v2201
                  %v2203 = vld [vmem:[%s2177 + $0x60] sm:$0xff]
                  %2204 = vst [vmem:[%s2178 + $0x60] sm:$0xff] %v2203
                  %v2205 = vld [vmem:[%s2177 + $0x68] sm:$0xff]
                  %2206 = vst [vmem:[%s2178 + $0x68] sm:$0xff] %v2205
                  %v2207 = vld [vmem:[%s2177 + $0x70] sm:$0xff]
                  %2208 = vst [vmem:[%s2178 + $0x70] sm:$0xff] %v2207
                  %v2209 = vld [vmem:[%s2177 + $0x78] sm:$0xff]
                  %2210 = vst [vmem:[%s2178 + $0x78] sm:$0xff] %v2209
                  %s2211 = sadd.s32 1, %s2176
                  %p2212 = scmp.ge.s32.totalorder %s2211, %s2158
                  %s2213 = scalar_select %p2212, 0, %s2211
                  %s2214 = sadd.s32 1, %s2175
                  %s2215 = scalar_select %p2212, %s2214, %s2175
                  %p2216 = scmp.ge.s32.totalorder %s2215, %s2160
                  %s2217 = scalar_select %p2216, 0, %s2215
                  %s2218 = smul.u32 %s2217, 5
                  %s2219 = smul.u32 %s2213, 128
                  %s2220 = sadd.s32 %s2218, %s2219
                  %s2221 = smul.u32 %s2217, 6
                  %s2222 = smul.u32 %s2213, 128
                  %s2223 = sadd.s32 %s2221, %s2222
                  %s2224 = scalar_lea.vmem %s2163, %s2220 [#allocation3]
                  %s2225 = scalar_lea.vmem %s2165, %s2223
                $region164: #{_lambda_.1} parent=151 // loop_footer
                  %s2172 = sadd.s32 %s2170, 1
                $region165: #{_lambda_.1} parent=151 // loop_footer_branch
                  %2169 = sbr.rel target = $region161
                $region166: #{_lambda_.1} parent=151 // loop_exit
                  _
                %s2226 = sshrl.u32 %s1966, 4
                %s2227 = sand.u32 %s1966, 15
                %s2228 = smul.u32 %s2226, 16
                %s2229 = smul.u32 128, %s2228
                %s2230 = sshra.s32 %s2229, 4
                %s2231 = scalar_lea.vmem %s1878, %s2230 [#allocation3]
                %s2232 = smul.u32 128, %s2228
                %s2233 = sshra.s32 %s2232, 4
                %s2234 = scalar_lea.vmem %s1896, %s2233
                %s2235 = smul.u32 %s1886, %s2227
                // While loop
                $region167: #{_lambda_.1} parent=151 // loop_pre_header
                  _
                $region168: #{_lambda_.1} parent=151 // loop_header
                  %s2239 = sphi 0, %s2241
                  %p2240 = scmp.ge.s32.totalorder %s2239, %s2235
                  %s2244 = sphi 0, %s2256
                  %s2245 = sphi 0, %s2252
                  %s2246 = sphi %s2231, %s2263
                  %s2247 = sphi %s2234, %s2264
                $region169: #{_lambda_.1} parent=151 // loop_header_branch
                  %2243 = sbr.rel (%p2240) target = $region173
                $region170: #{_lambda_.1} parent=151 // loop_body
                  %v2248 = vld [vmem:[%s2246] sm:$0xff]
                  %2249 = vst [vmem:[%s2247] sm:$0xff] %v2248
                  %s2250 = sadd.s32 1, %s2245
                  %p2251 = scmp.ge.s32.totalorder %s2250, %s2227
                  %s2252 = scalar_select %p2251, 0, %s2250
                  %s2253 = sadd.s32 1, %s2244
                  %s2254 = scalar_select %p2251, %s2253, %s2244
                  %p2255 = scmp.ge.s32.totalorder %s2254, %s1886
                  %s2256 = scalar_select %p2255, 0, %s2254
                  %s2257 = smul.u32 %s2256, 5
                  %s2258 = smul.u32 %s2252, 8
                  %s2259 = sadd.s32 %s2257, %s2258
                  %s2260 = smul.u32 %s2256, 6
                  %s2261 = smul.u32 %s2252, 8
                  %s2262 = sadd.s32 %s2260, %s2261
                  %s2263 = scalar_lea.vmem %s2231, %s2259 [#allocation3]
                  %s2264 = scalar_lea.vmem %s2234, %s2262
                $region171: #{_lambda_.1} parent=151 // loop_footer
                  %s2241 = sadd.s32 %s2239, 1
                $region172: #{_lambda_.1} parent=151 // loop_footer_branch
                  %2238 = sbr.rel target = $region168
                $region173: #{_lambda_.1} parent=151 // loop_exit
                  _
              $region152: #{_lambda_.1} parent=129 // pred_fallthru
                _
              %p2265 = pneg %p1962
              // Predicated region
              $region174: #{_lambda_.1} parent=129 // pred_check
                _
              $region175: #{_lambda_.1} parent=129 // pred_check_branch
                %2267 = sbr.rel (%p1962) target = $region177
              $region176: #{_lambda_.1} parent=129 // pred_region
                %s2268 = sand.u32 %s1890, 7
                %s2269 = ssub.s32 %s1890, %s2268
                %s2270 = scalar_lea.vmem %s1878, %s2269 [#allocation3]
                %s2271 = ssub.s32 %s1890, %s2268
                %s2272 = scalar_lea.vmem %s1896, %s2271
                %s2273 = sshrl.u32 %s1890, 3
                %s2274 = sdiv.u32.pop %s1886, 5
                %s2275 = srem.u32.pop %s1886, 5
                %s2276 = sshrl.u32 %s2273, 4
                %s2277 = smul.u32 %s2274, %s2276
                // While loop
                $region178: #{_lambda_.1} parent=176 // loop_pre_header
                  _
                $region179: #{_lambda_.1} parent=176 // loop_header
                  %s2281 = sphi 0, %s2283
                  %p2282 = scmp.ge.s32.totalorder %s2281, %s2277
                  %s2286 = sphi 0, %s2456
                  %s2287 = sphi 0, %s2452
                  %s2288 = sphi %s1878, %s2463
                  %s2289 = sphi %s1896, %s2464
                $region180: #{_lambda_.1} parent=176 // loop_header_branch
                  %2285 = sbr.rel (%p2282) target = $region184
                $region181: #{_lambda_.1} parent=176 // loop_body
                  %v2290 = vld [vmem:[%s2288] sm:$0xff]
                  %2291 = vst [vmem:[%s2289] sm:$0xff] %v2290
                  %v2292 = vld [vmem:[%s2288 + $0x8] sm:$0xff]
                  %2293 = vst [vmem:[%s2289 + $0x8] sm:$0xff] %v2292
                  %v2294 = vld [vmem:[%s2288 + $0x10] sm:$0xff]
                  %2295 = vst [vmem:[%s2289 + $0x10] sm:$0xff] %v2294
                  %v2296 = vld [vmem:[%s2288 + $0x18] sm:$0xff]
                  %2297 = vst [vmem:[%s2289 + $0x18] sm:$0xff] %v2296
                  %v2298 = vld [vmem:[%s2288 + $0x20] sm:$0xff]
                  %2299 = vst [vmem:[%s2289 + $0x20] sm:$0xff] %v2298
                  %v2300 = vld [vmem:[%s2288 + $0x28] sm:$0xff]
                  %2301 = vst [vmem:[%s2289 + $0x28] sm:$0xff] %v2300
                  %v2302 = vld [vmem:[%s2288 + $0x30] sm:$0xff]
                  %2303 = vst [vmem:[%s2289 + $0x30] sm:$0xff] %v2302
                  %v2304 = vld [vmem:[%s2288 + $0x38] sm:$0xff]
                  %2305 = vst [vmem:[%s2289 + $0x38] sm:$0xff] %v2304
                  %v2306 = vld [vmem:[%s2288 + $0x40] sm:$0xff]
                  %2307 = vst [vmem:[%s2289 + $0x40] sm:$0xff] %v2306
                  %v2308 = vld [vmem:[%s2288 + $0x48] sm:$0xff]
                  %2309 = vst [vmem:[%s2289 + $0x48] sm:$0xff] %v2308
                  %v2310 = vld [vmem:[%s2288 + $0x50] sm:$0xff]
                  %2311 = vst [vmem:[%s2289 + $0x50] sm:$0xff] %v2310
                  %v2312 = vld [vmem:[%s2288 + $0x58] sm:$0xff]
                  %2313 = vst [vmem:[%s2289 + $0x58] sm:$0xff] %v2312
                  %v2314 = vld [vmem:[%s2288 + $0x60] sm:$0xff]
                  %2315 = vst [vmem:[%s2289 + $0x60] sm:$0xff] %v2314
                  %v2316 = vld [vmem:[%s2288 + $0x68] sm:$0xff]
                  %2317 = vst [vmem:[%s2289 + $0x68] sm:$0xff] %v2316
                  %v2318 = vld [vmem:[%s2288 + $0x70] sm:$0xff]
                  %2319 = vst [vmem:[%s2289 + $0x70] sm:$0xff] %v2318
                  %v2320 = vld [vmem:[%s2288 + $0x78] sm:$0xff]
                  %2321 = vst [vmem:[%s2289 + $0x78] sm:$0xff] %v2320
                  %v2322 = vld [vmem:[%s2288 + $0x5] sm:$0xff]
                  %2323 = vst [vmem:[%s2289 + $0x6] sm:$0xff] %v2322
                  %v2324 = vld [vmem:[%s2288 + $0xd] sm:$0xff]
                  %2325 = vst [vmem:[%s2289 + $0xe] sm:$0xff] %v2324
                  %v2326 = vld [vmem:[%s2288 + $0x15] sm:$0xff]
                  %2327 = vst [vmem:[%s2289 + $0x16] sm:$0xff] %v2326
                  %v2328 = vld [vmem:[%s2288 + $0x1d] sm:$0xff]
                  %2329 = vst [vmem:[%s2289 + $0x1e] sm:$0xff] %v2328
                  %v2330 = vld [vmem:[%s2288 + $0x25] sm:$0xff]
                  %2331 = vst [vmem:[%s2289 + $0x26] sm:$0xff] %v2330
                  %v2332 = vld [vmem:[%s2288 + $0x2d] sm:$0xff]
                  %2333 = vst [vmem:[%s2289 + $0x2e] sm:$0xff] %v2332
                  %v2334 = vld [vmem:[%s2288 + $0x35] sm:$0xff]
                  %2335 = vst [vmem:[%s2289 + $0x36] sm:$0xff] %v2334
                  %v2336 = vld [vmem:[%s2288 + $0x3d] sm:$0xff]
                  %2337 = vst [vmem:[%s2289 + $0x3e] sm:$0xff] %v2336
                  %v2338 = vld [vmem:[%s2288 + $0x45] sm:$0xff]
                  %2339 = vst [vmem:[%s2289 + $0x46] sm:$0xff] %v2338
                  %v2340 = vld [vmem:[%s2288 + $0x4d] sm:$0xff]
                  %2341 = vst [vmem:[%s2289 + $0x4e] sm:$0xff] %v2340
                  %v2342 = vld [vmem:[%s2288 + $0x55] sm:$0xff]
                  %2343 = vst [vmem:[%s2289 + $0x56] sm:$0xff] %v2342
                  %v2344 = vld [vmem:[%s2288 + $0x5d] sm:$0xff]
                  %2345 = vst [vmem:[%s2289 + $0x5e] sm:$0xff] %v2344
                  %v2346 = vld [vmem:[%s2288 + $0x65] sm:$0xff]
                  %2347 = vst [vmem:[%s2289 + $0x66] sm:$0xff] %v2346
                  %v2348 = vld [vmem:[%s2288 + $0x6d] sm:$0xff]
                  %2349 = vst [vmem:[%s2289 + $0x6e] sm:$0xff] %v2348
                  %v2350 = vld [vmem:[%s2288 + $0x75] sm:$0xff]
                  %2351 = vst [vmem:[%s2289 + $0x76] sm:$0xff] %v2350
                  %v2352 = vld [vmem:[%s2288 + $0x7d] sm:$0xff]
                  %2353 = vst [vmem:[%s2289 + $0x7e] sm:$0xff] %v2352
                  %v2354 = vld [vmem:[%s2288 + $0xa] sm:$0xff]
                  %2355 = vst [vmem:[%s2289 + $0xc] sm:$0xff] %v2354
                  %v2356 = vld [vmem:[%s2288 + $0x12] sm:$0xff]
                  %2357 = vst [vmem:[%s2289 + $0x14] sm:$0xff] %v2356
                  %v2358 = vld [vmem:[%s2288 + $0x1a] sm:$0xff]
                  %2359 = vst [vmem:[%s2289 + $0x1c] sm:$0xff] %v2358
                  %v2360 = vld [vmem:[%s2288 + $0x22] sm:$0xff]
                  %2361 = vst [vmem:[%s2289 + $0x24] sm:$0xff] %v2360
                  %v2362 = vld [vmem:[%s2288 + $0x2a] sm:$0xff]
                  %2363 = vst [vmem:[%s2289 + $0x2c] sm:$0xff] %v2362
                  %v2364 = vld [vmem:[%s2288 + $0x32] sm:$0xff]
                  %2365 = vst [vmem:[%s2289 + $0x34] sm:$0xff] %v2364
                  %v2366 = vld [vmem:[%s2288 + $0x3a] sm:$0xff]
                  %2367 = vst [vmem:[%s2289 + $0x3c] sm:$0xff] %v2366
                  %v2368 = vld [vmem:[%s2288 + $0x42] sm:$0xff]
                  %2369 = vst [vmem:[%s2289 + $0x44] sm:$0xff] %v2368
                  %v2370 = vld [vmem:[%s2288 + $0x4a] sm:$0xff]
                  %2371 = vst [vmem:[%s2289 + $0x4c] sm:$0xff] %v2370
                  %v2372 = vld [vmem:[%s2288 + $0x52] sm:$0xff]
                  %2373 = vst [vmem:[%s2289 + $0x54] sm:$0xff] %v2372
                  %v2374 = vld [vmem:[%s2288 + $0x5a] sm:$0xff]
                  %2375 = vst [vmem:[%s2289 + $0x5c] sm:$0xff] %v2374
                  %v2376 = vld [vmem:[%s2288 + $0x62] sm:$0xff]
                  %2377 = vst [vmem:[%s2289 + $0x64] sm:$0xff] %v2376
                  %v2378 = vld [vmem:[%s2288 + $0x6a] sm:$0xff]
                  %2379 = vst [vmem:[%s2289 + $0x6c] sm:$0xff] %v2378
                  %v2380 = vld [vmem:[%s2288 + $0x72] sm:$0xff]
                  %2381 = vst [vmem:[%s2289 + $0x74] sm:$0xff] %v2380
                  %v2382 = vld [vmem:[%s2288 + $0x7a] sm:$0xff]
                  %2383 = vst [vmem:[%s2289 + $0x7c] sm:$0xff] %v2382
                  %v2384 = vld [vmem:[%s2288 + $0x82] sm:$0xff]
                  %2385 = vst [vmem:[%s2289 + $0x84] sm:$0xff] %v2384
                  %v2386 = vld [vmem:[%s2288 + $0xf] sm:$0xff]
                  %2387 = vst [vmem:[%s2289 + $0x12] sm:$0xff] %v2386
                  %v2388 = vld [vmem:[%s2288 + $0x17] sm:$0xff]
                  %2389 = vst [vmem:[%s2289 + $0x1a] sm:$0xff] %v2388
                  %v2390 = vld [vmem:[%s2288 + $0x1f] sm:$0xff]
                  %2391 = vst [vmem:[%s2289 + $0x22] sm:$0xff] %v2390
                  %v2392 = vld [vmem:[%s2288 + $0x27] sm:$0xff]
                  %2393 = vst [vmem:[%s2289 + $0x2a] sm:$0xff] %v2392
                  %v2394 = vld [vmem:[%s2288 + $0x2f] sm:$0xff]
                  %2395 = vst [vmem:[%s2289 + $0x32] sm:$0xff] %v2394
                  %v2396 = vld [vmem:[%s2288 + $0x37] sm:$0xff]
                  %2397 = vst [vmem:[%s2289 + $0x3a] sm:$0xff] %v2396
                  %v2398 = vld [vmem:[%s2288 + $0x3f] sm:$0xff]
                  %2399 = vst [vmem:[%s2289 + $0x42] sm:$0xff] %v2398
                  %v2400 = vld [vmem:[%s2288 + $0x47] sm:$0xff]
                  %2401 = vst [vmem:[%s2289 + $0x4a] sm:$0xff] %v2400
                  %v2402 = vld [vmem:[%s2288 + $0x4f] sm:$0xff]
                  %2403 = vst [vmem:[%s2289 + $0x52] sm:$0xff] %v2402
                  %v2404 = vld [vmem:[%s2288 + $0x57] sm:$0xff]
                  %2405 = vst [vmem:[%s2289 + $0x5a] sm:$0xff] %v2404
                  %v2406 = vld [vmem:[%s2288 + $0x5f] sm:$0xff]
                  %2407 = vst [vmem:[%s2289 + $0x62] sm:$0xff] %v2406
                  %v2408 = vld [vmem:[%s2288 + $0x67] sm:$0xff]
                  %2409 = vst [vmem:[%s2289 + $0x6a] sm:$0xff] %v2408
                  %v2410 = vld [vmem:[%s2288 + $0x6f] sm:$0xff]
                  %2411 = vst [vmem:[%s2289 + $0x72] sm:$0xff] %v2410
                  %v2412 = vld [vmem:[%s2288 + $0x77] sm:$0xff]
                  %2413 = vst [vmem:[%s2289 + $0x7a] sm:$0xff] %v2412
                  %v2414 = vld [vmem:[%s2288 + $0x7f] sm:$0xff]
                  %2415 = vst [vmem:[%s2289 + $0x82] sm:$0xff] %v2414
                  %v2416 = vld [vmem:[%s2288 + $0x87] sm:$0xff]
                  %2417 = vst [vmem:[%s2289 + $0x8a] sm:$0xff] %v2416
                  %v2418 = vld [vmem:[%s2288 + $0x14] sm:$0xff]
                  %2419 = vst [vmem:[%s2289 + $0x18] sm:$0xff] %v2418
                  %v2420 = vld [vmem:[%s2288 + $0x1c] sm:$0xff]
                  %2421 = vst [vmem:[%s2289 + $0x20] sm:$0xff] %v2420
                  %v2422 = vld [vmem:[%s2288 + $0x24] sm:$0xff]
                  %2423 = vst [vmem:[%s2289 + $0x28] sm:$0xff] %v2422
                  %v2424 = vld [vmem:[%s2288 + $0x2c] sm:$0xff]
                  %2425 = vst [vmem:[%s2289 + $0x30] sm:$0xff] %v2424
                  %v2426 = vld [vmem:[%s2288 + $0x34] sm:$0xff]
                  %2427 = vst [vmem:[%s2289 + $0x38] sm:$0xff] %v2426
                  %v2428 = vld [vmem:[%s2288 + $0x3c] sm:$0xff]
                  %2429 = vst [vmem:[%s2289 + $0x40] sm:$0xff] %v2428
                  %v2430 = vld [vmem:[%s2288 + $0x44] sm:$0xff]
                  %2431 = vst [vmem:[%s2289 + $0x48] sm:$0xff] %v2430
                  %v2432 = vld [vmem:[%s2288 + $0x4c] sm:$0xff]
                  %2433 = vst [vmem:[%s2289 + $0x50] sm:$0xff] %v2432
                  %v2434 = vld [vmem:[%s2288 + $0x54] sm:$0xff]
                  %2435 = vst [vmem:[%s2289 + $0x58] sm:$0xff] %v2434
                  %v2436 = vld [vmem:[%s2288 + $0x5c] sm:$0xff]
                  %2437 = vst [vmem:[%s2289 + $0x60] sm:$0xff] %v2436
                  %v2438 = vld [vmem:[%s2288 + $0x64] sm:$0xff]
                  %2439 = vst [vmem:[%s2289 + $0x68] sm:$0xff] %v2438
                  %v2440 = vld [vmem:[%s2288 + $0x6c] sm:$0xff]
                  %2441 = vst [vmem:[%s2289 + $0x70] sm:$0xff] %v2440
                  %v2442 = vld [vmem:[%s2288 + $0x74] sm:$0xff]
                  %2443 = vst [vmem:[%s2289 + $0x78] sm:$0xff] %v2442
                  %v2444 = vld [vmem:[%s2288 + $0x7c] sm:$0xff]
                  %2445 = vst [vmem:[%s2289 + $0x80] sm:$0xff] %v2444
                  %v2446 = vld [vmem:[%s2288 + $0x84] sm:$0xff]
                  %2447 = vst [vmem:[%s2289 + $0x88] sm:$0xff] %v2446
                  %v2448 = vld [vmem:[%s2288 + $0x8c] sm:$0xff]
                  %2449 = vst [vmem:[%s2289 + $0x90] sm:$0xff] %v2448
                  %s2450 = sadd.s32 1, %s2287
                  %p2451 = scmp.ge.s32.totalorder %s2450, %s2276
                  %s2452 = scalar_select %p2451, 0, %s2450
                  %s2453 = sadd.s32 1, %s2286
                  %s2454 = scalar_select %p2451, %s2453, %s2286
                  %p2455 = scmp.ge.s32.totalorder %s2454, %s2274
                  %s2456 = scalar_select %p2455, 0, %s2454
                  %s2457 = smul.u32 %s2456, 25
                  %s2458 = smul.u32 %s2452, 128
                  %s2459 = sadd.s32 %s2457, %s2458
                  %s2460 = smul.u32 %s2456, 30
                  %s2461 = smul.u32 %s2452, 128
                  %s2462 = sadd.s32 %s2460, %s2461
                  %s2463 = scalar_lea.vmem %s1878, %s2459 [#allocation3]
                  %s2464 = scalar_lea.vmem %s1896, %s2462
                $region182: #{_lambda_.1} parent=176 // loop_footer
                  %s2283 = sadd.s32 %s2281, 1
                $region183: #{_lambda_.1} parent=176 // loop_footer_branch
                  %2280 = sbr.rel target = $region179
                $region184: #{_lambda_.1} parent=176 // loop_exit
                  _
                %s2465 = sshrl.u32 %s2273, 4
                %s2466 = sdiv.u32.pop %s1886, 5
                %s2467 = srem.u32.pop %s1886, 5
                %s2468 = smul.u32 %s2466, 5
                %s2469 = smul.u32 5, %s2468
                %s2470 = scalar_lea.vmem %s1878, %s2469 [#allocation3]
                %s2471 = smul.u32 6, %s2468
                %s2472 = scalar_lea.vmem %s1896, %s2471
                %s2473 = smul.u32 %s2467, %s2465
                // While loop
                $region185: #{_lambda_.1} parent=176 // loop_pre_header
                  _
                $region186: #{_lambda_.1} parent=176 // loop_header
                  %s2477 = sphi 0, %s2479
                  %p2478 = scmp.ge.s32.totalorder %s2477, %s2473
                  %s2482 = sphi 0, %s2524
                  %s2483 = sphi 0, %s2520
                  %s2484 = sphi %s2470, %s2531
                  %s2485 = sphi %s2472, %s2532
                $region187: #{_lambda_.1} parent=176 // loop_header_branch
                  %2481 = sbr.rel (%p2478) target = $region191
                $region188: #{_lambda_.1} parent=176 // loop_body
                  %v2486 = vld [vmem:[%s2484] sm:$0xff]
                  %2487 = vst [vmem:[%s2485] sm:$0xff] %v2486
                  %v2488 = vld [vmem:[%s2484 + $0x8] sm:$0xff]
                  %2489 = vst [vmem:[%s2485 + $0x8] sm:$0xff] %v2488
                  %v2490 = vld [vmem:[%s2484 + $0x10] sm:$0xff]
                  %2491 = vst [vmem:[%s2485 + $0x10] sm:$0xff] %v2490
                  %v2492 = vld [vmem:[%s2484 + $0x18] sm:$0xff]
                  %2493 = vst [vmem:[%s2485 + $0x18] sm:$0xff] %v2492
                  %v2494 = vld [vmem:[%s2484 + $0x20] sm:$0xff]
                  %2495 = vst [vmem:[%s2485 + $0x20] sm:$0xff] %v2494
                  %v2496 = vld [vmem:[%s2484 + $0x28] sm:$0xff]
                  %2497 = vst [vmem:[%s2485 + $0x28] sm:$0xff] %v2496
                  %v2498 = vld [vmem:[%s2484 + $0x30] sm:$0xff]
                  %2499 = vst [vmem:[%s2485 + $0x30] sm:$0xff] %v2498
                  %v2500 = vld [vmem:[%s2484 + $0x38] sm:$0xff]
                  %2501 = vst [vmem:[%s2485 + $0x38] sm:$0xff] %v2500
                  %v2502 = vld [vmem:[%s2484 + $0x40] sm:$0xff]
                  %2503 = vst [vmem:[%s2485 + $0x40] sm:$0xff] %v2502
                  %v2504 = vld [vmem:[%s2484 + $0x48] sm:$0xff]
                  %2505 = vst [vmem:[%s2485 + $0x48] sm:$0xff] %v2504
                  %v2506 = vld [vmem:[%s2484 + $0x50] sm:$0xff]
                  %2507 = vst [vmem:[%s2485 + $0x50] sm:$0xff] %v2506
                  %v2508 = vld [vmem:[%s2484 + $0x58] sm:$0xff]
                  %2509 = vst [vmem:[%s2485 + $0x58] sm:$0xff] %v2508
                  %v2510 = vld [vmem:[%s2484 + $0x60] sm:$0xff]
                  %2511 = vst [vmem:[%s2485 + $0x60] sm:$0xff] %v2510
                  %v2512 = vld [vmem:[%s2484 + $0x68] sm:$0xff]
                  %2513 = vst [vmem:[%s2485 + $0x68] sm:$0xff] %v2512
                  %v2514 = vld [vmem:[%s2484 + $0x70] sm:$0xff]
                  %2515 = vst [vmem:[%s2485 + $0x70] sm:$0xff] %v2514
                  %v2516 = vld [vmem:[%s2484 + $0x78] sm:$0xff]
                  %2517 = vst [vmem:[%s2485 + $0x78] sm:$0xff] %v2516
                  %s2518 = sadd.s32 1, %s2483
                  %p2519 = scmp.ge.s32.totalorder %s2518, %s2465
                  %s2520 = scalar_select %p2519, 0, %s2518
                  %s2521 = sadd.s32 1, %s2482
                  %s2522 = scalar_select %p2519, %s2521, %s2482
                  %p2523 = scmp.ge.s32.totalorder %s2522, %s2467
                  %s2524 = scalar_select %p2523, 0, %s2522
                  %s2525 = smul.u32 %s2524, 5
                  %s2526 = smul.u32 %s2520, 128
                  %s2527 = sadd.s32 %s2525, %s2526
                  %s2528 = smul.u32 %s2524, 6
                  %s2529 = smul.u32 %s2520, 128
                  %s2530 = sadd.s32 %s2528, %s2529
                  %s2531 = scalar_lea.vmem %s2470, %s2527 [#allocation3]
                  %s2532 = scalar_lea.vmem %s2472, %s2530
                $region189: #{_lambda_.1} parent=176 // loop_footer
                  %s2479 = sadd.s32 %s2477, 1
                $region190: #{_lambda_.1} parent=176 // loop_footer_branch
                  %2476 = sbr.rel target = $region186
                $region191: #{_lambda_.1} parent=176 // loop_exit
                  _
                %s2533 = sshrl.u32 %s2273, 4
                %s2534 = sand.u32 %s2273, 15
                %s2535 = smul.u32 %s2533, 16
                %s2536 = smul.u32 128, %s2535
                %s2537 = sshra.s32 %s2536, 4
                %s2538 = scalar_lea.vmem %s1878, %s2537 [#allocation3]
                %s2539 = smul.u32 128, %s2535
                %s2540 = sshra.s32 %s2539, 4
                %s2541 = scalar_lea.vmem %s1896, %s2540
                %s2542 = smul.u32 %s1886, %s2534
                // While loop
                $region192: #{_lambda_.1} parent=176 // loop_pre_header
                  _
                $region193: #{_lambda_.1} parent=176 // loop_header
                  %s2546 = sphi 0, %s2548
                  %p2547 = scmp.ge.s32.totalorder %s2546, %s2542
                  %s2551 = sphi 0, %s2563
                  %s2552 = sphi 0, %s2559
                  %s2553 = sphi %s2538, %s2570
                  %s2554 = sphi %s2541, %s2571
                $region194: #{_lambda_.1} parent=176 // loop_header_branch
                  %2550 = sbr.rel (%p2547) target = $region198
                $region195: #{_lambda_.1} parent=176 // loop_body
                  %v2555 = vld [vmem:[%s2553] sm:$0xff]
                  %2556 = vst [vmem:[%s2554] sm:$0xff] %v2555
                  %s2557 = sadd.s32 1, %s2552
                  %p2558 = scmp.ge.s32.totalorder %s2557, %s2534
                  %s2559 = scalar_select %p2558, 0, %s2557
                  %s2560 = sadd.s32 1, %s2551
                  %s2561 = scalar_select %p2558, %s2560, %s2551
                  %p2562 = scmp.ge.s32.totalorder %s2561, %s1886
                  %s2563 = scalar_select %p2562, 0, %s2561
                  %s2564 = smul.u32 %s2563, 5
                  %s2565 = smul.u32 %s2559, 8
                  %s2566 = sadd.s32 %s2564, %s2565
                  %s2567 = smul.u32 %s2563, 6
                  %s2568 = smul.u32 %s2559, 8
                  %s2569 = sadd.s32 %s2567, %s2568
                  %s2570 = scalar_lea.vmem %s2538, %s2566 [#allocation3]
                  %s2571 = scalar_lea.vmem %s2541, %s2569
                $region196: #{_lambda_.1} parent=176 // loop_footer
                  %s2548 = sadd.s32 %s2546, 1
                $region197: #{_lambda_.1} parent=176 // loop_footer_branch
                  %2545 = sbr.rel target = $region193
                $region198: #{_lambda_.1} parent=176 // loop_exit
                  _
                %s2572 = sshllo.u32 0, %s2268
                %s2573 = sdiv.u32.pop %s1886, 5
                %s2574 = srem.u32.pop %s1886, 5
                // While loop
                $region199: #{_lambda_.1} parent=176 // loop_pre_header
                  _
                $region200: #{_lambda_.1} parent=176 // loop_header
                  %s2576 = sphi 0, %s2578
                  %p2577 = scmp.ge.s32.totalorder %s2576, %s2573
                  %s2581 = sphi 0, %s2596
                  %s2582 = sphi %s2270, %s2599
                  %s2583 = sphi %s2272, %s2600
                $region201: #{_lambda_.1} parent=176 // loop_header_branch
                  %2580 = sbr.rel (%p2577) target = $region205
                $region202: #{_lambda_.1} parent=176 // loop_body
                  %v2584 = vld [vmem:[%s2582] sm:%s2572]
                  %2585 = vst [vmem:[%s2583] sm:%s2572] %v2584
                  %v2586 = vld [vmem:[%s2582 + $0x5] sm:%s2572]
                  %2587 = vst [vmem:[%s2583 + $0x6] sm:%s2572] %v2586
                  %v2588 = vld [vmem:[%s2582 + $0xa] sm:%s2572]
                  %2589 = vst [vmem:[%s2583 + $0xc] sm:%s2572] %v2588
                  %v2590 = vld [vmem:[%s2582 + $0xf] sm:%s2572]
                  %2591 = vst [vmem:[%s2583 + $0x12] sm:%s2572] %v2590
                  %v2592 = vld [vmem:[%s2582 + $0x14] sm:%s2572]
                  %2593 = vst [vmem:[%s2583 + $0x18] sm:%s2572] %v2592
                  %s2594 = sadd.s32 1, %s2581
                  %p2595 = scmp.ge.s32.totalorder %s2594, %s2573
                  %s2596 = scalar_select %p2595, 0, %s2594
                  %s2597 = smul.u32 %s2596, 25
                  %s2598 = smul.u32 %s2596, 30
                  %s2599 = scalar_lea.vmem %s2270, %s2597 [#allocation3]
                  %s2600 = scalar_lea.vmem %s2272, %s2598
                $region203: #{_lambda_.1} parent=176 // loop_footer
                  %s2578 = sadd.s32 %s2576, 1
                $region204: #{_lambda_.1} parent=176 // loop_footer_branch
                  %2575 = sbr.rel target = $region200
                $region205: #{_lambda_.1} parent=176 // loop_exit
                  _
                %s2601 = sdiv.u32.pop %s1886, 5
                %s2602 = srem.u32.pop %s1886, 5
                %s2603 = smul.u32 %s2601, 5
                %s2604 = smul.u32 5, %s2603
                %s2605 = scalar_lea.vmem %s2270, %s2604 [#allocation3]
                %s2606 = smul.u32 6, %s2603
                %s2607 = scalar_lea.vmem %s2272, %s2606
                // While loop
                $region206: #{_lambda_.1} parent=176 // loop_pre_header
                  _
                $region207: #{_lambda_.1} parent=176 // loop_header
                  %s2609 = sphi 0, %s2611
                  %p2610 = scmp.ge.s32.totalorder %s2609, %s2602
                  %s2614 = sphi 0, %s2621
                  %s2615 = sphi %s2605, %s2624
                  %s2616 = sphi %s2607, %s2625
                $region208: #{_lambda_.1} parent=176 // loop_header_branch
                  %2613 = sbr.rel (%p2610) target = $region212
                $region209: #{_lambda_.1} parent=176 // loop_body
                  %v2617 = vld [vmem:[%s2615] sm:%s2572]
                  %2618 = vst [vmem:[%s2616] sm:%s2572] %v2617
                  %s2619 = sadd.s32 1, %s2614
                  %p2620 = scmp.ge.s32.totalorder %s2619, %s2602
                  %s2621 = scalar_select %p2620, 0, %s2619
                  %s2622 = smul.u32 %s2621, 5
                  %s2623 = smul.u32 %s2621, 6
                  %s2624 = scalar_lea.vmem %s2605, %s2622 [#allocation3]
                  %s2625 = scalar_lea.vmem %s2607, %s2623
                $region210: #{_lambda_.1} parent=176 // loop_footer
                  %s2611 = sadd.s32 %s2609, 1
                $region211: #{_lambda_.1} parent=176 // loop_footer_branch
                  %2608 = sbr.rel target = $region207
                $region212: #{_lambda_.1} parent=176 // loop_exit
                  _
              $region177: #{_lambda_.1} parent=129 // pred_fallthru
                _
            $region130: #{_lambda_.1} parent=125 // pred_fallthru
              _
            // Predicated region
            $region131: #{_lambda_.1} parent=125 // pred_check
              %p1904 = pneg %p1900
            $region132: #{_lambda_.1} parent=125 // pred_check_branch
              %1906 = sbr.rel (%p1904) target = $region134
            $region133: #{_lambda_.1} parent=125 // pred_region
              %s1907 = sshllo.u32 0, %s1890
              %s1908 = sdiv.u32.pop %s1886, 5
              %s1909 = srem.u32.pop %s1886, 5
              // While loop
              $region135: #{_lambda_.1} parent=133 // loop_pre_header
                _
              $region136: #{_lambda_.1} parent=133 // loop_header
                %s1911 = sphi 0, %s1913
                %p1912 = scmp.ge.s32.totalorder %s1911, %s1908
                %s1916 = sphi 0, %s1931
                %s1917 = sphi %s1878, %s1934
                %s1918 = sphi %s1896, %s1935
              $region137: #{_lambda_.1} parent=133 // loop_header_branch
                %1915 = sbr.rel (%p1912) target = $region141
              $region138: #{_lambda_.1} parent=133 // loop_body
                %v1919 = vld [vmem:[%s1917] sm:%s1907]
                %1920 = vst [vmem:[%s1918] sm:%s1907] %v1919
                %v1921 = vld [vmem:[%s1917 + $0x5] sm:%s1907]
                %1922 = vst [vmem:[%s1918 + $0x6] sm:%s1907] %v1921
                %v1923 = vld [vmem:[%s1917 + $0xa] sm:%s1907]
                %1924 = vst [vmem:[%s1918 + $0xc] sm:%s1907] %v1923
                %v1925 = vld [vmem:[%s1917 + $0xf] sm:%s1907]
                %1926 = vst [vmem:[%s1918 + $0x12] sm:%s1907] %v1925
                %v1927 = vld [vmem:[%s1917 + $0x14] sm:%s1907]
                %1928 = vst [vmem:[%s1918 + $0x18] sm:%s1907] %v1927
                %s1929 = sadd.s32 1, %s1916
                %p1930 = scmp.ge.s32.totalorder %s1929, %s1908
                %s1931 = scalar_select %p1930, 0, %s1929
                %s1932 = smul.u32 %s1931, 25
                %s1933 = smul.u32 %s1931, 30
                %s1934 = scalar_lea.vmem %s1878, %s1932 [#allocation3]
                %s1935 = scalar_lea.vmem %s1896, %s1933
              $region139: #{_lambda_.1} parent=133 // loop_footer
                %s1913 = sadd.s32 %s1911, 1
              $region140: #{_lambda_.1} parent=133 // loop_footer_branch
                %1910 = sbr.rel target = $region136
              $region141: #{_lambda_.1} parent=133 // loop_exit
                _
              %s1936 = sdiv.u32.pop %s1886, 5
              %s1937 = srem.u32.pop %s1886, 5
              %s1938 = smul.u32 %s1936, 5
              %s1939 = smul.u32 5, %s1938
              %s1940 = scalar_lea.vmem %s1878, %s1939 [#allocation3]
              %s1941 = smul.u32 6, %s1938
              %s1942 = scalar_lea.vmem %s1896, %s1941
              // While loop
              $region142: #{_lambda_.1} parent=133 // loop_pre_header
                _
              $region143: #{_lambda_.1} parent=133 // loop_header
                %s1944 = sphi 0, %s1946
                %p1945 = scmp.ge.s32.totalorder %s1944, %s1937
                %s1949 = sphi 0, %s1956
                %s1950 = sphi %s1940, %s1959
                %s1951 = sphi %s1942, %s1960
              $region144: #{_lambda_.1} parent=133 // loop_header_branch
                %1948 = sbr.rel (%p1945) target = $region148
              $region145: #{_lambda_.1} parent=133 // loop_body
                %v1952 = vld [vmem:[%s1950] sm:%s1907]
                %1953 = vst [vmem:[%s1951] sm:%s1907] %v1952
                %s1954 = sadd.s32 1, %s1949
                %p1955 = scmp.ge.s32.totalorder %s1954, %s1937
                %s1956 = scalar_select %p1955, 0, %s1954
                %s1957 = smul.u32 %s1956, 5
                %s1958 = smul.u32 %s1956, 6
                %s1959 = scalar_lea.vmem %s1940, %s1957 [#allocation3]
                %s1960 = scalar_lea.vmem %s1942, %s1958
              $region146: #{_lambda_.1} parent=133 // loop_footer
                %s1946 = sadd.s32 %s1944, 1
              $region147: #{_lambda_.1} parent=133 // loop_footer_branch
                %1943 = sbr.rel target = $region143
              $region148: #{_lambda_.1} parent=133 // loop_exit
                _
            $region134: #{_lambda_.1} parent=125 // pred_fallthru
              _
          $region126: #{_lambda_.1} parent=121 // pred_fallthru
            _
          %2626 = vnop
        $region122: #{_lambda_.1} parent=113 // pred_fallthru
          _
      $region114: #{_lambda_.1} parent=5 // pred_fallthru
        _
      %p2627 = scmp.le.s32.totalorder 2, %s7
      // Predicated region
      $region213: #{_lambda_.1} parent=5 // pred_check
        %p2628 = pneg %p2627
      $region214: #{_lambda_.1} parent=5 // pred_check_branch
        %2630 = sbr.rel (%p2628) target = $region216
      $region215: #{_lambda_.1} parent=5 // pred_region
        %s2631 = ssub.s32 %s7, 2
        // Predicated region
        $region217: #{_lambda_.1} parent=215 // pred_check
          %p2632 = pneg %p89
        $region218: #{_lambda_.1} parent=215 // pred_check_branch
          %2634 = sbr.rel (%p2632) target = $region220
        $region219: #{_lambda_.1} parent=215 // pred_region
          %s2635 = sand.u32 %s74, 1
          %s2636 = sand.u32 %s74, 1
          %s2637 = smul.addr %s2636, 25
          %s2638 = scalar_lea.vmem [#allocation3], %s2637
        $region220: #{_lambda_.1} parent=215 // pred_fallthru
          _
      $region216: #{_lambda_.1} parent=5 // pred_fallthru
        _
    $region6: #{_lambda_.1} parent=1 // loop_footer
      %s11 = sadd.s32 1, %s7
    $region7: #{_lambda_.1} parent=1 // loop_footer_branch
      %6 = sbr.rel target = $region3
    $region8: #{_lambda_.1} parent=1 // loop_exit
      _

</llo_original>
